<compile_context>
chip_gen: v5e
topology: v5e:2x2
jax: 0.10.0
libtpu: 0.0.40
codegen_flags: <defaults>
</compile_context>

<pallas_src>
import functools

import jax
import jax.numpy as jnp
from jax.experimental import pallas as pl
from jax.experimental.pallas import tpu as pltpu

LANE = 128  # TPU lane width; class dim is padded to this for unmasked stores.


def _round_up(x, m):
    return (x + m - 1) // m * m


# -----------------------------------------------------------------------------
# Fused kernel: unrolled LSTM recurrence + folded FC epilogue.
# -----------------------------------------------------------------------------
def decoder_kernel(xproj_ref, w_hh_ref, enc_ref, w_enc_ref, w_comb_ref, b_ref,
                   out_ref):
    _, T, B, H = xproj_ref.shape

    h = jnp.zeros((B, H), jnp.float32)
    c = jnp.zeros((B, H), jnp.float32)
    hs = []
    # Recurrence fully unrolled (T is small and static).  Only the tiny
    # (B,H)x(H,H) recurrent matmuls sit on the serial dependency chain; the
    # input projection was hoisted into the wrapper.
    for t in range(T):
        i_g = jax.nn.sigmoid(
            xproj_ref[0, t] + jnp.dot(h, w_hh_ref[0],
                                      preferred_element_type=jnp.float32))
        f_g = jax.nn.sigmoid(
            xproj_ref[1, t] + jnp.dot(h, w_hh_ref[1],
                                      preferred_element_type=jnp.float32))
        g_g = jnp.tanh(
            xproj_ref[2, t] + jnp.dot(h, w_hh_ref[2],
                                      preferred_element_type=jnp.float32))
        o_g = jax.nn.sigmoid(
            xproj_ref[3, t] + jnp.dot(h, w_hh_ref[3],
                                      preferred_element_type=jnp.float32))
        c = f_g * c + i_g * g_g
        h = o_g * jnp.tanh(c)
        hs.append(h)

    # Fused FC epilogue.  rnn_fc is algebraically folded into final_layer
    # (valid because eval-mode dropout is the identity):
    #   out = enc @ W_enc + hidden_flat @ W_comb + b_comb
    out = (jnp.dot(enc_ref[...], w_enc_ref[...],
                   preferred_element_type=jnp.float32) + b_ref[...])

    # hidden_flat[t, b*H + h] = hs[t][b, h]; contract per feature-batch row b so
    # no in-kernel reshape of the hidden states is needed:
    #   hidden_flat @ W_comb == sum_b hid_b @ W_comb_r[b],  hid_b = (T, H).
    for b in range(B):
        hid_b = jnp.concatenate([hh[b:b + 1, :] for hh in hs], axis=0)  # (T, H)
        out = out + jnp.dot(hid_b, w_comb_ref[b],
                            preferred_element_type=jnp.float32)

    out_ref[...] = out


# -----------------------------------------------------------------------------
# One-time (inference) parameter preparation: per-gate weight split + FC fold.
# -----------------------------------------------------------------------------
def fold_params(params):
    w_ih, w_hh = params["w_ih"], params["w_hh"]
    b_ih, b_hh = params["b_ih"], params["b_hh"]
    w_fc, b_fc = params["w_fc"], params["b_fc"]
    w_final, b_final = params["w_final"], params["b_final"]

    H = w_hh.shape[1]
    I = w_ih.shape[1]
    BH = w_fc.shape[1]
    B = BH // H
    F = w_fc.shape[0]
    C = w_final.shape[0]
    Cp = _round_up(C, LANE)
    pad = Cp - C

    # Per-gate input / recurrent weights, PyTorch gate order (i, f, g, o).
    w_ih_g = jnp.transpose(w_ih.reshape(4, H, I), (0, 2, 1))   # (4, I, H)
    w_hh_g = jnp.transpose(w_hh.reshape(4, H, H), (0, 2, 1))   # (4, H, H)
    bias_g = (b_ih + b_hh).reshape(4, 1, 1, H)                 # (4, 1, 1, H)

    # Fold rnn_fc into final_layer (eval-mode dropout = identity).
    w_fin_enc = jnp.transpose(w_final[:, :F])                  # (F, C)
    w_fin_rnn = jnp.transpose(w_final[:, F:])                  # (F, C)
    w_comb = w_fc.T @ w_fin_rnn                                # (B*H, C)
    b_comb = b_fc @ w_fin_rnn + b_final                        # (C,)

    return {
        "w_ih_g": w_ih_g,
        "w_hh_g": w_hh_g,
        "bias_g": bias_g,
        "w_enc": jnp.pad(w_fin_enc, ((0, 0), (0, pad))),                   # (F, Cp)
        "w_comb": jnp.pad(w_comb, ((0, 0), (0, pad))).reshape(B, H, Cp),   # (B,H,Cp)
        "b_comb": jnp.pad(b_comb, (0, pad)).reshape(1, Cp),                # (1, Cp)
    }


# -----------------------------------------------------------------------------
# Module forward (eval-mode dropout = identity)
# -----------------------------------------------------------------------------
@functools.partial(jax.jit, static_argnames=("class_n",))
def rnn_decoder_forward(enc_out, dec_inp, fp, *, class_n):
    T, B, _ = dec_inp.shape
    H = fp["w_hh_g"].shape[1]
    F, Cp = fp["w_enc"].shape

    # Hoisted input projection: one batched matmul for all timesteps/gates.
    x_proj = (jnp.einsum("tbi,gih->gtbh", dec_inp, fp["w_ih_g"])
              + fp["bias_g"]).astype(jnp.float32)              # (4, T, B, H)

    flops = (T * 4 * 2 * B * H * H          # recurrent matmuls
             + 2 * T * F * Cp               # enc_out @ w_enc
             + 2 * T * B * H * Cp)          # folded hidden matmuls
    transcendentals = 5 * T * B * H         # 3 sigmoid + 2 tanh per element
    bytes_accessed = 4 * (x_proj.size + fp["w_hh_g"].size + enc_out.size
                          + fp["w_enc"].size + fp["w_comb"].size
                          + fp["b_comb"].size + T * Cp)

    vmem_spec = pl.BlockSpec(memory_space=pltpu.MemorySpace.VMEM)
    out_p = pl.pallas_call(
        decoder_kernel,
        out_shape=jax.ShapeDtypeStruct((T, Cp), jnp.float32),
        in_specs=[vmem_spec] * 6,
        out_specs=vmem_spec,
        cost_estimate=pl.CostEstimate(flops=flops,
                                      transcendentals=transcendentals,
                                      bytes_accessed=bytes_accessed),
    )(x_proj, fp["w_hh_g"], enc_out, fp["w_enc"], fp["w_comb"], fp["b_comb"])

    return out_p[:, :class_n]


# -----------------------------------------------------------------------------
# Pure-JAX reference (mirrors PyTorch semantics, un-folded) for correctness.
# -----------------------------------------------------------------------------
def ref_forward(enc_out, dec_inp, params):
    T, B, _ = dec_inp.shape
    H = params["w_hh"].shape[1]

    def step(carry, x):
        h, c = carry
        gates = (x @ params["w_ih"].T + params["b_ih"]
                 + h @ params["w_hh"].T + params["b_hh"])
        i, f, g, o = jnp.split(gates, 4, axis=-1)
        i, f, o = jax.nn.sigmoid(i), jax.nn.sigmoid(f), jax.nn.sigmoid(o)
        g = jnp.tanh(g)
        c = f * c + i * g
        h = o * jnp.tanh(c)
        return (h, c), h

    init = (jnp.zeros((B, H), jnp.float32), jnp.zeros((B, H), jnp.float32))
    _, hs = jax.lax.scan(step, init, dec_inp)
    hidden = hs.reshape(T, -1) @ params["w_fc"].T + params["b_fc"]
    concat = jnp.concatenate([enc_out, hidden], axis=1)
    return concat @ params["w_final"].T + params["b_final"]


if __name__ == "__main__":
    # Small, module-consistent shapes
    max_len = 16          # LSTM input size  (I)
    embedding_dim = 32    # LSTM hidden size (H)
    num_features = 8      # LSTM "batch"     (B)
    class_n = 16
    T = 8                 # sequence length (recurrence axis)
    F = 1000              # rnn_fc output / enc_out feature size

    key = jax.random.PRNGKey(0)
    keys = jax.random.split(key, 10)

    def uni(k, shape, fan):
        bound = 1.0 / jnp.sqrt(jnp.float32(fan))
        return jax.random.uniform(k, shape, jnp.float32, -bound, bound)

    params = {
        "w_ih":    uni(keys[0], (4 * embedding_dim, max_len), embedding_dim),
        "w_hh":    uni(keys[1], (4 * embedding_dim, embedding_dim), embedding_dim),
        "b_ih":    uni(keys[2], (4 * embedding_dim,), embedding_dim),
        "b_hh":    uni(keys[3], (4 * embedding_dim,), embedding_dim),
        "w_fc":    uni(keys[4], (F, num_features * embedding_dim),
                       num_features * embedding_dim),
        "b_fc":    uni(keys[5], (F,), num_features * embedding_dim),
        "w_final": uni(keys[6], (class_n, 2 * F), 2 * F),
        "b_final": uni(keys[7], (class_n,), 2 * F),
    }

    enc_out = jax.random.normal(keys[8], (T, F), jnp.float32)
    dec_inp = jax.random.normal(keys[9], (T, num_features, max_len), jnp.float32)

    fp = fold_params(params)          # one-time inference-side parameter prep
    out = rnn_decoder_forward(enc_out, dec_inp, fp, class_n=class_n)
    out = jax.block_until_ready(out)

    ref = ref_forward(enc_out, dec_inp, params)
    assert out.shape == (T, class_n), out.shape
    assert jnp.allclose(out, ref, atol=5e-4, rtol=5e-4), \
        float(jnp.max(jnp.abs(out - ref)))

    print("KERNEL_OK")
</pallas_src>

<mosaic_0001>
module attributes {stable_mosaic.version = 11 : i64} {
  func.func @decoder_kernel(%arg0: memref<4x8x8x32xf32, #tpu.memory_space<vmem>>, %arg1: memref<4x32x32xf32, #tpu.memory_space<vmem>>, %arg2: memref<8x1000xf32, #tpu.memory_space<vmem>>, %arg3: memref<1000x128xf32, #tpu.memory_space<vmem>>, %arg4: memref<8x32x128xf32, #tpu.memory_space<vmem>>, %arg5: memref<1x128xf32, #tpu.memory_space<vmem>>, %arg6: memref<8x128xf32, #tpu.memory_space<vmem>>) attributes {dimension_semantics = [], scalar_prefetch = 0 : i64, scratch_operands = 0 : i64, tpu.core_type = #tpu.core_type<tc>} {
    %cst = arith.constant 0.000000e+00 : f32
    %0 = vector.broadcast %cst : f32 to vector<8x32xf32>
    %cst_0 = arith.constant 0.000000e+00 : f32
    %1 = vector.broadcast %cst_0 : f32 to vector<8x32xf32>
    %c0 = arith.constant 0 : index
    %c0_1 = arith.constant 0 : index
    %c0_2 = arith.constant 0 : index
    %c0_3 = arith.constant 0 : index
    %2 = vector.load %arg0[%c0, %c0_1, %c0_2, %c0_3] : memref<4x8x8x32xf32, #tpu.memory_space<vmem>>, vector<1x1x8x32xf32>
    %3 = vector.shape_cast %2 : vector<1x1x8x32xf32> to vector<8x32xf32>
    %c0_4 = arith.constant 0 : index
    %c0_5 = arith.constant 0 : index
    %c0_6 = arith.constant 0 : index
    %4 = vector.load %arg1[%c0_4, %c0_5, %c0_6] : memref<4x32x32xf32, #tpu.memory_space<vmem>>, vector<1x32x32xf32>
    %5 = vector.shape_cast %4 : vector<1x32x32xf32> to vector<32x32xf32>
    %cst_7 = arith.constant dense<0.000000e+00> : vector<8x32xf32>
    %6 = tpu.matmul %0, %5, %cst_7 {dimension_numbers = #tpu.dot_dimension_numbers<[1], [0], [0], [1], [0, 0, 1, 1], [], []>} : vector<8x32xf32>, vector<32x32xf32>, vector<8x32xf32> -> vector<8x32xf32>
    %7 = arith.addf %3, %6 : vector<8x32xf32>
    %8 = arith.negf %7 : vector<8x32xf32>
    %9 = math.exp %8 : vector<8x32xf32>
    %cst_8 = arith.constant 1.000000e+00 : f32
    %10 = vector.broadcast %cst_8 : f32 to vector<8x32xf32>
    %11 = arith.addf %10, %9 : vector<8x32xf32>
    %12 = arith.divf %10, %11 : vector<8x32xf32>
    %c1 = arith.constant 1 : index
    %c0_9 = arith.constant 0 : index
    %c0_10 = arith.constant 0 : index
    %c0_11 = arith.constant 0 : index
    %13 = vector.load %arg0[%c1, %c0_9, %c0_10, %c0_11] : memref<4x8x8x32xf32, #tpu.memory_space<vmem>>, vector<1x1x8x32xf32>
    %14 = vector.shape_cast %13 : vector<1x1x8x32xf32> to vector<8x32xf32>
    %c1_12 = arith.constant 1 : index
    %c0_13 = arith.constant 0 : index
    %c0_14 = arith.constant 0 : index
    %15 = vector.load %arg1[%c1_12, %c0_13, %c0_14] : memref<4x32x32xf32, #tpu.memory_space<vmem>>, vector<1x32x32xf32>
    %16 = vector.shape_cast %15 : vector<1x32x32xf32> to vector<32x32xf32>
    %cst_15 = arith.constant dense<0.000000e+00> : vector<8x32xf32>
    %17 = tpu.matmul %0, %16, %cst_15 {dimension_numbers = #tpu.dot_dimension_numbers<[1], [0], [0], [1], [0, 0, 1, 1], [], []>} : vector<8x32xf32>, vector<32x32xf32>, vector<8x32xf32> -> vector<8x32xf32>
    %18 = arith.addf %14, %17 : vector<8x32xf32>
    %19 = arith.negf %18 : vector<8x32xf32>
    %20 = math.exp %19 : vector<8x32xf32>
    %cst_16 = arith.constant 1.000000e+00 : f32
    %21 = vector.broadcast %cst_16 : f32 to vector<8x32xf32>
    %22 = arith.addf %21, %20 : vector<8x32xf32>
    %23 = arith.divf %21, %22 : vector<8x32xf32>
    %c2 = arith.constant 2 : index
    %c0_17 = arith.constant 0 : index
    %c0_18 = arith.constant 0 : index
    %c0_19 = arith.constant 0 : index
    %24 = vector.load %arg0[%c2, %c0_17, %c0_18, %c0_19] : memref<4x8x8x32xf32, #tpu.memory_space<vmem>>, vector<1x1x8x32xf32>
    %25 = vector.shape_cast %24 : vector<1x1x8x32xf32> to vector<8x32xf32>
    %c2_20 = arith.constant 2 : index
    %c0_21 = arith.constant 0 : index
    %c0_22 = arith.constant 0 : index
    %26 = vector.load %arg1[%c2_20, %c0_21, %c0_22] : memref<4x32x32xf32, #tpu.memory_space<vmem>>, vector<1x32x32xf32>
    %27 = vector.shape_cast %26 : vector<1x32x32xf32> to vector<32x32xf32>
    %cst_23 = arith.constant dense<0.000000e+00> : vector<8x32xf32>
    %28 = tpu.matmul %0, %27, %cst_23 {dimension_numbers = #tpu.dot_dimension_numbers<[1], [0], [0], [1], [0, 0, 1, 1], [], []>} : vector<8x32xf32>, vector<32x32xf32>, vector<8x32xf32> -> vector<8x32xf32>
    %29 = arith.addf %25, %28 : vector<8x32xf32>
    %30 = math.tanh %29 : vector<8x32xf32>
    %c3 = arith.constant 3 : index
    %c0_24 = arith.constant 0 : index
    %c0_25 = arith.constant 0 : index
    %c0_26 = arith.constant 0 : index
    %31 = vector.load %arg0[%c3, %c0_24, %c0_25, %c0_26] : memref<4x8x8x32xf32, #tpu.memory_space<vmem>>, vector<1x1x8x32xf32>
    %32 = vector.shape_cast %31 : vector<1x1x8x32xf32> to vector<8x32xf32>
    %c3_27 = arith.constant 3 : index
    %c0_28 = arith.constant 0 : index
    %c0_29 = arith.constant 0 : index
    %33 = vector.load %arg1[%c3_27, %c0_28, %c0_29] : memref<4x32x32xf32, #tpu.memory_space<vmem>>, vector<1x32x32xf32>
    %34 = vector.shape_cast %33 : vector<1x32x32xf32> to vector<32x32xf32>
    %cst_30 = arith.constant dense<0.000000e+00> : vector<8x32xf32>
    %35 = tpu.matmul %0, %34, %cst_30 {dimension_numbers = #tpu.dot_dimension_numbers<[1], [0], [0], [1], [0, 0, 1, 1], [], []>} : vector<8x32xf32>, vector<32x32xf32>, vector<8x32xf32> -> vector<8x32xf32>
    %36 = arith.addf %32, %35 : vector<8x32xf32>
    %37 = arith.negf %36 : vector<8x32xf32>
    %38 = math.exp %37 : vector<8x32xf32>
    %cst_31 = arith.constant 1.000000e+00 : f32
    %39 = vector.broadcast %cst_31 : f32 to vector<8x32xf32>
    %40 = arith.addf %39, %38 : vector<8x32xf32>
    %41 = arith.divf %39, %40 : vector<8x32xf32>
    %42 = arith.mulf %23, %1 : vector<8x32xf32>
    %43 = arith.mulf %12, %30 : vector<8x32xf32>
    %44 = arith.addf %42, %43 : vector<8x32xf32>
    %45 = math.tanh %44 : vector<8x32xf32>
    %46 = arith.mulf %41, %45 : vector<8x32xf32>
    %c0_32 = arith.constant 0 : index
    %c1_33 = arith.constant 1 : index
    %c0_34 = arith.constant 0 : index
    %c0_35 = arith.constant 0 : index
    %47 = vector.load %arg0[%c0_32, %c1_33, %c0_34, %c0_35] : memref<4x8x8x32xf32, #tpu.memory_space<vmem>>, vector<1x1x8x32xf32>
    %48 = vector.shape_cast %47 : vector<1x1x8x32xf32> to vector<8x32xf32>
    %c0_36 = arith.constant 0 : index
    %c0_37 = arith.constant 0 : index
    %c0_38 = arith.constant 0 : index
    %49 = vector.load %arg1[%c0_36, %c0_37, %c0_38] : memref<4x32x32xf32, #tpu.memory_space<vmem>>, vector<1x32x32xf32>
    %50 = vector.shape_cast %49 : vector<1x32x32xf32> to vector<32x32xf32>
    %cst_39 = arith.constant dense<0.000000e+00> : vector<8x32xf32>
    %51 = tpu.matmul %46, %50, %cst_39 {dimension_numbers = #tpu.dot_dimension_numbers<[1], [0], [0], [1], [0, 0, 1, 1], [], []>} : vector<8x32xf32>, vector<32x32xf32>, vector<8x32xf32> -> vector<8x32xf32>
    %52 = arith.addf %48, %51 : vector<8x32xf32>
    %53 = arith.negf %52 : vector<8x32xf32>
    %54 = math.exp %53 : vector<8x32xf32>
    %cst_40 = arith.constant 1.000000e+00 : f32
    %55 = vector.broadcast %cst_40 : f32 to vector<8x32xf32>
    %56 = arith.addf %55, %54 : vector<8x32xf32>
    %57 = arith.divf %55, %56 : vector<8x32xf32>
    %c1_41 = arith.constant 1 : index
    %c1_42 = arith.constant 1 : index
    %c0_43 = arith.constant 0 : index
    %c0_44 = arith.constant 0 : index
    %58 = vector.load %arg0[%c1_41, %c1_42, %c0_43, %c0_44] : memref<4x8x8x32xf32, #tpu.memory_space<vmem>>, vector<1x1x8x32xf32>
    %59 = vector.shape_cast %58 : vector<1x1x8x32xf32> to vector<8x32xf32>
    %c1_45 = arith.constant 1 : index
    %c0_46 = arith.constant 0 : index
    %c0_47 = arith.constant 0 : index
    %60 = vector.load %arg1[%c1_45, %c0_46, %c0_47] : memref<4x32x32xf32, #tpu.memory_space<vmem>>, vector<1x32x32xf32>
    %61 = vector.shape_cast %60 : vector<1x32x32xf32> to vector<32x32xf32>
    %cst_48 = arith.constant dense<0.000000e+00> : vector<8x32xf32>
    %62 = tpu.matmul %46, %61, %cst_48 {dimension_numbers = #tpu.dot_dimension_numbers<[1], [0], [0], [1], [0, 0, 1, 1], [], []>} : vector<8x32xf32>, vector<32x32xf32>, vector<8x32xf32> -> vector<8x32xf32>
    %63 = arith.addf %59, %62 : vector<8x32xf32>
    %64 = arith.negf %63 : vector<8x32xf32>
    %65 = math.exp %64 : vector<8x32xf32>
    %cst_49 = arith.constant 1.000000e+00 : f32
    %66 = vector.broadcast %cst_49 : f32 to vector<8x32xf32>
    %67 = arith.addf %66, %65 : vector<8x32xf32>
    %68 = arith.divf %66, %67 : vector<8x32xf32>
    %c2_50 = arith.constant 2 : index
    %c1_51 = arith.constant 1 : index
    %c0_52 = arith.constant 0 : index
    %c0_53 = arith.constant 0 : index
    %69 = vector.load %arg0[%c2_50, %c1_51, %c0_52, %c0_53] : memref<4x8x8x32xf32, #tpu.memory_space<vmem>>, vector<1x1x8x32xf32>
    %70 = vector.shape_cast %69 : vector<1x1x8x32xf32> to vector<8x32xf32>
    %c2_54 = arith.constant 2 : index
    %c0_55 = arith.constant 0 : index
    %c0_56 = arith.constant 0 : index
    %71 = vector.load %arg1[%c2_54, %c0_55, %c0_56] : memref<4x32x32xf32, #tpu.memory_space<vmem>>, vector<1x32x32xf32>
    %72 = vector.shape_cast %71 : vector<1x32x32xf32> to vector<32x32xf32>
    %cst_57 = arith.constant dense<0.000000e+00> : vector<8x32xf32>
    %73 = tpu.matmul %46, %72, %cst_57 {dimension_numbers = #tpu.dot_dimension_numbers<[1], [0], [0], [1], [0, 0, 1, 1], [], []>} : vector<8x32xf32>, vector<32x32xf32>, vector<8x32xf32> -> vector<8x32xf32>
    %74 = arith.addf %70, %73 : vector<8x32xf32>
    %75 = math.tanh %74 : vector<8x32xf32>
    %c3_58 = arith.constant 3 : index
    %c1_59 = arith.constant 1 : index
    %c0_60 = arith.constant 0 : index
    %c0_61 = arith.constant 0 : index
    %76 = vector.load %arg0[%c3_58, %c1_59, %c0_60, %c0_61] : memref<4x8x8x32xf32, #tpu.memory_space<vmem>>, vector<1x1x8x32xf32>
    %77 = vector.shape_cast %76 : vector<1x1x8x32xf32> to vector<8x32xf32>
    %c3_62 = arith.constant 3 : index
    %c0_63 = arith.constant 0 : index
    %c0_64 = arith.constant 0 : index
    %78 = vector.load %arg1[%c3_62, %c0_63, %c0_64] : memref<4x32x32xf32, #tpu.memory_space<vmem>>, vector<1x32x32xf32>
    %79 = vector.shape_cast %78 : vector<1x32x32xf32> to vector<32x32xf32>
    %cst_65 = arith.constant dense<0.000000e+00> : vector<8x32xf32>
    %80 = tpu.matmul %46, %79, %cst_65 {dimension_numbers = #tpu.dot_dimension_numbers<[1], [0], [0], [1], [0, 0, 1, 1], [], []>} : vector<8x32xf32>, vector<32x32xf32>, vector<8x32xf32> -> vector<8x32xf32>
    %81 = arith.addf %77, %80 : vector<8x32xf32>
    %82 = arith.negf %81 : vector<8x32xf32>
    %83 = math.exp %82 : vector<8x32xf32>
    %cst_66 = arith.constant 1.000000e+00 : f32
    %84 = vector.broadcast %cst_66 : f32 to vector<8x32xf32>
    %85 = arith.addf %84, %83 : vector<8x32xf32>
    %86 = arith.divf %84, %85 : vector<8x32xf32>
    %87 = arith.mulf %68, %44 : vector<8x32xf32>
    %88 = arith.mulf %57, %75 : vector<8x32xf32>
    %89 = arith.addf %87, %88 : vector<8x32xf32>
    %90 = math.tanh %89 : vector<8x32xf32>
    %91 = arith.mulf %86, %90 : vector<8x32xf32>
    %c0_67 = arith.constant 0 : index
    %c2_68 = arith.constant 2 : index
    %c0_69 = arith.constant 0 : index
    %c0_70 = arith.constant 0 : index
    %92 = vector.load %arg0[%c0_67, %c2_68, %c0_69, %c0_70] : memref<4x8x8x32xf32, #tpu.memory_space<vmem>>, vector<1x1x8x32xf32>
    %93 = vector.shape_cast %92 : vector<1x1x8x32xf32> to vector<8x32xf32>
    %c0_71 = arith.constant 0 : index
    %c0_72 = arith.constant 0 : index
    %c0_73 = arith.constant 0 : index
    %94 = vector.load %arg1[%c0_71, %c0_72, %c0_73] : memref<4x32x32xf32, #tpu.memory_space<vmem>>, vector<1x32x32xf32>
    %95 = vector.shape_cast %94 : vector<1x32x32xf32> to vector<32x32xf32>
    %cst_74 = arith.constant dense<0.000000e+00> : vector<8x32xf32>
    %96 = tpu.matmul %91, %95, %cst_74 {dimension_numbers = #tpu.dot_dimension_numbers<[1], [0], [0], [1], [0, 0, 1, 1], [], []>} : vector<8x32xf32>, vector<32x32xf32>, vector<8x32xf32> -> vector<8x32xf32>
    %97 = arith.addf %93, %96 : vector<8x32xf32>
    %98 = arith.negf %97 : vector<8x32xf32>
    %99 = math.exp %98 : vector<8x32xf32>
    %cst_75 = arith.constant 1.000000e+00 : f32
    %100 = vector.broadcast %cst_75 : f32 to vector<8x32xf32>
    %101 = arith.addf %100, %99 : vector<8x32xf32>
    %102 = arith.divf %100, %101 : vector<8x32xf32>
    %c1_76 = arith.constant 1 : index
    %c2_77 = arith.constant 2 : index
    %c0_78 = arith.constant 0 : index
    %c0_79 = arith.constant 0 : index
    %103 = vector.load %arg0[%c1_76, %c2_77, %c0_78, %c0_79] : memref<4x8x8x32xf32, #tpu.memory_space<vmem>>, vector<1x1x8x32xf32>
    %104 = vector.shape_cast %103 : vector<1x1x8x32xf32> to vector<8x32xf32>
    %c1_80 = arith.constant 1 : index
    %c0_81 = arith.constant 0 : index
    %c0_82 = arith.constant 0 : index
    %105 = vector.load %arg1[%c1_80, %c0_81, %c0_82] : memref<4x32x32xf32, #tpu.memory_space<vmem>>, vector<1x32x32xf32>
    %106 = vector.shape_cast %105 : vector<1x32x32xf32> to vector<32x32xf32>
    %cst_83 = arith.constant dense<0.000000e+00> : vector<8x32xf32>
    %107 = tpu.matmul %91, %106, %cst_83 {dimension_numbers = #tpu.dot_dimension_numbers<[1], [0], [0], [1], [0, 0, 1, 1], [], []>} : vector<8x32xf32>, vector<32x32xf32>, vector<8x32xf32> -> vector<8x32xf32>
    %108 = arith.addf %104, %107 : vector<8x32xf32>
    %109 = arith.negf %108 : vector<8x32xf32>
    %110 = math.exp %109 : vector<8x32xf32>
    %cst_84 = arith.constant 1.000000e+00 : f32
    %111 = vector.broadcast %cst_84 : f32 to vector<8x32xf32>
    %112 = arith.addf %111, %110 : vector<8x32xf32>
    %113 = arith.divf %111, %112 : vector<8x32xf32>
    %c2_85 = arith.constant 2 : index
    %c2_86 = arith.constant 2 : index
    %c0_87 = arith.constant 0 : index
    %c0_88 = arith.constant 0 : index
    %114 = vector.load %arg0[%c2_85, %c2_86, %c0_87, %c0_88] : memref<4x8x8x32xf32, #tpu.memory_space<vmem>>, vector<1x1x8x32xf32>
    %115 = vector.shape_cast %114 : vector<1x1x8x32xf32> to vector<8x32xf32>
    %c2_89 = arith.constant 2 : index
    %c0_90 = arith.constant 0 : index
    %c0_91 = arith.constant 0 : index
    %116 = vector.load %arg1[%c2_89, %c0_90, %c0_91] : memref<4x32x32xf32, #tpu.memory_space<vmem>>, vector<1x32x32xf32>
    %117 = vector.shape_cast %116 : vector<1x32x32xf32> to vector<32x32xf32>
    %cst_92 = arith.constant dense<0.000000e+00> : vector<8x32xf32>
    %118 = tpu.matmul %91, %117, %cst_92 {dimension_numbers = #tpu.dot_dimension_numbers<[1], [0], [0], [1], [0, 0, 1, 1], [], []>} : vector<8x32xf32>, vector<32x32xf32>, vector<8x32xf32> -> vector<8x32xf32>
    %119 = arith.addf %115, %118 : vector<8x32xf32>
    %120 = math.tanh %119 : vector<8x32xf32>
    %c3_93 = arith.constant 3 : index
    %c2_94 = arith.constant 2 : index
    %c0_95 = arith.constant 0 : index
    %c0_96 = arith.constant 0 : index
    %121 = vector.load %arg0[%c3_93, %c2_94, %c0_95, %c0_96] : memref<4x8x8x32xf32, #tpu.memory_space<vmem>>, vector<1x1x8x32xf32>
    %122 = vector.shape_cast %121 : vector<1x1x8x32xf32> to vector<8x32xf32>
    %c3_97 = arith.constant 3 : index
    %c0_98 = arith.constant 0 : index
    %c0_99 = arith.constant 0 : index
    %123 = vector.load %arg1[%c3_97, %c0_98, %c0_99] : memref<4x32x32xf32, #tpu.memory_space<vmem>>, vector<1x32x32xf32>
    %124 = vector.shape_cast %123 : vector<1x32x32xf32> to vector<32x32xf32>
    %cst_100 = arith.constant dense<0.000000e+00> : vector<8x32xf32>
    %125 = tpu.matmul %91, %124, %cst_100 {dimension_numbers = #tpu.dot_dimension_numbers<[1], [0], [0], [1], [0, 0, 1, 1], [], []>} : vector<8x32xf32>, vector<32x32xf32>, vector<8x32xf32> -> vector<8x32xf32>
    %126 = arith.addf %122, %125 : vector<8x32xf32>
    %127 = arith.negf %126 : vector<8x32xf32>
    %128 = math.exp %127 : vector<8x32xf32>
    %cst_101 = arith.constant 1.000000e+00 : f32
    %129 = vector.broadcast %cst_101 : f32 to vector<8x32xf32>
    %130 = arith.addf %129, %128 : vector<8x32xf32>
    %131 = arith.divf %129, %130 : vector<8x32xf32>
    %132 = arith.mulf %113, %89 : vector<8x32xf32>
    %133 = arith.mulf %102, %120 : vector<8x32xf32>
    %134 = arith.addf %132, %133 : vector<8x32xf32>
    %135 = math.tanh %134 : vector<8x32xf32>
    %136 = arith.mulf %131, %135 : vector<8x32xf32>
    %c0_102 = arith.constant 0 : index
    %c3_103 = arith.constant 3 : index
    %c0_104 = arith.constant 0 : index
    %c0_105 = arith.constant 0 : index
    %137 = vector.load %arg0[%c0_102, %c3_103, %c0_104, %c0_105] : memref<4x8x8x32xf32, #tpu.memory_space<vmem>>, vector<1x1x8x32xf32>
    %138 = vector.shape_cast %137 : vector<1x1x8x32xf32> to vector<8x32xf32>
    %c0_106 = arith.constant 0 : index
    %c0_107 = arith.constant 0 : index
    %c0_108 = arith.constant 0 : index
    %139 = vector.load %arg1[%c0_106, %c0_107, %c0_108] : memref<4x32x32xf32, #tpu.memory_space<vmem>>, vector<1x32x32xf32>
    %140 = vector.shape_cast %139 : vector<1x32x32xf32> to vector<32x32xf32>
    %cst_109 = arith.constant dense<0.000000e+00> : vector<8x32xf32>
    %141 = tpu.matmul %136, %140, %cst_109 {dimension_numbers = #tpu.dot_dimension_numbers<[1], [0], [0], [1], [0, 0, 1, 1], [], []>} : vector<8x32xf32>, vector<32x32xf32>, vector<8x32xf32> -> vector<8x32xf32>
    %142 = arith.addf %138, %141 : vector<8x32xf32>
    %143 = arith.negf %142 : vector<8x32xf32>
    %144 = math.exp %143 : vector<8x32xf32>
    %cst_110 = arith.constant 1.000000e+00 : f32
    %145 = vector.broadcast %cst_110 : f32 to vector<8x32xf32>
    %146 = arith.addf %145, %144 : vector<8x32xf32>
    %147 = arith.divf %145, %146 : vector<8x32xf32>
    %c1_111 = arith.constant 1 : index
    %c3_112 = arith.constant 3 : index
    %c0_113 = arith.constant 0 : index
    %c0_114 = arith.constant 0 : index
    %148 = vector.load %arg0[%c1_111, %c3_112, %c0_113, %c0_114] : memref<4x8x8x32xf32, #tpu.memory_space<vmem>>, vector<1x1x8x32xf32>
    %149 = vector.shape_cast %148 : vector<1x1x8x32xf32> to vector<8x32xf32>
    %c1_115 = arith.constant 1 : index
    %c0_116 = arith.constant 0 : index
    %c0_117 = arith.constant 0 : index
    %150 = vector.load %arg1[%c1_115, %c0_116, %c0_117] : memref<4x32x32xf32, #tpu.memory_space<vmem>>, vector<1x32x32xf32>
    %151 = vector.shape_cast %150 : vector<1x32x32xf32> to vector<32x32xf32>
    %cst_118 = arith.constant dense<0.000000e+00> : vector<8x32xf32>
    %152 = tpu.matmul %136, %151, %cst_118 {dimension_numbers = #tpu.dot_dimension_numbers<[1], [0], [0], [1], [0, 0, 1, 1], [], []>} : vector<8x32xf32>, vector<32x32xf32>, vector<8x32xf32> -> vector<8x32xf32>
    %153 = arith.addf %149, %152 : vector<8x32xf32>
    %154 = arith.negf %153 : vector<8x32xf32>
    %155 = math.exp %154 : vector<8x32xf32>
    %cst_119 = arith.constant 1.000000e+00 : f32
    %156 = vector.broadcast %cst_119 : f32 to vector<8x32xf32>
    %157 = arith.addf %156, %155 : vector<8x32xf32>
    %158 = arith.divf %156, %157 : vector<8x32xf32>
    %c2_120 = arith.constant 2 : index
    %c3_121 = arith.constant 3 : index
    %c0_122 = arith.constant 0 : index
    %c0_123 = arith.constant 0 : index
    %159 = vector.load %arg0[%c2_120, %c3_121, %c0_122, %c0_123] : memref<4x8x8x32xf32, #tpu.memory_space<vmem>>, vector<1x1x8x32xf32>
    %160 = vector.shape_cast %159 : vector<1x1x8x32xf32> to vector<8x32xf32>
    %c2_124 = arith.constant 2 : index
    %c0_125 = arith.constant 0 : index
    %c0_126 = arith.constant 0 : index
    %161 = vector.load %arg1[%c2_124, %c0_125, %c0_126] : memref<4x32x32xf32, #tpu.memory_space<vmem>>, vector<1x32x32xf32>
    %162 = vector.shape_cast %161 : vector<1x32x32xf32> to vector<32x32xf32>
    %cst_127 = arith.constant dense<0.000000e+00> : vector<8x32xf32>
    %163 = tpu.matmul %136, %162, %cst_127 {dimension_numbers = #tpu.dot_dimension_numbers<[1], [0], [0], [1], [0, 0, 1, 1], [], []>} : vector<8x32xf32>, vector<32x32xf32>, vector<8x32xf32> -> vector<8x32xf32>
    %164 = arith.addf %160, %163 : vector<8x32xf32>
    %165 = math.tanh %164 : vector<8x32xf32>
    %c3_128 = arith.constant 3 : index
    %c3_129 = arith.constant 3 : index
    %c0_130 = arith.constant 0 : index
    %c0_131 = arith.constant 0 : index
    %166 = vector.load %arg0[%c3_128, %c3_129, %c0_130, %c0_131] : memref<4x8x8x32xf32, #tpu.memory_space<vmem>>, vector<1x1x8x32xf32>
    %167 = vector.shape_cast %166 : vector<1x1x8x32xf32> to vector<8x32xf32>
    %c3_132 = arith.constant 3 : index
    %c0_133 = arith.constant 0 : index
    %c0_134 = arith.constant 0 : index
    %168 = vector.load %arg1[%c3_132, %c0_133, %c0_134] : memref<4x32x32xf32, #tpu.memory_space<vmem>>, vector<1x32x32xf32>
    %169 = vector.shape_cast %168 : vector<1x32x32xf32> to vector<32x32xf32>
    %cst_135 = arith.constant dense<0.000000e+00> : vector<8x32xf32>
    %170 = tpu.matmul %136, %169, %cst_135 {dimension_numbers = #tpu.dot_dimension_numbers<[1], [0], [0], [1], [0, 0, 1, 1], [], []>} : vector<8x32xf32>, vector<32x32xf32>, vector<8x32xf32> -> vector<8x32xf32>
    %171 = arith.addf %167, %170 : vector<8x32xf32>
    %172 = arith.negf %171 : vector<8x32xf32>
    %173 = math.exp %172 : vector<8x32xf32>
    %cst_136 = arith.constant 1.000000e+00 : f32
    %174 = vector.broadcast %cst_136 : f32 to vector<8x32xf32>
    %175 = arith.addf %174, %173 : vector<8x32xf32>
    %176 = arith.divf %174, %175 : vector<8x32xf32>
    %177 = arith.mulf %158, %134 : vector<8x32xf32>
    %178 = arith.mulf %147, %165 : vector<8x32xf32>
    %179 = arith.addf %177, %178 : vector<8x32xf32>
    %180 = math.tanh %179 : vector<8x32xf32>
    %181 = arith.mulf %176, %180 : vector<8x32xf32>
    %c0_137 = arith.constant 0 : index
    %c4 = arith.constant 4 : index
    %c0_138 = arith.constant 0 : index
    %c0_139 = arith.constant 0 : index
    %182 = vector.load %arg0[%c0_137, %c4, %c0_138, %c0_139] : memref<4x8x8x32xf32, #tpu.memory_space<vmem>>, vector<1x1x8x32xf32>
    %183 = vector.shape_cast %182 : vector<1x1x8x32xf32> to vector<8x32xf32>
    %c0_140 = arith.constant 0 : index
    %c0_141 = arith.constant 0 : index
    %c0_142 = arith.constant 0 : index
    %184 = vector.load %arg1[%c0_140, %c0_141, %c0_142] : memref<4x32x32xf32, #tpu.memory_space<vmem>>, vector<1x32x32xf32>
    %185 = vector.shape_cast %184 : vector<1x32x32xf32> to vector<32x32xf32>
    %cst_143 = arith.constant dense<0.000000e+00> : vector<8x32xf32>
    %186 = tpu.matmul %181, %185, %cst_143 {dimension_numbers = #tpu.dot_dimension_numbers<[1], [0], [0], [1], [0, 0, 1, 1], [], []>} : vector<8x32xf32>, vector<32x32xf32>, vector<8x32xf32> -> vector<8x32xf32>
    %187 = arith.addf %183, %186 : vector<8x32xf32>
    %188 = arith.negf %187 : vector<8x32xf32>
    %189 = math.exp %188 : vector<8x32xf32>
    %cst_144 = arith.constant 1.000000e+00 : f32
    %190 = vector.broadcast %cst_144 : f32 to vector<8x32xf32>
    %191 = arith.addf %190, %189 : vector<8x32xf32>
    %192 = arith.divf %190, %191 : vector<8x32xf32>
    %c1_145 = arith.constant 1 : index
    %c4_146 = arith.constant 4 : index
    %c0_147 = arith.constant 0 : index
    %c0_148 = arith.constant 0 : index
    %193 = vector.load %arg0[%c1_145, %c4_146, %c0_147, %c0_148] : memref<4x8x8x32xf32, #tpu.memory_space<vmem>>, vector<1x1x8x32xf32>
    %194 = vector.shape_cast %193 : vector<1x1x8x32xf32> to vector<8x32xf32>
    %c1_149 = arith.constant 1 : index
    %c0_150 = arith.constant 0 : index
    %c0_151 = arith.constant 0 : index
    %195 = vector.load %arg1[%c1_149, %c0_150, %c0_151] : memref<4x32x32xf32, #tpu.memory_space<vmem>>, vector<1x32x32xf32>
    %196 = vector.shape_cast %195 : vector<1x32x32xf32> to vector<32x32xf32>
    %cst_152 = arith.constant dense<0.000000e+00> : vector<8x32xf32>
    %197 = tpu.matmul %181, %196, %cst_152 {dimension_numbers = #tpu.dot_dimension_numbers<[1], [0], [0], [1], [0, 0, 1, 1], [], []>} : vector<8x32xf32>, vector<32x32xf32>, vector<8x32xf32> -> vector<8x32xf32>
    %198 = arith.addf %194, %197 : vector<8x32xf32>
    %199 = arith.negf %198 : vector<8x32xf32>
    %200 = math.exp %199 : vector<8x32xf32>
    %cst_153 = arith.constant 1.000000e+00 : f32
    %201 = vector.broadcast %cst_153 : f32 to vector<8x32xf32>
    %202 = arith.addf %201, %200 : vector<8x32xf32>
    %203 = arith.divf %201, %202 : vector<8x32xf32>
    %c2_154 = arith.constant 2 : index
    %c4_155 = arith.constant 4 : index
    %c0_156 = arith.constant 0 : index
    %c0_157 = arith.constant 0 : index
    %204 = vector.load %arg0[%c2_154, %c4_155, %c0_156, %c0_157] : memref<4x8x8x32xf32, #tpu.memory_space<vmem>>, vector<1x1x8x32xf32>
    %205 = vector.shape_cast %204 : vector<1x1x8x32xf32> to vector<8x32xf32>
    %c2_158 = arith.constant 2 : index
    %c0_159 = arith.constant 0 : index
    %c0_160 = arith.constant 0 : index
    %206 = vector.load %arg1[%c2_158, %c0_159, %c0_160] : memref<4x32x32xf32, #tpu.memory_space<vmem>>, vector<1x32x32xf32>
    %207 = vector.shape_cast %206 : vector<1x32x32xf32> to vector<32x32xf32>
    %cst_161 = arith.constant dense<0.000000e+00> : vector<8x32xf32>
    %208 = tpu.matmul %181, %207, %cst_161 {dimension_numbers = #tpu.dot_dimension_numbers<[1], [0], [0], [1], [0, 0, 1, 1], [], []>} : vector<8x32xf32>, vector<32x32xf32>, vector<8x32xf32> -> vector<8x32xf32>
    %209 = arith.addf %205, %208 : vector<8x32xf32>
    %210 = math.tanh %209 : vector<8x32xf32>
    %c3_162 = arith.constant 3 : index
    %c4_163 = arith.constant 4 : index
    %c0_164 = arith.constant 0 : index
    %c0_165 = arith.constant 0 : index
    %211 = vector.load %arg0[%c3_162, %c4_163, %c0_164, %c0_165] : memref<4x8x8x32xf32, #tpu.memory_space<vmem>>, vector<1x1x8x32xf32>
    %212 = vector.shape_cast %211 : vector<1x1x8x32xf32> to vector<8x32xf32>
    %c3_166 = arith.constant 3 : index
    %c0_167 = arith.constant 0 : index
    %c0_168 = arith.constant 0 : index
    %213 = vector.load %arg1[%c3_166, %c0_167, %c0_168] : memref<4x32x32xf32, #tpu.memory_space<vmem>>, vector<1x32x32xf32>
    %214 = vector.shape_cast %213 : vector<1x32x32xf32> to vector<32x32xf32>
    %cst_169 = arith.constant dense<0.000000e+00> : vector<8x32xf32>
    %215 = tpu.matmul %181, %214, %cst_169 {dimension_numbers = #tpu.dot_dimension_numbers<[1], [0], [0], [1], [0, 0, 1, 1], [], []>} : vector<8x32xf32>, vector<32x32xf32>, vector<8x32xf32> -> vector<8x32xf32>
    %216 = arith.addf %212, %215 : vector<8x32xf32>
    %217 = arith.negf %216 : vector<8x32xf32>
    %218 = math.exp %217 : vector<8x32xf32>
    %cst_170 = arith.constant 1.000000e+00 : f32
    %219 = vector.broadcast %cst_170 : f32 to vector<8x32xf32>
    %220 = arith.addf %219, %218 : vector<8x32xf32>
    %221 = arith.divf %219, %220 : vector<8x32xf32>
    %222 = arith.mulf %203, %179 : vector<8x32xf32>
    %223 = arith.mulf %192, %210 : vector<8x32xf32>
    %224 = arith.addf %222, %223 : vector<8x32xf32>
    %225 = math.tanh %224 : vector<8x32xf32>
    %226 = arith.mulf %221, %225 : vector<8x32xf32>
    %c0_171 = arith.constant 0 : index
    %c5 = arith.constant 5 : index
    %c0_172 = arith.constant 0 : index
    %c0_173 = arith.constant 0 : index
    %227 = vector.load %arg0[%c0_171, %c5, %c0_172, %c0_173] : memref<4x8x8x32xf32, #tpu.memory_space<vmem>>, vector<1x1x8x32xf32>
    %228 = vector.shape_cast %227 : vector<1x1x8x32xf32> to vector<8x32xf32>
    %c0_174 = arith.constant 0 : index
    %c0_175 = arith.constant 0 : index
    %c0_176 = arith.constant 0 : index
    %229 = vector.load %arg1[%c0_174, %c0_175, %c0_176] : memref<4x32x32xf32, #tpu.memory_space<vmem>>, vector<1x32x32xf32>
    %230 = vector.shape_cast %229 : vector<1x32x32xf32> to vector<32x32xf32>
    %cst_177 = arith.constant dense<0.000000e+00> : vector<8x32xf32>
    %231 = tpu.matmul %226, %230, %cst_177 {dimension_numbers = #tpu.dot_dimension_numbers<[1], [0], [0], [1], [0, 0, 1, 1], [], []>} : vector<8x32xf32>, vector<32x32xf32>, vector<8x32xf32> -> vector<8x32xf32>
    %232 = arith.addf %228, %231 : vector<8x32xf32>
    %233 = arith.negf %232 : vector<8x32xf32>
    %234 = math.exp %233 : vector<8x32xf32>
    %cst_178 = arith.constant 1.000000e+00 : f32
    %235 = vector.broadcast %cst_178 : f32 to vector<8x32xf32>
    %236 = arith.addf %235, %234 : vector<8x32xf32>
    %237 = arith.divf %235, %236 : vector<8x32xf32>
    %c1_179 = arith.constant 1 : index
    %c5_180 = arith.constant 5 : index
    %c0_181 = arith.constant 0 : index
    %c0_182 = arith.constant 0 : index
    %238 = vector.load %arg0[%c1_179, %c5_180, %c0_181, %c0_182] : memref<4x8x8x32xf32, #tpu.memory_space<vmem>>, vector<1x1x8x32xf32>
    %239 = vector.shape_cast %238 : vector<1x1x8x32xf32> to vector<8x32xf32>
    %c1_183 = arith.constant 1 : index
    %c0_184 = arith.constant 0 : index
    %c0_185 = arith.constant 0 : index
    %240 = vector.load %arg1[%c1_183, %c0_184, %c0_185] : memref<4x32x32xf32, #tpu.memory_space<vmem>>, vector<1x32x32xf32>
    %241 = vector.shape_cast %240 : vector<1x32x32xf32> to vector<32x32xf32>
    %cst_186 = arith.constant dense<0.000000e+00> : vector<8x32xf32>
    %242 = tpu.matmul %226, %241, %cst_186 {dimension_numbers = #tpu.dot_dimension_numbers<[1], [0], [0], [1], [0, 0, 1, 1], [], []>} : vector<8x32xf32>, vector<32x32xf32>, vector<8x32xf32> -> vector<8x32xf32>
    %243 = arith.addf %239, %242 : vector<8x32xf32>
    %244 = arith.negf %243 : vector<8x32xf32>
    %245 = math.exp %244 : vector<8x32xf32>
    %cst_187 = arith.constant 1.000000e+00 : f32
    %246 = vector.broadcast %cst_187 : f32 to vector<8x32xf32>
    %247 = arith.addf %246, %245 : vector<8x32xf32>
    %248 = arith.divf %246, %247 : vector<8x32xf32>
    %c2_188 = arith.constant 2 : index
    %c5_189 = arith.constant 5 : index
    %c0_190 = arith.constant 0 : index
    %c0_191 = arith.constant 0 : index
    %249 = vector.load %arg0[%c2_188, %c5_189, %c0_190, %c0_191] : memref<4x8x8x32xf32, #tpu.memory_space<vmem>>, vector<1x1x8x32xf32>
    %250 = vector.shape_cast %249 : vector<1x1x8x32xf32> to vector<8x32xf32>
    %c2_192 = arith.constant 2 : index
    %c0_193 = arith.constant 0 : index
    %c0_194 = arith.constant 0 : index
    %251 = vector.load %arg1[%c2_192, %c0_193, %c0_194] : memref<4x32x32xf32, #tpu.memory_space<vmem>>, vector<1x32x32xf32>
    %252 = vector.shape_cast %251 : vector<1x32x32xf32> to vector<32x32xf32>
    %cst_195 = arith.constant dense<0.000000e+00> : vector<8x32xf32>
    %253 = tpu.matmul %226, %252, %cst_195 {dimension_numbers = #tpu.dot_dimension_numbers<[1], [0], [0], [1], [0, 0, 1, 1], [], []>} : vector<8x32xf32>, vector<32x32xf32>, vector<8x32xf32> -> vector<8x32xf32>
    %254 = arith.addf %250, %253 : vector<8x32xf32>
    %255 = math.tanh %254 : vector<8x32xf32>
    %c3_196 = arith.constant 3 : index
    %c5_197 = arith.constant 5 : index
    %c0_198 = arith.constant 0 : index
    %c0_199 = arith.constant 0 : index
    %256 = vector.load %arg0[%c3_196, %c5_197, %c0_198, %c0_199] : memref<4x8x8x32xf32, #tpu.memory_space<vmem>>, vector<1x1x8x32xf32>
    %257 = vector.shape_cast %256 : vector<1x1x8x32xf32> to vector<8x32xf32>
    %c3_200 = arith.constant 3 : index
    %c0_201 = arith.constant 0 : index
    %c0_202 = arith.constant 0 : index
    %258 = vector.load %arg1[%c3_200, %c0_201, %c0_202] : memref<4x32x32xf32, #tpu.memory_space<vmem>>, vector<1x32x32xf32>
    %259 = vector.shape_cast %258 : vector<1x32x32xf32> to vector<32x32xf32>
    %cst_203 = arith.constant dense<0.000000e+00> : vector<8x32xf32>
    %260 = tpu.matmul %226, %259, %cst_203 {dimension_numbers = #tpu.dot_dimension_numbers<[1], [0], [0], [1], [0, 0, 1, 1], [], []>} : vector<8x32xf32>, vector<32x32xf32>, vector<8x32xf32> -> vector<8x32xf32>
    %261 = arith.addf %257, %260 : vector<8x32xf32>
    %262 = arith.negf %261 : vector<8x32xf32>
    %263 = math.exp %262 : vector<8x32xf32>
    %cst_204 = arith.constant 1.000000e+00 : f32
    %264 = vector.broadcast %cst_204 : f32 to vector<8x32xf32>
    %265 = arith.addf %264, %263 : vector<8x32xf32>
    %266 = arith.divf %264, %265 : vector<8x32xf32>
    %267 = arith.mulf %248, %224 : vector<8x32xf32>
    %268 = arith.mulf %237, %255 : vector<8x32xf32>
    %269 = arith.addf %267, %268 : vector<8x32xf32>
    %270 = math.tanh %269 : vector<8x32xf32>
    %271 = arith.mulf %266, %270 : vector<8x32xf32>
    %c0_205 = arith.constant 0 : index
    %c6 = arith.constant 6 : index
    %c0_206 = arith.constant 0 : index
    %c0_207 = arith.constant 0 : index
    %272 = vector.load %arg0[%c0_205, %c6, %c0_206, %c0_207] : memref<4x8x8x32xf32, #tpu.memory_space<vmem>>, vector<1x1x8x32xf32>
    %273 = vector.shape_cast %272 : vector<1x1x8x32xf32> to vector<8x32xf32>
    %c0_208 = arith.constant 0 : index
    %c0_209 = arith.constant 0 : index
    %c0_210 = arith.constant 0 : index
    %274 = vector.load %arg1[%c0_208, %c0_209, %c0_210] : memref<4x32x32xf32, #tpu.memory_space<vmem>>, vector<1x32x32xf32>
    %275 = vector.shape_cast %274 : vector<1x32x32xf32> to vector<32x32xf32>
    %cst_211 = arith.constant dense<0.000000e+00> : vector<8x32xf32>
    %276 = tpu.matmul %271, %275, %cst_211 {dimension_numbers = #tpu.dot_dimension_numbers<[1], [0], [0], [1], [0, 0, 1, 1], [], []>} : vector<8x32xf32>, vector<32x32xf32>, vector<8x32xf32> -> vector<8x32xf32>
    %277 = arith.addf %273, %276 : vector<8x32xf32>
    %278 = arith.negf %277 : vector<8x32xf32>
    %279 = math.exp %278 : vector<8x32xf32>
    %cst_212 = arith.constant 1.000000e+00 : f32
    %280 = vector.broadcast %cst_212 : f32 to vector<8x32xf32>
    %281 = arith.addf %280, %279 : vector<8x32xf32>
    %282 = arith.divf %280, %281 : vector<8x32xf32>
    %c1_213 = arith.constant 1 : index
    %c6_214 = arith.constant 6 : index
    %c0_215 = arith.constant 0 : index
    %c0_216 = arith.constant 0 : index
    %283 = vector.load %arg0[%c1_213, %c6_214, %c0_215, %c0_216] : memref<4x8x8x32xf32, #tpu.memory_space<vmem>>, vector<1x1x8x32xf32>
    %284 = vector.shape_cast %283 : vector<1x1x8x32xf32> to vector<8x32xf32>
    %c1_217 = arith.constant 1 : index
    %c0_218 = arith.constant 0 : index
    %c0_219 = arith.constant 0 : index
    %285 = vector.load %arg1[%c1_217, %c0_218, %c0_219] : memref<4x32x32xf32, #tpu.memory_space<vmem>>, vector<1x32x32xf32>
    %286 = vector.shape_cast %285 : vector<1x32x32xf32> to vector<32x32xf32>
    %cst_220 = arith.constant dense<0.000000e+00> : vector<8x32xf32>
    %287 = tpu.matmul %271, %286, %cst_220 {dimension_numbers = #tpu.dot_dimension_numbers<[1], [0], [0], [1], [0, 0, 1, 1], [], []>} : vector<8x32xf32>, vector<32x32xf32>, vector<8x32xf32> -> vector<8x32xf32>
    %288 = arith.addf %284, %287 : vector<8x32xf32>
    %289 = arith.negf %288 : vector<8x32xf32>
    %290 = math.exp %289 : vector<8x32xf32>
    %cst_221 = arith.constant 1.000000e+00 : f32
    %291 = vector.broadcast %cst_221 : f32 to vector<8x32xf32>
    %292 = arith.addf %291, %290 : vector<8x32xf32>
    %293 = arith.divf %291, %292 : vector<8x32xf32>
    %c2_222 = arith.constant 2 : index
    %c6_223 = arith.constant 6 : index
    %c0_224 = arith.constant 0 : index
    %c0_225 = arith.constant 0 : index
    %294 = vector.load %arg0[%c2_222, %c6_223, %c0_224, %c0_225] : memref<4x8x8x32xf32, #tpu.memory_space<vmem>>, vector<1x1x8x32xf32>
    %295 = vector.shape_cast %294 : vector<1x1x8x32xf32> to vector<8x32xf32>
    %c2_226 = arith.constant 2 : index
    %c0_227 = arith.constant 0 : index
    %c0_228 = arith.constant 0 : index
    %296 = vector.load %arg1[%c2_226, %c0_227, %c0_228] : memref<4x32x32xf32, #tpu.memory_space<vmem>>, vector<1x32x32xf32>
    %297 = vector.shape_cast %296 : vector<1x32x32xf32> to vector<32x32xf32>
    %cst_229 = arith.constant dense<0.000000e+00> : vector<8x32xf32>
    %298 = tpu.matmul %271, %297, %cst_229 {dimension_numbers = #tpu.dot_dimension_numbers<[1], [0], [0], [1], [0, 0, 1, 1], [], []>} : vector<8x32xf32>, vector<32x32xf32>, vector<8x32xf32> -> vector<8x32xf32>
    %299 = arith.addf %295, %298 : vector<8x32xf32>
    %300 = math.tanh %299 : vector<8x32xf32>
    %c3_230 = arith.constant 3 : index
    %c6_231 = arith.constant 6 : index
    %c0_232 = arith.constant 0 : index
    %c0_233 = arith.constant 0 : index
    %301 = vector.load %arg0[%c3_230, %c6_231, %c0_232, %c0_233] : memref<4x8x8x32xf32, #tpu.memory_space<vmem>>, vector<1x1x8x32xf32>
    %302 = vector.shape_cast %301 : vector<1x1x8x32xf32> to vector<8x32xf32>
    %c3_234 = arith.constant 3 : index
    %c0_235 = arith.constant 0 : index
    %c0_236 = arith.constant 0 : index
    %303 = vector.load %arg1[%c3_234, %c0_235, %c0_236] : memref<4x32x32xf32, #tpu.memory_space<vmem>>, vector<1x32x32xf32>
    %304 = vector.shape_cast %303 : vector<1x32x32xf32> to vector<32x32xf32>
    %cst_237 = arith.constant dense<0.000000e+00> : vector<8x32xf32>
    %305 = tpu.matmul %271, %304, %cst_237 {dimension_numbers = #tpu.dot_dimension_numbers<[1], [0], [0], [1], [0, 0, 1, 1], [], []>} : vector<8x32xf32>, vector<32x32xf32>, vector<8x32xf32> -> vector<8x32xf32>
    %306 = arith.addf %302, %305 : vector<8x32xf32>
    %307 = arith.negf %306 : vector<8x32xf32>
    %308 = math.exp %307 : vector<8x32xf32>
    %cst_238 = arith.constant 1.000000e+00 : f32
    %309 = vector.broadcast %cst_238 : f32 to vector<8x32xf32>
    %310 = arith.addf %309, %308 : vector<8x32xf32>
    %311 = arith.divf %309, %310 : vector<8x32xf32>
    %312 = arith.mulf %293, %269 : vector<8x32xf32>
    %313 = arith.mulf %282, %300 : vector<8x32xf32>
    %314 = arith.addf %312, %313 : vector<8x32xf32>
    %315 = math.tanh %314 : vector<8x32xf32>
    %316 = arith.mulf %311, %315 : vector<8x32xf32>
    %c0_239 = arith.constant 0 : index
    %c7 = arith.constant 7 : index
    %c0_240 = arith.constant 0 : index
    %c0_241 = arith.constant 0 : index
    %317 = vector.load %arg0[%c0_239, %c7, %c0_240, %c0_241] : memref<4x8x8x32xf32, #tpu.memory_space<vmem>>, vector<1x1x8x32xf32>
    %318 = vector.shape_cast %317 : vector<1x1x8x32xf32> to vector<8x32xf32>
    %c0_242 = arith.constant 0 : index
    %c0_243 = arith.constant 0 : index
    %c0_244 = arith.constant 0 : index
    %319 = vector.load %arg1[%c0_242, %c0_243, %c0_244] : memref<4x32x32xf32, #tpu.memory_space<vmem>>, vector<1x32x32xf32>
    %320 = vector.shape_cast %319 : vector<1x32x32xf32> to vector<32x32xf32>
    %cst_245 = arith.constant dense<0.000000e+00> : vector<8x32xf32>
    %321 = tpu.matmul %316, %320, %cst_245 {dimension_numbers = #tpu.dot_dimension_numbers<[1], [0], [0], [1], [0, 0, 1, 1], [], []>} : vector<8x32xf32>, vector<32x32xf32>, vector<8x32xf32> -> vector<8x32xf32>
    %322 = arith.addf %318, %321 : vector<8x32xf32>
    %323 = arith.negf %322 : vector<8x32xf32>
    %324 = math.exp %323 : vector<8x32xf32>
    %cst_246 = arith.constant 1.000000e+00 : f32
    %325 = vector.broadcast %cst_246 : f32 to vector<8x32xf32>
    %326 = arith.addf %325, %324 : vector<8x32xf32>
    %327 = arith.divf %325, %326 : vector<8x32xf32>
    %c1_247 = arith.constant 1 : index
    %c7_248 = arith.constant 7 : index
    %c0_249 = arith.constant 0 : index
    %c0_250 = arith.constant 0 : index
    %328 = vector.load %arg0[%c1_247, %c7_248, %c0_249, %c0_250] : memref<4x8x8x32xf32, #tpu.memory_space<vmem>>, vector<1x1x8x32xf32>
    %329 = vector.shape_cast %328 : vector<1x1x8x32xf32> to vector<8x32xf32>
    %c1_251 = arith.constant 1 : index
    %c0_252 = arith.constant 0 : index
    %c0_253 = arith.constant 0 : index
    %330 = vector.load %arg1[%c1_251, %c0_252, %c0_253] : memref<4x32x32xf32, #tpu.memory_space<vmem>>, vector<1x32x32xf32>
    %331 = vector.shape_cast %330 : vector<1x32x32xf32> to vector<32x32xf32>
    %cst_254 = arith.constant dense<0.000000e+00> : vector<8x32xf32>
    %332 = tpu.matmul %316, %331, %cst_254 {dimension_numbers = #tpu.dot_dimension_numbers<[1], [0], [0], [1], [0, 0, 1, 1], [], []>} : vector<8x32xf32>, vector<32x32xf32>, vector<8x32xf32> -> vector<8x32xf32>
    %333 = arith.addf %329, %332 : vector<8x32xf32>
    %334 = arith.negf %333 : vector<8x32xf32>
    %335 = math.exp %334 : vector<8x32xf32>
    %cst_255 = arith.constant 1.000000e+00 : f32
    %336 = vector.broadcast %cst_255 : f32 to vector<8x32xf32>
    %337 = arith.addf %336, %335 : vector<8x32xf32>
    %338 = arith.divf %336, %337 : vector<8x32xf32>
    %c2_256 = arith.constant 2 : index
    %c7_257 = arith.constant 7 : index
    %c0_258 = arith.constant 0 : index
    %c0_259 = arith.constant 0 : index
    %339 = vector.load %arg0[%c2_256, %c7_257, %c0_258, %c0_259] : memref<4x8x8x32xf32, #tpu.memory_space<vmem>>, vector<1x1x8x32xf32>
    %340 = vector.shape_cast %339 : vector<1x1x8x32xf32> to vector<8x32xf32>
    %c2_260 = arith.constant 2 : index
    %c0_261 = arith.constant 0 : index
    %c0_262 = arith.constant 0 : index
    %341 = vector.load %arg1[%c2_260, %c0_261, %c0_262] : memref<4x32x32xf32, #tpu.memory_space<vmem>>, vector<1x32x32xf32>
    %342 = vector.shape_cast %341 : vector<1x32x32xf32> to vector<32x32xf32>
    %cst_263 = arith.constant dense<0.000000e+00> : vector<8x32xf32>
    %343 = tpu.matmul %316, %342, %cst_263 {dimension_numbers = #tpu.dot_dimension_numbers<[1], [0], [0], [1], [0, 0, 1, 1], [], []>} : vector<8x32xf32>, vector<32x32xf32>, vector<8x32xf32> -> vector<8x32xf32>
    %344 = arith.addf %340, %343 : vector<8x32xf32>
    %345 = math.tanh %344 : vector<8x32xf32>
    %c3_264 = arith.constant 3 : index
    %c7_265 = arith.constant 7 : index
    %c0_266 = arith.constant 0 : index
    %c0_267 = arith.constant 0 : index
    %346 = vector.load %arg0[%c3_264, %c7_265, %c0_266, %c0_267] : memref<4x8x8x32xf32, #tpu.memory_space<vmem>>, vector<1x1x8x32xf32>
    %347 = vector.shape_cast %346 : vector<1x1x8x32xf32> to vector<8x32xf32>
    %c3_268 = arith.constant 3 : index
    %c0_269 = arith.constant 0 : index
    %c0_270 = arith.constant 0 : index
    %348 = vector.load %arg1[%c3_268, %c0_269, %c0_270] : memref<4x32x32xf32, #tpu.memory_space<vmem>>, vector<1x32x32xf32>
    %349 = vector.shape_cast %348 : vector<1x32x32xf32> to vector<32x32xf32>
    %cst_271 = arith.constant dense<0.000000e+00> : vector<8x32xf32>
    %350 = tpu.matmul %316, %349, %cst_271 {dimension_numbers = #tpu.dot_dimension_numbers<[1], [0], [0], [1], [0, 0, 1, 1], [], []>} : vector<8x32xf32>, vector<32x32xf32>, vector<8x32xf32> -> vector<8x32xf32>
    %351 = arith.addf %347, %350 : vector<8x32xf32>
    %352 = arith.negf %351 : vector<8x32xf32>
    %353 = math.exp %352 : vector<8x32xf32>
    %cst_272 = arith.constant 1.000000e+00 : f32
    %354 = vector.broadcast %cst_272 : f32 to vector<8x32xf32>
    %355 = arith.addf %354, %353 : vector<8x32xf32>
    %356 = arith.divf %354, %355 : vector<8x32xf32>
    %357 = arith.mulf %338, %314 : vector<8x32xf32>
    %358 = arith.mulf %327, %345 : vector<8x32xf32>
    %359 = arith.addf %357, %358 : vector<8x32xf32>
    %360 = math.tanh %359 : vector<8x32xf32>
    %361 = arith.mulf %356, %360 : vector<8x32xf32>
    %c0_273 = arith.constant 0 : index
    %c0_274 = arith.constant 0 : index
    %362 = vector.load %arg2[%c0_273, %c0_274] : memref<8x1000xf32, #tpu.memory_space<vmem>>, vector<8x1000xf32>
    %c0_275 = arith.constant 0 : index
    %c0_276 = arith.constant 0 : index
    %363 = vector.load %arg3[%c0_275, %c0_276] : memref<1000x128xf32, #tpu.memory_space<vmem>>, vector<1000x128xf32>
    %cst_277 = arith.constant dense<0.000000e+00> : vector<8x128xf32>
    %364 = tpu.matmul %362, %363, %cst_277 {dimension_numbers = #tpu.dot_dimension_numbers<[1], [0], [0], [1], [0, 0, 1, 1], [], []>} : vector<8x1000xf32>, vector<1000x128xf32>, vector<8x128xf32> -> vector<8x128xf32>
    %c0_278 = arith.constant 0 : index
    %c0_279 = arith.constant 0 : index
    %365 = vector.load %arg5[%c0_278, %c0_279] : memref<1x128xf32, #tpu.memory_space<vmem>>, vector<1x128xf32>
    %366 = vector.broadcast %365 : vector<1x128xf32> to vector<8x128xf32>
    %367 = arith.addf %364, %366 : vector<8x128xf32>
    %368 = vector.extract_strided_slice %46 {offsets = [0, 0], sizes = [1, 32], strides = [1, 1]} : vector<8x32xf32> to vector<1x32xf32>
    %369 = vector.extract_strided_slice %91 {offsets = [0, 0], sizes = [1, 32], strides = [1, 1]} : vector<8x32xf32> to vector<1x32xf32>
    %370 = vector.extract_strided_slice %136 {offsets = [0, 0], sizes = [1, 32], strides = [1, 1]} : vector<8x32xf32> to vector<1x32xf32>
    %371 = vector.extract_strided_slice %181 {offsets = [0, 0], sizes = [1, 32], strides = [1, 1]} : vector<8x32xf32> to vector<1x32xf32>
    %372 = vector.extract_strided_slice %226 {offsets = [0, 0], sizes = [1, 32], strides = [1, 1]} : vector<8x32xf32> to vector<1x32xf32>
    %373 = vector.extract_strided_slice %271 {offsets = [0, 0], sizes = [1, 32], strides = [1, 1]} : vector<8x32xf32> to vector<1x32xf32>
    %374 = vector.extract_strided_slice %316 {offsets = [0, 0], sizes = [1, 32], strides = [1, 1]} : vector<8x32xf32> to vector<1x32xf32>
    %375 = vector.extract_strided_slice %361 {offsets = [0, 0], sizes = [1, 32], strides = [1, 1]} : vector<8x32xf32> to vector<1x32xf32>
    %376 = tpu.concatenate %368, %369, %370, %371, %372, %373, %374, %375 in 0 : vector<1x32xf32>, vector<1x32xf32>, vector<1x32xf32>, vector<1x32xf32>, vector<1x32xf32>, vector<1x32xf32>, vector<1x32xf32>, vector<1x32xf32> -> vector<8x32xf32>
    %c0_280 = arith.constant 0 : index
    %c0_281 = arith.constant 0 : index
    %c0_282 = arith.constant 0 : index
    %377 = vector.load %arg4[%c0_280, %c0_281, %c0_282] : memref<8x32x128xf32, #tpu.memory_space<vmem>>, vector<1x32x128xf32>
    %378 = vector.shape_cast %377 : vector<1x32x128xf32> to vector<32x128xf32>
    %cst_283 = arith.constant dense<0.000000e+00> : vector<8x128xf32>
    %379 = tpu.matmul %376, %378, %cst_283 {dimension_numbers = #tpu.dot_dimension_numbers<[1], [0], [0], [1], [0, 0, 1, 1], [], []>} : vector<8x32xf32>, vector<32x128xf32>, vector<8x128xf32> -> vector<8x128xf32>
    %380 = arith.addf %367, %379 : vector<8x128xf32>
    %381 = vector.extract_strided_slice %46 {offsets = [1, 0], sizes = [1, 32], strides = [1, 1]} : vector<8x32xf32> to vector<1x32xf32>
    %382 = vector.extract_strided_slice %91 {offsets = [1, 0], sizes = [1, 32], strides = [1, 1]} : vector<8x32xf32> to vector<1x32xf32>
    %383 = vector.extract_strided_slice %136 {offsets = [1, 0], sizes = [1, 32], strides = [1, 1]} : vector<8x32xf32> to vector<1x32xf32>
    %384 = vector.extract_strided_slice %181 {offsets = [1, 0], sizes = [1, 32], strides = [1, 1]} : vector<8x32xf32> to vector<1x32xf32>
    %385 = vector.extract_strided_slice %226 {offsets = [1, 0], sizes = [1, 32], strides = [1, 1]} : vector<8x32xf32> to vector<1x32xf32>
    %386 = vector.extract_strided_slice %271 {offsets = [1, 0], sizes = [1, 32], strides = [1, 1]} : vector<8x32xf32> to vector<1x32xf32>
    %387 = vector.extract_strided_slice %316 {offsets = [1, 0], sizes = [1, 32], strides = [1, 1]} : vector<8x32xf32> to vector<1x32xf32>
    %388 = vector.extract_strided_slice %361 {offsets = [1, 0], sizes = [1, 32], strides = [1, 1]} : vector<8x32xf32> to vector<1x32xf32>
    %389 = tpu.concatenate %381, %382, %383, %384, %385, %386, %387, %388 in 0 : vector<1x32xf32>, vector<1x32xf32>, vector<1x32xf32>, vector<1x32xf32>, vector<1x32xf32>, vector<1x32xf32>, vector<1x32xf32>, vector<1x32xf32> -> vector<8x32xf32>
    %c1_284 = arith.constant 1 : index
    %c0_285 = arith.constant 0 : index
    %c0_286 = arith.constant 0 : index
    %390 = vector.load %arg4[%c1_284, %c0_285, %c0_286] : memref<8x32x128xf32, #tpu.memory_space<vmem>>, vector<1x32x128xf32>
    %391 = vector.shape_cast %390 : vector<1x32x128xf32> to vector<32x128xf32>
    %cst_287 = arith.constant dense<0.000000e+00> : vector<8x128xf32>
    %392 = tpu.matmul %389, %391, %cst_287 {dimension_numbers = #tpu.dot_dimension_numbers<[1], [0], [0], [1], [0, 0, 1, 1], [], []>} : vector<8x32xf32>, vector<32x128xf32>, vector<8x128xf32> -> vector<8x128xf32>
    %393 = arith.addf %380, %392 : vector<8x128xf32>
    %394 = vector.extract_strided_slice %46 {offsets = [2, 0], sizes = [1, 32], strides = [1, 1]} : vector<8x32xf32> to vector<1x32xf32>
    %395 = vector.extract_strided_slice %91 {offsets = [2, 0], sizes = [1, 32], strides = [1, 1]} : vector<8x32xf32> to vector<1x32xf32>
    %396 = vector.extract_strided_slice %136 {offsets = [2, 0], sizes = [1, 32], strides = [1, 1]} : vector<8x32xf32> to vector<1x32xf32>
    %397 = vector.extract_strided_slice %181 {offsets = [2, 0], sizes = [1, 32], strides = [1, 1]} : vector<8x32xf32> to vector<1x32xf32>
    %398 = vector.extract_strided_slice %226 {offsets = [2, 0], sizes = [1, 32], strides = [1, 1]} : vector<8x32xf32> to vector<1x32xf32>
    %399 = vector.extract_strided_slice %271 {offsets = [2, 0], sizes = [1, 32], strides = [1, 1]} : vector<8x32xf32> to vector<1x32xf32>
    %400 = vector.extract_strided_slice %316 {offsets = [2, 0], sizes = [1, 32], strides = [1, 1]} : vector<8x32xf32> to vector<1x32xf32>
    %401 = vector.extract_strided_slice %361 {offsets = [2, 0], sizes = [1, 32], strides = [1, 1]} : vector<8x32xf32> to vector<1x32xf32>
    %402 = tpu.concatenate %394, %395, %396, %397, %398, %399, %400, %401 in 0 : vector<1x32xf32>, vector<1x32xf32>, vector<1x32xf32>, vector<1x32xf32>, vector<1x32xf32>, vector<1x32xf32>, vector<1x32xf32>, vector<1x32xf32> -> vector<8x32xf32>
    %c2_288 = arith.constant 2 : index
    %c0_289 = arith.constant 0 : index
    %c0_290 = arith.constant 0 : index
    %403 = vector.load %arg4[%c2_288, %c0_289, %c0_290] : memref<8x32x128xf32, #tpu.memory_space<vmem>>, vector<1x32x128xf32>
    %404 = vector.shape_cast %403 : vector<1x32x128xf32> to vector<32x128xf32>
    %cst_291 = arith.constant dense<0.000000e+00> : vector<8x128xf32>
    %405 = tpu.matmul %402, %404, %cst_291 {dimension_numbers = #tpu.dot_dimension_numbers<[1], [0], [0], [1], [0, 0, 1, 1], [], []>} : vector<8x32xf32>, vector<32x128xf32>, vector<8x128xf32> -> vector<8x128xf32>
    %406 = arith.addf %393, %405 : vector<8x128xf32>
    %407 = vector.extract_strided_slice %46 {offsets = [3, 0], sizes = [1, 32], strides = [1, 1]} : vector<8x32xf32> to vector<1x32xf32>
    %408 = vector.extract_strided_slice %91 {offsets = [3, 0], sizes = [1, 32], strides = [1, 1]} : vector<8x32xf32> to vector<1x32xf32>
    %409 = vector.extract_strided_slice %136 {offsets = [3, 0], sizes = [1, 32], strides = [1, 1]} : vector<8x32xf32> to vector<1x32xf32>
    %410 = vector.extract_strided_slice %181 {offsets = [3, 0], sizes = [1, 32], strides = [1, 1]} : vector<8x32xf32> to vector<1x32xf32>
    %411 = vector.extract_strided_slice %226 {offsets = [3, 0], sizes = [1, 32], strides = [1, 1]} : vector<8x32xf32> to vector<1x32xf32>
    %412 = vector.extract_strided_slice %271 {offsets = [3, 0], sizes = [1, 32], strides = [1, 1]} : vector<8x32xf32> to vector<1x32xf32>
    %413 = vector.extract_strided_slice %316 {offsets = [3, 0], sizes = [1, 32], strides = [1, 1]} : vector<8x32xf32> to vector<1x32xf32>
    %414 = vector.extract_strided_slice %361 {offsets = [3, 0], sizes = [1, 32], strides = [1, 1]} : vector<8x32xf32> to vector<1x32xf32>
    %415 = tpu.concatenate %407, %408, %409, %410, %411, %412, %413, %414 in 0 : vector<1x32xf32>, vector<1x32xf32>, vector<1x32xf32>, vector<1x32xf32>, vector<1x32xf32>, vector<1x32xf32>, vector<1x32xf32>, vector<1x32xf32> -> vector<8x32xf32>
    %c3_292 = arith.constant 3 : index
    %c0_293 = arith.constant 0 : index
    %c0_294 = arith.constant 0 : index
    %416 = vector.load %arg4[%c3_292, %c0_293, %c0_294] : memref<8x32x128xf32, #tpu.memory_space<vmem>>, vector<1x32x128xf32>
    %417 = vector.shape_cast %416 : vector<1x32x128xf32> to vector<32x128xf32>
    %cst_295 = arith.constant dense<0.000000e+00> : vector<8x128xf32>
    %418 = tpu.matmul %415, %417, %cst_295 {dimension_numbers = #tpu.dot_dimension_numbers<[1], [0], [0], [1], [0, 0, 1, 1], [], []>} : vector<8x32xf32>, vector<32x128xf32>, vector<8x128xf32> -> vector<8x128xf32>
    %419 = arith.addf %406, %418 : vector<8x128xf32>
    %420 = vector.extract_strided_slice %46 {offsets = [4, 0], sizes = [1, 32], strides = [1, 1]} : vector<8x32xf32> to vector<1x32xf32>
    %421 = vector.extract_strided_slice %91 {offsets = [4, 0], sizes = [1, 32], strides = [1, 1]} : vector<8x32xf32> to vector<1x32xf32>
    %422 = vector.extract_strided_slice %136 {offsets = [4, 0], sizes = [1, 32], strides = [1, 1]} : vector<8x32xf32> to vector<1x32xf32>
    %423 = vector.extract_strided_slice %181 {offsets = [4, 0], sizes = [1, 32], strides = [1, 1]} : vector<8x32xf32> to vector<1x32xf32>
    %424 = vector.extract_strided_slice %226 {offsets = [4, 0], sizes = [1, 32], strides = [1, 1]} : vector<8x32xf32> to vector<1x32xf32>
    %425 = vector.extract_strided_slice %271 {offsets = [4, 0], sizes = [1, 32], strides = [1, 1]} : vector<8x32xf32> to vector<1x32xf32>
    %426 = vector.extract_strided_slice %316 {offsets = [4, 0], sizes = [1, 32], strides = [1, 1]} : vector<8x32xf32> to vector<1x32xf32>
    %427 = vector.extract_strided_slice %361 {offsets = [4, 0], sizes = [1, 32], strides = [1, 1]} : vector<8x32xf32> to vector<1x32xf32>
    %428 = tpu.concatenate %420, %421, %422, %423, %424, %425, %426, %427 in 0 : vector<1x32xf32>, vector<1x32xf32>, vector<1x32xf32>, vector<1x32xf32>, vector<1x32xf32>, vector<1x32xf32>, vector<1x32xf32>, vector<1x32xf32> -> vector<8x32xf32>
    %c4_296 = arith.constant 4 : index
    %c0_297 = arith.constant 0 : index
    %c0_298 = arith.constant 0 : index
    %429 = vector.load %arg4[%c4_296, %c0_297, %c0_298] : memref<8x32x128xf32, #tpu.memory_space<vmem>>, vector<1x32x128xf32>
    %430 = vector.shape_cast %429 : vector<1x32x128xf32> to vector<32x128xf32>
    %cst_299 = arith.constant dense<0.000000e+00> : vector<8x128xf32>
    %431 = tpu.matmul %428, %430, %cst_299 {dimension_numbers = #tpu.dot_dimension_numbers<[1], [0], [0], [1], [0, 0, 1, 1], [], []>} : vector<8x32xf32>, vector<32x128xf32>, vector<8x128xf32> -> vector<8x128xf32>
    %432 = arith.addf %419, %431 : vector<8x128xf32>
    %433 = vector.extract_strided_slice %46 {offsets = [5, 0], sizes = [1, 32], strides = [1, 1]} : vector<8x32xf32> to vector<1x32xf32>
    %434 = vector.extract_strided_slice %91 {offsets = [5, 0], sizes = [1, 32], strides = [1, 1]} : vector<8x32xf32> to vector<1x32xf32>
    %435 = vector.extract_strided_slice %136 {offsets = [5, 0], sizes = [1, 32], strides = [1, 1]} : vector<8x32xf32> to vector<1x32xf32>
    %436 = vector.extract_strided_slice %181 {offsets = [5, 0], sizes = [1, 32], strides = [1, 1]} : vector<8x32xf32> to vector<1x32xf32>
    %437 = vector.extract_strided_slice %226 {offsets = [5, 0], sizes = [1, 32], strides = [1, 1]} : vector<8x32xf32> to vector<1x32xf32>
    %438 = vector.extract_strided_slice %271 {offsets = [5, 0], sizes = [1, 32], strides = [1, 1]} : vector<8x32xf32> to vector<1x32xf32>
    %439 = vector.extract_strided_slice %316 {offsets = [5, 0], sizes = [1, 32], strides = [1, 1]} : vector<8x32xf32> to vector<1x32xf32>
    %440 = vector.extract_strided_slice %361 {offsets = [5, 0], sizes = [1, 32], strides = [1, 1]} : vector<8x32xf32> to vector<1x32xf32>
    %441 = tpu.concatenate %433, %434, %435, %436, %437, %438, %439, %440 in 0 : vector<1x32xf32>, vector<1x32xf32>, vector<1x32xf32>, vector<1x32xf32>, vector<1x32xf32>, vector<1x32xf32>, vector<1x32xf32>, vector<1x32xf32> -> vector<8x32xf32>
    %c5_300 = arith.constant 5 : index
    %c0_301 = arith.constant 0 : index
    %c0_302 = arith.constant 0 : index
    %442 = vector.load %arg4[%c5_300, %c0_301, %c0_302] : memref<8x32x128xf32, #tpu.memory_space<vmem>>, vector<1x32x128xf32>
    %443 = vector.shape_cast %442 : vector<1x32x128xf32> to vector<32x128xf32>
    %cst_303 = arith.constant dense<0.000000e+00> : vector<8x128xf32>
    %444 = tpu.matmul %441, %443, %cst_303 {dimension_numbers = #tpu.dot_dimension_numbers<[1], [0], [0], [1], [0, 0, 1, 1], [], []>} : vector<8x32xf32>, vector<32x128xf32>, vector<8x128xf32> -> vector<8x128xf32>
    %445 = arith.addf %432, %444 : vector<8x128xf32>
    %446 = vector.extract_strided_slice %46 {offsets = [6, 0], sizes = [1, 32], strides = [1, 1]} : vector<8x32xf32> to vector<1x32xf32>
    %447 = vector.extract_strided_slice %91 {offsets = [6, 0], sizes = [1, 32], strides = [1, 1]} : vector<8x32xf32> to vector<1x32xf32>
    %448 = vector.extract_strided_slice %136 {offsets = [6, 0], sizes = [1, 32], strides = [1, 1]} : vector<8x32xf32> to vector<1x32xf32>
    %449 = vector.extract_strided_slice %181 {offsets = [6, 0], sizes = [1, 32], strides = [1, 1]} : vector<8x32xf32> to vector<1x32xf32>
    %450 = vector.extract_strided_slice %226 {offsets = [6, 0], sizes = [1, 32], strides = [1, 1]} : vector<8x32xf32> to vector<1x32xf32>
    %451 = vector.extract_strided_slice %271 {offsets = [6, 0], sizes = [1, 32], strides = [1, 1]} : vector<8x32xf32> to vector<1x32xf32>
    %452 = vector.extract_strided_slice %316 {offsets = [6, 0], sizes = [1, 32], strides = [1, 1]} : vector<8x32xf32> to vector<1x32xf32>
    %453 = vector.extract_strided_slice %361 {offsets = [6, 0], sizes = [1, 32], strides = [1, 1]} : vector<8x32xf32> to vector<1x32xf32>
    %454 = tpu.concatenate %446, %447, %448, %449, %450, %451, %452, %453 in 0 : vector<1x32xf32>, vector<1x32xf32>, vector<1x32xf32>, vector<1x32xf32>, vector<1x32xf32>, vector<1x32xf32>, vector<1x32xf32>, vector<1x32xf32> -> vector<8x32xf32>
    %c6_304 = arith.constant 6 : index
    %c0_305 = arith.constant 0 : index
    %c0_306 = arith.constant 0 : index
    %455 = vector.load %arg4[%c6_304, %c0_305, %c0_306] : memref<8x32x128xf32, #tpu.memory_space<vmem>>, vector<1x32x128xf32>
    %456 = vector.shape_cast %455 : vector<1x32x128xf32> to vector<32x128xf32>
    %cst_307 = arith.constant dense<0.000000e+00> : vector<8x128xf32>
    %457 = tpu.matmul %454, %456, %cst_307 {dimension_numbers = #tpu.dot_dimension_numbers<[1], [0], [0], [1], [0, 0, 1, 1], [], []>} : vector<8x32xf32>, vector<32x128xf32>, vector<8x128xf32> -> vector<8x128xf32>
    %458 = arith.addf %445, %457 : vector<8x128xf32>
    %459 = vector.extract_strided_slice %46 {offsets = [7, 0], sizes = [1, 32], strides = [1, 1]} : vector<8x32xf32> to vector<1x32xf32>
    %460 = vector.extract_strided_slice %91 {offsets = [7, 0], sizes = [1, 32], strides = [1, 1]} : vector<8x32xf32> to vector<1x32xf32>
    %461 = vector.extract_strided_slice %136 {offsets = [7, 0], sizes = [1, 32], strides = [1, 1]} : vector<8x32xf32> to vector<1x32xf32>
    %462 = vector.extract_strided_slice %181 {offsets = [7, 0], sizes = [1, 32], strides = [1, 1]} : vector<8x32xf32> to vector<1x32xf32>
    %463 = vector.extract_strided_slice %226 {offsets = [7, 0], sizes = [1, 32], strides = [1, 1]} : vector<8x32xf32> to vector<1x32xf32>
    %464 = vector.extract_strided_slice %271 {offsets = [7, 0], sizes = [1, 32], strides = [1, 1]} : vector<8x32xf32> to vector<1x32xf32>
    %465 = vector.extract_strided_slice %316 {offsets = [7, 0], sizes = [1, 32], strides = [1, 1]} : vector<8x32xf32> to vector<1x32xf32>
    %466 = vector.extract_strided_slice %361 {offsets = [7, 0], sizes = [1, 32], strides = [1, 1]} : vector<8x32xf32> to vector<1x32xf32>
    %467 = tpu.concatenate %459, %460, %461, %462, %463, %464, %465, %466 in 0 : vector<1x32xf32>, vector<1x32xf32>, vector<1x32xf32>, vector<1x32xf32>, vector<1x32xf32>, vector<1x32xf32>, vector<1x32xf32>, vector<1x32xf32> -> vector<8x32xf32>
    %c7_308 = arith.constant 7 : index
    %c0_309 = arith.constant 0 : index
    %c0_310 = arith.constant 0 : index
    %468 = vector.load %arg4[%c7_308, %c0_309, %c0_310] : memref<8x32x128xf32, #tpu.memory_space<vmem>>, vector<1x32x128xf32>
    %469 = vector.shape_cast %468 : vector<1x32x128xf32> to vector<32x128xf32>
    %cst_311 = arith.constant dense<0.000000e+00> : vector<8x128xf32>
    %470 = tpu.matmul %467, %469, %cst_311 {dimension_numbers = #tpu.dot_dimension_numbers<[1], [0], [0], [1], [0, 0, 1, 1], [], []>} : vector<8x32xf32>, vector<32x128xf32>, vector<8x128xf32> -> vector<8x128xf32>
    %471 = arith.addf %458, %470 : vector<8x128xf32>
    %c0_312 = arith.constant 0 : index
    %c0_313 = arith.constant 0 : index
    %472 = vector.load %arg6[%c0_312, %c0_313] : memref<8x128xf32, #tpu.memory_space<vmem>>, vector<8x128xf32>
    tpu.vector_store %arg6[%c0_312, %c0_313], %471 {strides = array<i32>} : memref<8x128xf32, #tpu.memory_space<vmem>>, vector<8x128xf32>,
    return
  }
}

</mosaic_0001>

<llo_original>
// kernel: rnn_decoder_forward.1
$region0: #{rnn_decoder_forward.1}
  #allocation0 [shape = 'u32[]', space=smem, size = 0x4, offset = 0x4, fixed_abs, tag = 'smem constant byte address 0x4 - core index']
  #allocation1 [shape = 'u32[72,128]{1,0:T(1,128)}', space=vmem, size = 0x9000, scoped, tag = 'internal scratch']
  %s0 = inlined_call_operand.vmem [shape: f32[4,8,8,32], index: 0, kind: input, shape index: {}]
  %s1 = inlined_call_operand.vmem [shape: f32[4,32,32], index: 1, kind: input, shape index: {}]
  %s2 = inlined_call_operand.hbm [shape: f32[8,1000], index: 2, kind: input, shape index: {}]
  %s3 = inlined_call_operand.hbm [shape: f32[1000,128], index: 3, kind: input, shape index: {}]
  %s4 = inlined_call_operand.vmem [shape: f32[8,32,128], index: 4, kind: input, shape index: {}]
  %s5 = inlined_call_operand.vmem [shape: f32[1,128], index: 5, kind: input, shape index: {}]
  %s6 = inlined_call_operand.hbm [shape: f32[8,128], index: 6, kind: output, shape index: {}]
  %s7 = sld [smem:[#allocation0]]
  $region42: #{rnn_decoder_forward.1} parent=0
    _
  %s9 = ssub.s32 1, %s7
  %s10 = scalar_select 0, %s9, %s7
  $region1: #{rnn_decoder_forward.1} parent=0
    #allocation2 [shape = 'u8[32768]{0}', space=vmem, size = 0x8000, scoped, tag = 'input window, operand 2, single buffered']
    #allocation3 [shape = 's32[1]{0}', space=sflag, size = 0x4, scoped, tag = 'scoped memory for rnn_decoder_forward.1']
    #allocation4 [shape = 's32[1]{0}', space=sflag, size = 0x4, scoped, tag = 'scoped memory for rnn_decoder_forward.1']
    #allocation5 [shape = 'u8[512000]{0}', space=vmem, size = 0x7d000, scoped, tag = 'input window, operand 3, single buffered']
    #allocation6 [shape = 's32[1]{0}', space=sflag, size = 0x4, scoped, tag = 'scoped memory for rnn_decoder_forward.1']
    #allocation7 [shape = 'u8[4096]{0}', space=vmem, size = 0x1000, scoped, tag = 'output window, operand 0, single buffered']
    %11 = vsyncpa [#allocation3], 0
    %12 = vsyncpa [#allocation6], 0
    %13 = vsyncpa [#allocation4], 0
    // Predicated region
    $region2: #{rnn_decoder_forward.1} parent=1 // pred_check
      _
    $region3: #{rnn_decoder_forward.1} parent=1 // pred_check_branch
      %15 = sbr.rel (0) target = $region5
    $region4: #{rnn_decoder_forward.1} parent=1 // pred_region
      _
    $region5: #{rnn_decoder_forward.1} parent=1 // pred_fallthru
      _
    // Predicated region
    $region6: #{rnn_decoder_forward.1} parent=1 // pred_check
      _
    $region7: #{rnn_decoder_forward.1} parent=1 // pred_check_branch
      %17 = sbr.rel (0) target = $region9
    $region8: #{rnn_decoder_forward.1} parent=1 // pred_region
      _
    $region9: #{rnn_decoder_forward.1} parent=1 // pred_fallthru
      _
    // Predicated region
    $region10: #{rnn_decoder_forward.1} parent=1 // pred_check
      _
    $region11: #{rnn_decoder_forward.1} parent=1 // pred_check_branch
      %19 = sbr.rel (0) target = $region13
    $region12: #{rnn_decoder_forward.1} parent=1 // pred_region
      %21 = vsyncadd [#allocation3], 0
      %s23 = sshll.u32 %s2, 4
      %s24 = int_to_ptr.hbm [resolvable:$true] %s23
      %s25 = sshll.u32 [#allocation2], 4
      %s26 = int_to_ptr.vmem [resolvable:$true] %s25
      %28 = dma.hbm_to_vmem [thread:$0]  %s24, 1024, %s26, [#allocation3]
    $region13: #{rnn_decoder_forward.1} parent=1 // pred_fallthru
      _
    // Predicated region
    $region14: #{rnn_decoder_forward.1} parent=1 // pred_check
      _
    $region15: #{rnn_decoder_forward.1} parent=1 // pred_check_branch
      %30 = sbr.rel (0) target = $region17
    $region16: #{rnn_decoder_forward.1} parent=1 // pred_region
      %32 = vsyncadd [#allocation6], 0
      %s33 = sshll.u32 %s3, 4
      %s34 = int_to_ptr.hbm [resolvable:$true] %s33
      %s35 = sshll.u32 [#allocation5], 4
      %s36 = int_to_ptr.vmem [resolvable:$true] %s35
      %41 = dma.hbm_to_vmem [thread:$0]  %s34, 16000, %s36, [#allocation6], 128, 128, 8
    $region17: #{rnn_decoder_forward.1} parent=1 // pred_fallthru
      _
    // Predicated region
    $region18: #{rnn_decoder_forward.1} parent=1 // pred_check
      _
    $region19: #{rnn_decoder_forward.1} parent=1 // pred_check_branch
      %43 = sbr.rel (0) target = $region21
    $region20: #{rnn_decoder_forward.1} parent=1 // pred_region
      _
    $region21: #{rnn_decoder_forward.1} parent=1 // pred_fallthru
      _
    // Predicated region
    $region22: #{rnn_decoder_forward.1} parent=1 // pred_check
      _
    $region23: #{rnn_decoder_forward.1} parent=1 // pred_check_branch
      %45 = sbr.rel (0) target = $region25
    $region24: #{rnn_decoder_forward.1} parent=1 // pred_region
      _
    $region25: #{rnn_decoder_forward.1} parent=1 // pred_fallthru
      _
    // Predicated region
    $region26: #{rnn_decoder_forward.1} parent=1 // pred_check
      _
    $region27: #{rnn_decoder_forward.1} parent=1 // pred_check_branch
      %47 = sbr.rel (0) target = $region29
    $region28: #{rnn_decoder_forward.1} parent=1 // pred_region
      %49 = dma.done [#allocation3], 1024
    $region29: #{rnn_decoder_forward.1} parent=1 // pred_fallthru
      _
    // Predicated region
    $region30: #{rnn_decoder_forward.1} parent=1 // pred_check
      _
    $region31: #{rnn_decoder_forward.1} parent=1 // pred_check_branch
      %51 = sbr.rel (0) target = $region33
    $region32: #{rnn_decoder_forward.1} parent=1 // pred_region
      %53 = dma.done [#allocation6], 16000
    $region33: #{rnn_decoder_forward.1} parent=1 // pred_fallthru
      _
    %v54 = vld [vmem:[%s0] sm:$0xff]
    %v55 = vld [vmem:[%s1] sm:$0xff]
    %v56 = vld [vmem:[%s1 + $0x8] sm:$0xff]
    %v57 = vld [vmem:[%s1 + $0x10] sm:$0xff]
    %v58 = vld [vmem:[%s1 + $0x18] sm:$0xff]
    %vm59 = vcmask 261120
    %v61 = vsel %vm59, 0.0, 0
    %63 = vmatpush.msra.mxu0 0.0
    %64 = vmatpush.msra.mxu0 0.0
    %65 = vmatpush.msra.mxu0 0.0
    %66 = vmatpush.msra.mxu0 0.0
    %67 = vmatpush.msra.mxu0 0.0
    %68 = vmatpush.msra.mxu0 0.0
    %69 = vmatpush.msra.mxu0 0.0
    %70 = vmatpush.msra.mxu0 0.0
    %71 = vmatpush.msra.mxu0 0.0
    %72 = vmatpush.msra.mxu0 0.0
    %73 = vmatpush.msra.mxu0 0.0
    %74 = vmatpush.msra.mxu0 0.0
    %75 = vmatpush.msra.mxu0 %v58
    %76 = vmatpush.msra.mxu0 %v57
    %77 = vmatpush.msra.mxu0 %v56
    %78 = vmatpush.msra.mxu0 %v55
    %79 = vmatmul.f32.gmra.mxu0 %v61
    %v80 = vpop.f32.mrf.mxu0
    %v81 = vadd.f32 0.0, %v80
    %82 = vdwg.mxu0
    %v83 = vadd.f32 %v54, %v81
    %v84 = vxor.u32 %v83, 2147483648
    %v85 = vmul.f32 %v84, 1.442695
    %v86 = vpow.pop %v85
    %v87 = vadd.f32 %v86, 1.0
    %v88 = vrcp.pop %v87
    %v89 = vmul.f32 %v87, %v88
    %v90 = vsub.f32 1.0, %v89
    %v91 = vmul.f32 %v88, %v90
    %v92 = vadd.f32 %v88, %v91
    %vm93 = vweird.f32 %v87
    %vm94 = vweird.f32 %v88
    %vm95 = vmor %vm93, %vm94
    %v96 = vsel %vm95, %v88, %v92
    %v97 = vand.u32 2147483647, %v87
    %vm98 = vcmp.eq.f32.partialorder %v97, 8.507059e+37
    %v99 = vand.u32 %v87, 2147483648
    %v100 = vor.u32 1.1754944e-38, %v99
    %v101 = vsel %vm98, %v100, %v96
    %v102 = vmul.f32 1.0, %v101
    %s103 = scalar_lea.vmem %s0, 64
    %v104 = vld [vmem:[%s103] sm:$0xff]
    %s105 = scalar_lea.vmem %s1, 32
    %v106 = vld [vmem:[%s105] sm:$0xff]
    %v107 = vld [vmem:[%s105 + $0x8] sm:$0xff]
    %v108 = vld [vmem:[%s105 + $0x10] sm:$0xff]
    %v109 = vld [vmem:[%s105 + $0x18] sm:$0xff]
    %110 = vmatpush.msra.mxu0 0.0
    %111 = vmatpush.msra.mxu0 0.0
    %112 = vmatpush.msra.mxu0 0.0
    %113 = vmatpush.msra.mxu0 0.0
    %114 = vmatpush.msra.mxu0 0.0
    %115 = vmatpush.msra.mxu0 0.0
    %116 = vmatpush.msra.mxu0 0.0
    %117 = vmatpush.msra.mxu0 0.0
    %118 = vmatpush.msra.mxu0 0.0
    %119 = vmatpush.msra.mxu0 0.0
    %120 = vmatpush.msra.mxu0 0.0
    %121 = vmatpush.msra.mxu0 0.0
    %122 = vmatpush.msra.mxu0 %v109
    %123 = vmatpush.msra.mxu0 %v108
    %124 = vmatpush.msra.mxu0 %v107
    %125 = vmatpush.msra.mxu0 %v106
    %126 = vmatmul.f32.gmra.mxu0 %v61
    %v127 = vpop.f32.mrf.mxu0
    %v128 = vadd.f32 0.0, %v127
    %129 = vdwg.mxu0
    %v130 = vadd.f32 %v104, %v128
    %v131 = vxor.u32 %v130, 2147483648
    %v132 = vmul.f32 %v131, 1.442695
    %v133 = vpow.pop %v132
    %v134 = vadd.f32 %v133, 1.0
    %v135 = vrcp.pop %v134
    %v136 = vmul.f32 %v134, %v135
    %v137 = vsub.f32 1.0, %v136
    %v138 = vmul.f32 %v135, %v137
    %v139 = vadd.f32 %v135, %v138
    %vm140 = vweird.f32 %v134
    %vm141 = vweird.f32 %v135
    %vm142 = vmor %vm140, %vm141
    %v143 = vsel %vm142, %v135, %v139
    %v144 = vand.u32 2147483647, %v134
    %vm145 = vcmp.eq.f32.partialorder %v144, 8.507059e+37
    %v146 = vand.u32 %v134, 2147483648
    %v147 = vor.u32 1.1754944e-38, %v146
    %v148 = vsel %vm145, %v147, %v143
    %v149 = vmul.f32 1.0, %v148
    %s150 = scalar_lea.vmem %s0, 128
    %v151 = vld [vmem:[%s150] sm:$0xff]
    %s152 = scalar_lea.vmem %s1, 64
    %v153 = vld [vmem:[%s152] sm:$0xff]
    %v154 = vld [vmem:[%s152 + $0x8] sm:$0xff]
    %v155 = vld [vmem:[%s152 + $0x10] sm:$0xff]
    %v156 = vld [vmem:[%s152 + $0x18] sm:$0xff]
    %157 = vmatpush.msra.mxu0 0.0
    %158 = vmatpush.msra.mxu0 0.0
    %159 = vmatpush.msra.mxu0 0.0
    %160 = vmatpush.msra.mxu0 0.0
    %161 = vmatpush.msra.mxu0 0.0
    %162 = vmatpush.msra.mxu0 0.0
    %163 = vmatpush.msra.mxu0 0.0
    %164 = vmatpush.msra.mxu0 0.0
    %165 = vmatpush.msra.mxu0 0.0
    %166 = vmatpush.msra.mxu0 0.0
    %167 = vmatpush.msra.mxu0 0.0
    %168 = vmatpush.msra.mxu0 0.0
    %169 = vmatpush.msra.mxu0 %v156
    %170 = vmatpush.msra.mxu0 %v155
    %171 = vmatpush.msra.mxu0 %v154
    %172 = vmatpush.msra.mxu0 %v153
    %173 = vmatmul.f32.gmra.mxu0 %v61
    %v174 = vpop.f32.mrf.mxu0
    %v175 = vadd.f32 0.0, %v174
    %176 = vdwg.mxu0
    %v177 = vadd.f32 %v151, %v175
    %v178 = vtanh.pop %v177
    %s179 = scalar_lea.vmem %s0, 192
    %v180 = vld [vmem:[%s179] sm:$0xff]
    %s181 = scalar_lea.vmem %s1, 96
    %v182 = vld [vmem:[%s181] sm:$0xff]
    %v183 = vld [vmem:[%s181 + $0x8] sm:$0xff]
    %v184 = vld [vmem:[%s181 + $0x10] sm:$0xff]
    %v185 = vld [vmem:[%s181 + $0x18] sm:$0xff]
    %186 = vmatpush.msra.mxu0 0.0
    %187 = vmatpush.msra.mxu0 0.0
    %188 = vmatpush.msra.mxu0 0.0
    %189 = vmatpush.msra.mxu0 0.0
    %190 = vmatpush.msra.mxu0 0.0
    %191 = vmatpush.msra.mxu0 0.0
    %192 = vmatpush.msra.mxu0 0.0
    %193 = vmatpush.msra.mxu0 0.0
    %194 = vmatpush.msra.mxu0 0.0
    %195 = vmatpush.msra.mxu0 0.0
    %196 = vmatpush.msra.mxu0 0.0
    %197 = vmatpush.msra.mxu0 0.0
    %198 = vmatpush.msra.mxu0 %v185
    %199 = vmatpush.msra.mxu0 %v184
    %200 = vmatpush.msra.mxu0 %v183
    %201 = vmatpush.msra.mxu0 %v182
    %202 = vmatmul.f32.gmra.mxu0 %v61
    %v203 = vpop.f32.mrf.mxu0
    %v204 = vadd.f32 0.0, %v203
    %205 = vdwg.mxu0
    %v206 = vadd.f32 %v180, %v204
    %v207 = vxor.u32 %v206, 2147483648
    %v208 = vmul.f32 %v207, 1.442695
    %v209 = vpow.pop %v208
    %v210 = vadd.f32 %v209, 1.0
    %v211 = vrcp.pop %v210
    %v212 = vmul.f32 %v210, %v211
    %v213 = vsub.f32 1.0, %v212
    %v214 = vmul.f32 %v211, %v213
    %v215 = vadd.f32 %v211, %v214
    %vm216 = vweird.f32 %v210
    %vm217 = vweird.f32 %v211
    %vm218 = vmor %vm216, %vm217
    %v219 = vsel %vm218, %v211, %v215
    %v220 = vand.u32 2147483647, %v210
    %vm221 = vcmp.eq.f32.partialorder %v220, 8.507059e+37
    %v222 = vand.u32 %v210, 2147483648
    %v223 = vor.u32 1.1754944e-38, %v222
    %v224 = vsel %vm221, %v223, %v219
    %v225 = vmul.f32 1.0, %v224
    %v226 = vmul.f32 %v149, 0.0
    %v227 = vmul.f32 %v102, %v178
    %v228 = vadd.f32 %v226, %v227
    %v229 = vtanh.pop %v228
    %v230 = vmul.f32 %v225, %v229
    %s231 = scalar_lea.vmem %s0, 8
    %v232 = vld [vmem:[%s231] sm:$0xff]
    %v234 = vsel %vm59, %v230, 0
    %236 = vmatpush.msra.mxu0 0.0
    %237 = vmatpush.msra.mxu0 0.0
    %238 = vmatpush.msra.mxu0 0.0
    %239 = vmatpush.msra.mxu0 0.0
    %240 = vmatpush.msra.mxu0 0.0
    %241 = vmatpush.msra.mxu0 0.0
    %242 = vmatpush.msra.mxu0 0.0
    %243 = vmatpush.msra.mxu0 0.0
    %244 = vmatpush.msra.mxu0 0.0
    %245 = vmatpush.msra.mxu0 0.0
    %246 = vmatpush.msra.mxu0 0.0
    %247 = vmatpush.msra.mxu0 0.0
    %248 = vmatpush.msra.mxu0 %v58
    %249 = vmatpush.msra.mxu0 %v57
    %250 = vmatpush.msra.mxu0 %v56
    %251 = vmatpush.msra.mxu0 %v55
    %252 = vmatmul.f32.gmra.mxu0 %v234
    %v253 = vpop.f32.mrf.mxu0
    %v254 = vadd.f32 0.0, %v253
    %255 = vdwg.mxu0
    %v256 = vadd.f32 %v232, %v254
    %v257 = vxor.u32 %v256, 2147483648
    %v258 = vmul.f32 %v257, 1.442695
    %v259 = vpow.pop %v258
    %v260 = vadd.f32 %v259, 1.0
    %v261 = vrcp.pop %v260
    %v262 = vmul.f32 %v260, %v261
    %v263 = vsub.f32 1.0, %v262
    %v264 = vmul.f32 %v261, %v263
    %v265 = vadd.f32 %v261, %v264
    %vm266 = vweird.f32 %v260
    %vm267 = vweird.f32 %v261
    %vm268 = vmor %vm266, %vm267
    %v269 = vsel %vm268, %v261, %v265
    %v270 = vand.u32 2147483647, %v260
    %vm271 = vcmp.eq.f32.partialorder %v270, 8.507059e+37
    %v272 = vand.u32 %v260, 2147483648
    %v273 = vor.u32 1.1754944e-38, %v272
    %v274 = vsel %vm271, %v273, %v269
    %v275 = vmul.f32 1.0, %v274
    %s276 = scalar_lea.vmem %s0, 72
    %v277 = vld [vmem:[%s276] sm:$0xff]
    %278 = vmatpush.msra.mxu0 0.0
    %279 = vmatpush.msra.mxu0 0.0
    %280 = vmatpush.msra.mxu0 0.0
    %281 = vmatpush.msra.mxu0 0.0
    %282 = vmatpush.msra.mxu0 0.0
    %283 = vmatpush.msra.mxu0 0.0
    %284 = vmatpush.msra.mxu0 0.0
    %285 = vmatpush.msra.mxu0 0.0
    %286 = vmatpush.msra.mxu0 0.0
    %287 = vmatpush.msra.mxu0 0.0
    %288 = vmatpush.msra.mxu0 0.0
    %289 = vmatpush.msra.mxu0 0.0
    %290 = vmatpush.msra.mxu0 %v109
    %291 = vmatpush.msra.mxu0 %v108
    %292 = vmatpush.msra.mxu0 %v107
    %293 = vmatpush.msra.mxu0 %v106
    %294 = vmatmul.f32.gmra.mxu0 %v234
    %v295 = vpop.f32.mrf.mxu0
    %v296 = vadd.f32 0.0, %v295
    %297 = vdwg.mxu0
    %v298 = vadd.f32 %v277, %v296
    %v299 = vxor.u32 %v298, 2147483648
    %v300 = vmul.f32 %v299, 1.442695
    %v301 = vpow.pop %v300
    %v302 = vadd.f32 %v301, 1.0
    %v303 = vrcp.pop %v302
    %v304 = vmul.f32 %v302, %v303
    %v305 = vsub.f32 1.0, %v304
    %v306 = vmul.f32 %v303, %v305
    %v307 = vadd.f32 %v303, %v306
    %vm308 = vweird.f32 %v302
    %vm309 = vweird.f32 %v303
    %vm310 = vmor %vm308, %vm309
    %v311 = vsel %vm310, %v303, %v307
    %v312 = vand.u32 2147483647, %v302
    %vm313 = vcmp.eq.f32.partialorder %v312, 8.507059e+37
    %v314 = vand.u32 %v302, 2147483648
    %v315 = vor.u32 1.1754944e-38, %v314
    %v316 = vsel %vm313, %v315, %v311
    %v317 = vmul.f32 1.0, %v316
    %s318 = scalar_lea.vmem %s0, 136
    %v319 = vld [vmem:[%s318] sm:$0xff]
    %320 = vmatpush.msra.mxu0 0.0
    %321 = vmatpush.msra.mxu0 0.0
    %322 = vmatpush.msra.mxu0 0.0
    %323 = vmatpush.msra.mxu0 0.0
    %324 = vmatpush.msra.mxu0 0.0
    %325 = vmatpush.msra.mxu0 0.0
    %326 = vmatpush.msra.mxu0 0.0
    %327 = vmatpush.msra.mxu0 0.0
    %328 = vmatpush.msra.mxu0 0.0
    %329 = vmatpush.msra.mxu0 0.0
    %330 = vmatpush.msra.mxu0 0.0
    %331 = vmatpush.msra.mxu0 0.0
    %332 = vmatpush.msra.mxu0 %v156
    %333 = vmatpush.msra.mxu0 %v155
    %334 = vmatpush.msra.mxu0 %v154
    %335 = vmatpush.msra.mxu0 %v153
    %336 = vmatmul.f32.gmra.mxu0 %v234
    %v337 = vpop.f32.mrf.mxu0
    %v338 = vadd.f32 0.0, %v337
    %339 = vdwg.mxu0
    %v340 = vadd.f32 %v319, %v338
    %v341 = vtanh.pop %v340
    %s342 = scalar_lea.vmem %s0, 200
    %v343 = vld [vmem:[%s342] sm:$0xff]
    %344 = vmatpush.msra.mxu0 0.0
    %345 = vmatpush.msra.mxu0 0.0
    %346 = vmatpush.msra.mxu0 0.0
    %347 = vmatpush.msra.mxu0 0.0
    %348 = vmatpush.msra.mxu0 0.0
    %349 = vmatpush.msra.mxu0 0.0
    %350 = vmatpush.msra.mxu0 0.0
    %351 = vmatpush.msra.mxu0 0.0
    %352 = vmatpush.msra.mxu0 0.0
    %353 = vmatpush.msra.mxu0 0.0
    %354 = vmatpush.msra.mxu0 0.0
    %355 = vmatpush.msra.mxu0 0.0
    %356 = vmatpush.msra.mxu0 %v185
    %357 = vmatpush.msra.mxu0 %v184
    %358 = vmatpush.msra.mxu0 %v183
    %359 = vmatpush.msra.mxu0 %v182
    %360 = vmatmul.f32.gmra.mxu0 %v234
    %v361 = vpop.f32.mrf.mxu0
    %v362 = vadd.f32 0.0, %v361
    %363 = vdwg.mxu0
    %v364 = vadd.f32 %v343, %v362
    %v365 = vxor.u32 %v364, 2147483648
    %v366 = vmul.f32 %v365, 1.442695
    %v367 = vpow.pop %v366
    %v368 = vadd.f32 %v367, 1.0
    %v369 = vrcp.pop %v368
    %v370 = vmul.f32 %v368, %v369
    %v371 = vsub.f32 1.0, %v370
    %v372 = vmul.f32 %v369, %v371
    %v373 = vadd.f32 %v369, %v372
    %vm374 = vweird.f32 %v368
    %vm375 = vweird.f32 %v369
    %vm376 = vmor %vm374, %vm375
    %v377 = vsel %vm376, %v369, %v373
    %v378 = vand.u32 2147483647, %v368
    %vm379 = vcmp.eq.f32.partialorder %v378, 8.507059e+37
    %v380 = vand.u32 %v368, 2147483648
    %v381 = vor.u32 1.1754944e-38, %v380
    %v382 = vsel %vm379, %v381, %v377
    %v383 = vmul.f32 1.0, %v382
    %v384 = vmul.f32 %v317, %v228
    %v385 = vmul.f32 %v275, %v341
    %v386 = vadd.f32 %v384, %v385
    %v387 = vtanh.pop %v386
    %v388 = vmul.f32 %v383, %v387
    %s389 = scalar_lea.vmem %s0, 16
    %v390 = vld [vmem:[%s389] sm:$0xff]
    %v392 = vsel %vm59, %v388, 0
    %394 = vmatpush.msra.mxu0 0.0
    %395 = vmatpush.msra.mxu0 0.0
    %396 = vmatpush.msra.mxu0 0.0
    %397 = vmatpush.msra.mxu0 0.0
    %398 = vmatpush.msra.mxu0 0.0
    %399 = vmatpush.msra.mxu0 0.0
    %400 = vmatpush.msra.mxu0 0.0
    %401 = vmatpush.msra.mxu0 0.0
    %402 = vmatpush.msra.mxu0 0.0
    %403 = vmatpush.msra.mxu0 0.0
    %404 = vmatpush.msra.mxu0 0.0
    %405 = vmatpush.msra.mxu0 0.0
    %406 = vmatpush.msra.mxu0 %v58
    %407 = vmatpush.msra.mxu0 %v57
    %408 = vmatpush.msra.mxu0 %v56
    %409 = vmatpush.msra.mxu0 %v55
    %410 = vmatmul.f32.gmra.mxu0 %v392
    %v411 = vpop.f32.mrf.mxu0
    %v412 = vadd.f32 0.0, %v411
    %413 = vdwg.mxu0
    %v414 = vadd.f32 %v390, %v412
    %v415 = vxor.u32 %v414, 2147483648
    %v416 = vmul.f32 %v415, 1.442695
    %v417 = vpow.pop %v416
    %v418 = vadd.f32 %v417, 1.0
    %v419 = vrcp.pop %v418
    %v420 = vmul.f32 %v418, %v419
    %v421 = vsub.f32 1.0, %v420
    %v422 = vmul.f32 %v419, %v421
    %v423 = vadd.f32 %v419, %v422
    %vm424 = vweird.f32 %v418
    %vm425 = vweird.f32 %v419
    %vm426 = vmor %vm424, %vm425
    %v427 = vsel %vm426, %v419, %v423
    %v428 = vand.u32 2147483647, %v418
    %vm429 = vcmp.eq.f32.partialorder %v428, 8.507059e+37
    %v430 = vand.u32 %v418, 2147483648
    %v431 = vor.u32 1.1754944e-38, %v430
    %v432 = vsel %vm429, %v431, %v427
    %v433 = vmul.f32 1.0, %v432
    %s434 = scalar_lea.vmem %s0, 80
    %v435 = vld [vmem:[%s434] sm:$0xff]
    %436 = vmatpush.msra.mxu0 0.0
    %437 = vmatpush.msra.mxu0 0.0
    %438 = vmatpush.msra.mxu0 0.0
    %439 = vmatpush.msra.mxu0 0.0
    %440 = vmatpush.msra.mxu0 0.0
    %441 = vmatpush.msra.mxu0 0.0
    %442 = vmatpush.msra.mxu0 0.0
    %443 = vmatpush.msra.mxu0 0.0
    %444 = vmatpush.msra.mxu0 0.0
    %445 = vmatpush.msra.mxu0 0.0
    %446 = vmatpush.msra.mxu0 0.0
    %447 = vmatpush.msra.mxu0 0.0
    %448 = vmatpush.msra.mxu0 %v109
    %449 = vmatpush.msra.mxu0 %v108
    %450 = vmatpush.msra.mxu0 %v107
    %451 = vmatpush.msra.mxu0 %v106
    %452 = vmatmul.f32.gmra.mxu0 %v392
    %v453 = vpop.f32.mrf.mxu0
    %v454 = vadd.f32 0.0, %v453
    %455 = vdwg.mxu0
    %v456 = vadd.f32 %v435, %v454
    %v457 = vxor.u32 %v456, 2147483648
    %v458 = vmul.f32 %v457, 1.442695
    %v459 = vpow.pop %v458
    %v460 = vadd.f32 %v459, 1.0
    %v461 = vrcp.pop %v460
    %v462 = vmul.f32 %v460, %v461
    %v463 = vsub.f32 1.0, %v462
    %v464 = vmul.f32 %v461, %v463
    %v465 = vadd.f32 %v461, %v464
    %vm466 = vweird.f32 %v460
    %vm467 = vweird.f32 %v461
    %vm468 = vmor %vm466, %vm467
    %v469 = vsel %vm468, %v461, %v465
    %v470 = vand.u32 2147483647, %v460
    %vm471 = vcmp.eq.f32.partialorder %v470, 8.507059e+37
    %v472 = vand.u32 %v460, 2147483648
    %v473 = vor.u32 1.1754944e-38, %v472
    %v474 = vsel %vm471, %v473, %v469
    %v475 = vmul.f32 1.0, %v474
    %s476 = scalar_lea.vmem %s0, 144
    %v477 = vld [vmem:[%s476] sm:$0xff]
    %478 = vmatpush.msra.mxu0 0.0
    %479 = vmatpush.msra.mxu0 0.0
    %480 = vmatpush.msra.mxu0 0.0
    %481 = vmatpush.msra.mxu0 0.0
    %482 = vmatpush.msra.mxu0 0.0
    %483 = vmatpush.msra.mxu0 0.0
    %484 = vmatpush.msra.mxu0 0.0
    %485 = vmatpush.msra.mxu0 0.0
    %486 = vmatpush.msra.mxu0 0.0
    %487 = vmatpush.msra.mxu0 0.0
    %488 = vmatpush.msra.mxu0 0.0
    %489 = vmatpush.msra.mxu0 0.0
    %490 = vmatpush.msra.mxu0 %v156
    %491 = vmatpush.msra.mxu0 %v155
    %492 = vmatpush.msra.mxu0 %v154
    %493 = vmatpush.msra.mxu0 %v153
    %494 = vmatmul.f32.gmra.mxu0 %v392
    %v495 = vpop.f32.mrf.mxu0
    %v496 = vadd.f32 0.0, %v495
    %497 = vdwg.mxu0
    %v498 = vadd.f32 %v477, %v496
    %v499 = vtanh.pop %v498
    %s500 = scalar_lea.vmem %s0, 208
    %v501 = vld [vmem:[%s500] sm:$0xff]
    %502 = vmatpush.msra.mxu0 0.0
    %503 = vmatpush.msra.mxu0 0.0
    %504 = vmatpush.msra.mxu0 0.0
    %505 = vmatpush.msra.mxu0 0.0
    %506 = vmatpush.msra.mxu0 0.0
    %507 = vmatpush.msra.mxu0 0.0
    %508 = vmatpush.msra.mxu0 0.0
    %509 = vmatpush.msra.mxu0 0.0
    %510 = vmatpush.msra.mxu0 0.0
    %511 = vmatpush.msra.mxu0 0.0
    %512 = vmatpush.msra.mxu0 0.0
    %513 = vmatpush.msra.mxu0 0.0
    %514 = vmatpush.msra.mxu0 %v185
    %515 = vmatpush.msra.mxu0 %v184
    %516 = vmatpush.msra.mxu0 %v183
    %517 = vmatpush.msra.mxu0 %v182
    %518 = vmatmul.f32.gmra.mxu0 %v392
    %v519 = vpop.f32.mrf.mxu0
    %v520 = vadd.f32 0.0, %v519
    %521 = vdwg.mxu0
    %v522 = vadd.f32 %v501, %v520
    %v523 = vxor.u32 %v522, 2147483648
    %v524 = vmul.f32 %v523, 1.442695
    %v525 = vpow.pop %v524
    %v526 = vadd.f32 %v525, 1.0
    %v527 = vrcp.pop %v526
    %v528 = vmul.f32 %v526, %v527
    %v529 = vsub.f32 1.0, %v528
    %v530 = vmul.f32 %v527, %v529
    %v531 = vadd.f32 %v527, %v530
    %vm532 = vweird.f32 %v526
    %vm533 = vweird.f32 %v527
    %vm534 = vmor %vm532, %vm533
    %v535 = vsel %vm534, %v527, %v531
    %v536 = vand.u32 2147483647, %v526
    %vm537 = vcmp.eq.f32.partialorder %v536, 8.507059e+37
    %v538 = vand.u32 %v526, 2147483648
    %v539 = vor.u32 1.1754944e-38, %v538
    %v540 = vsel %vm537, %v539, %v535
    %v541 = vmul.f32 1.0, %v540
    %v542 = vmul.f32 %v475, %v386
    %v543 = vmul.f32 %v433, %v499
    %v544 = vadd.f32 %v542, %v543
    %v545 = vtanh.pop %v544
    %v546 = vmul.f32 %v541, %v545
    %s547 = scalar_lea.vmem %s0, 24
    %v548 = vld [vmem:[%s547] sm:$0xff]
    %v550 = vsel %vm59, %v546, 0
    %552 = vmatpush.msra.mxu0 0.0
    %553 = vmatpush.msra.mxu0 0.0
    %554 = vmatpush.msra.mxu0 0.0
    %555 = vmatpush.msra.mxu0 0.0
    %556 = vmatpush.msra.mxu0 0.0
    %557 = vmatpush.msra.mxu0 0.0
    %558 = vmatpush.msra.mxu0 0.0
    %559 = vmatpush.msra.mxu0 0.0
    %560 = vmatpush.msra.mxu0 0.0
    %561 = vmatpush.msra.mxu0 0.0
    %562 = vmatpush.msra.mxu0 0.0
    %563 = vmatpush.msra.mxu0 0.0
    %564 = vmatpush.msra.mxu0 %v58
    %565 = vmatpush.msra.mxu0 %v57
    %566 = vmatpush.msra.mxu0 %v56
    %567 = vmatpush.msra.mxu0 %v55
    %568 = vmatmul.f32.gmra.mxu0 %v550
    %v569 = vpop.f32.mrf.mxu0
    %v570 = vadd.f32 0.0, %v569
    %571 = vdwg.mxu0
    %v572 = vadd.f32 %v548, %v570
    %v573 = vxor.u32 %v572, 2147483648
    %v574 = vmul.f32 %v573, 1.442695
    %v575 = vpow.pop %v574
    %v576 = vadd.f32 %v575, 1.0
    %v577 = vrcp.pop %v576
    %v578 = vmul.f32 %v576, %v577
    %v579 = vsub.f32 1.0, %v578
    %v580 = vmul.f32 %v577, %v579
    %v581 = vadd.f32 %v577, %v580
    %vm582 = vweird.f32 %v576
    %vm583 = vweird.f32 %v577
    %vm584 = vmor %vm582, %vm583
    %v585 = vsel %vm584, %v577, %v581
    %v586 = vand.u32 2147483647, %v576
    %vm587 = vcmp.eq.f32.partialorder %v586, 8.507059e+37
    %v588 = vand.u32 %v576, 2147483648
    %v589 = vor.u32 1.1754944e-38, %v588
    %v590 = vsel %vm587, %v589, %v585
    %v591 = vmul.f32 1.0, %v590
    %s592 = scalar_lea.vmem %s0, 88
    %v593 = vld [vmem:[%s592] sm:$0xff]
    %594 = vmatpush.msra.mxu0 0.0
    %595 = vmatpush.msra.mxu0 0.0
    %596 = vmatpush.msra.mxu0 0.0
    %597 = vmatpush.msra.mxu0 0.0
    %598 = vmatpush.msra.mxu0 0.0
    %599 = vmatpush.msra.mxu0 0.0
    %600 = vmatpush.msra.mxu0 0.0
    %601 = vmatpush.msra.mxu0 0.0
    %602 = vmatpush.msra.mxu0 0.0
    %603 = vmatpush.msra.mxu0 0.0
    %604 = vmatpush.msra.mxu0 0.0
    %605 = vmatpush.msra.mxu0 0.0
    %606 = vmatpush.msra.mxu0 %v109
    %607 = vmatpush.msra.mxu0 %v108
    %608 = vmatpush.msra.mxu0 %v107
    %609 = vmatpush.msra.mxu0 %v106
    %610 = vmatmul.f32.gmra.mxu0 %v550
    %v611 = vpop.f32.mrf.mxu0
    %v612 = vadd.f32 0.0, %v611
    %613 = vdwg.mxu0
    %v614 = vadd.f32 %v593, %v612
    %v615 = vxor.u32 %v614, 2147483648
    %v616 = vmul.f32 %v615, 1.442695
    %v617 = vpow.pop %v616
    %v618 = vadd.f32 %v617, 1.0
    %v619 = vrcp.pop %v618
    %v620 = vmul.f32 %v618, %v619
    %v621 = vsub.f32 1.0, %v620
    %v622 = vmul.f32 %v619, %v621
    %v623 = vadd.f32 %v619, %v622
    %vm624 = vweird.f32 %v618
    %vm625 = vweird.f32 %v619
    %vm626 = vmor %vm624, %vm625
    %v627 = vsel %vm626, %v619, %v623
    %v628 = vand.u32 2147483647, %v618
    %vm629 = vcmp.eq.f32.partialorder %v628, 8.507059e+37
    %v630 = vand.u32 %v618, 2147483648
    %v631 = vor.u32 1.1754944e-38, %v630
    %v632 = vsel %vm629, %v631, %v627
    %v633 = vmul.f32 1.0, %v632
    %s634 = scalar_lea.vmem %s0, 152
    %v635 = vld [vmem:[%s634] sm:$0xff]
    %636 = vmatpush.msra.mxu0 0.0
    %637 = vmatpush.msra.mxu0 0.0
    %638 = vmatpush.msra.mxu0 0.0
    %639 = vmatpush.msra.mxu0 0.0
    %640 = vmatpush.msra.mxu0 0.0
    %641 = vmatpush.msra.mxu0 0.0
    %642 = vmatpush.msra.mxu0 0.0
    %643 = vmatpush.msra.mxu0 0.0
    %644 = vmatpush.msra.mxu0 0.0
    %645 = vmatpush.msra.mxu0 0.0
    %646 = vmatpush.msra.mxu0 0.0
    %647 = vmatpush.msra.mxu0 0.0
    %648 = vmatpush.msra.mxu0 %v156
    %649 = vmatpush.msra.mxu0 %v155
    %650 = vmatpush.msra.mxu0 %v154
    %651 = vmatpush.msra.mxu0 %v153
    %652 = vmatmul.f32.gmra.mxu0 %v550
    %v653 = vpop.f32.mrf.mxu0
    %v654 = vadd.f32 0.0, %v653
    %655 = vdwg.mxu0
    %v656 = vadd.f32 %v635, %v654
    %v657 = vtanh.pop %v656
    %s658 = scalar_lea.vmem %s0, 216
    %v659 = vld [vmem:[%s658] sm:$0xff]
    %660 = vmatpush.msra.mxu0 0.0
    %661 = vmatpush.msra.mxu0 0.0
    %662 = vmatpush.msra.mxu0 0.0
    %663 = vmatpush.msra.mxu0 0.0
    %664 = vmatpush.msra.mxu0 0.0
    %665 = vmatpush.msra.mxu0 0.0
    %666 = vmatpush.msra.mxu0 0.0
    %667 = vmatpush.msra.mxu0 0.0
    %668 = vmatpush.msra.mxu0 0.0
    %669 = vmatpush.msra.mxu0 0.0
    %670 = vmatpush.msra.mxu0 0.0
    %671 = vmatpush.msra.mxu0 0.0
    %672 = vmatpush.msra.mxu0 %v185
    %673 = vmatpush.msra.mxu0 %v184
    %674 = vmatpush.msra.mxu0 %v183
    %675 = vmatpush.msra.mxu0 %v182
    %676 = vmatmul.f32.gmra.mxu0 %v550
    %v677 = vpop.f32.mrf.mxu0
    %v678 = vadd.f32 0.0, %v677
    %679 = vdwg.mxu0
    %v680 = vadd.f32 %v659, %v678
    %v681 = vxor.u32 %v680, 2147483648
    %v682 = vmul.f32 %v681, 1.442695
    %v683 = vpow.pop %v682
    %v684 = vadd.f32 %v683, 1.0
    %v685 = vrcp.pop %v684
    %v686 = vmul.f32 %v684, %v685
    %v687 = vsub.f32 1.0, %v686
    %v688 = vmul.f32 %v685, %v687
    %v689 = vadd.f32 %v685, %v688
    %vm690 = vweird.f32 %v684
    %vm691 = vweird.f32 %v685
    %vm692 = vmor %vm690, %vm691
    %v693 = vsel %vm692, %v685, %v689
    %v694 = vand.u32 2147483647, %v684
    %vm695 = vcmp.eq.f32.partialorder %v694, 8.507059e+37
    %v696 = vand.u32 %v684, 2147483648
    %v697 = vor.u32 1.1754944e-38, %v696
    %v698 = vsel %vm695, %v697, %v693
    %v699 = vmul.f32 1.0, %v698
    %v700 = vmul.f32 %v633, %v544
    %v701 = vmul.f32 %v591, %v657
    %v702 = vadd.f32 %v700, %v701
    %v703 = vtanh.pop %v702
    %v704 = vmul.f32 %v699, %v703
    %s705 = scalar_lea.vmem %s0, 32
    %v706 = vld [vmem:[%s705] sm:$0xff]
    %v708 = vsel %vm59, %v704, 0
    %710 = vmatpush.msra.mxu0 0.0
    %711 = vmatpush.msra.mxu0 0.0
    %712 = vmatpush.msra.mxu0 0.0
    %713 = vmatpush.msra.mxu0 0.0
    %714 = vmatpush.msra.mxu0 0.0
    %715 = vmatpush.msra.mxu0 0.0
    %716 = vmatpush.msra.mxu0 0.0
    %717 = vmatpush.msra.mxu0 0.0
    %718 = vmatpush.msra.mxu0 0.0
    %719 = vmatpush.msra.mxu0 0.0
    %720 = vmatpush.msra.mxu0 0.0
    %721 = vmatpush.msra.mxu0 0.0
    %722 = vmatpush.msra.mxu0 %v58
    %723 = vmatpush.msra.mxu0 %v57
    %724 = vmatpush.msra.mxu0 %v56
    %725 = vmatpush.msra.mxu0 %v55
    %726 = vmatmul.f32.gmra.mxu0 %v708
    %v727 = vpop.f32.mrf.mxu0
    %v728 = vadd.f32 0.0, %v727
    %729 = vdwg.mxu0
    %v730 = vadd.f32 %v706, %v728
    %v731 = vxor.u32 %v730, 2147483648
    %v732 = vmul.f32 %v731, 1.442695
    %v733 = vpow.pop %v732
    %v734 = vadd.f32 %v733, 1.0
    %v735 = vrcp.pop %v734
    %v736 = vmul.f32 %v734, %v735
    %v737 = vsub.f32 1.0, %v736
    %v738 = vmul.f32 %v735, %v737
    %v739 = vadd.f32 %v735, %v738
    %vm740 = vweird.f32 %v734
    %vm741 = vweird.f32 %v735
    %vm742 = vmor %vm740, %vm741
    %v743 = vsel %vm742, %v735, %v739
    %v744 = vand.u32 2147483647, %v734
    %vm745 = vcmp.eq.f32.partialorder %v744, 8.507059e+37
    %v746 = vand.u32 %v734, 2147483648
    %v747 = vor.u32 1.1754944e-38, %v746
    %v748 = vsel %vm745, %v747, %v743
    %v749 = vmul.f32 1.0, %v748
    %s750 = scalar_lea.vmem %s0, 96
    %v751 = vld [vmem:[%s750] sm:$0xff]
    %752 = vmatpush.msra.mxu0 0.0
    %753 = vmatpush.msra.mxu0 0.0
    %754 = vmatpush.msra.mxu0 0.0
    %755 = vmatpush.msra.mxu0 0.0
    %756 = vmatpush.msra.mxu0 0.0
    %757 = vmatpush.msra.mxu0 0.0
    %758 = vmatpush.msra.mxu0 0.0
    %759 = vmatpush.msra.mxu0 0.0
    %760 = vmatpush.msra.mxu0 0.0
    %761 = vmatpush.msra.mxu0 0.0
    %762 = vmatpush.msra.mxu0 0.0
    %763 = vmatpush.msra.mxu0 0.0
    %764 = vmatpush.msra.mxu0 %v109
    %765 = vmatpush.msra.mxu0 %v108
    %766 = vmatpush.msra.mxu0 %v107
    %767 = vmatpush.msra.mxu0 %v106
    %768 = vmatmul.f32.gmra.mxu0 %v708
    %v769 = vpop.f32.mrf.mxu0
    %v770 = vadd.f32 0.0, %v769
    %771 = vdwg.mxu0
    %v772 = vadd.f32 %v751, %v770
    %v773 = vxor.u32 %v772, 2147483648
    %v774 = vmul.f32 %v773, 1.442695
    %v775 = vpow.pop %v774
    %v776 = vadd.f32 %v775, 1.0
    %v777 = vrcp.pop %v776
    %v778 = vmul.f32 %v776, %v777
    %v779 = vsub.f32 1.0, %v778
    %v780 = vmul.f32 %v777, %v779
    %v781 = vadd.f32 %v777, %v780
    %vm782 = vweird.f32 %v776
    %vm783 = vweird.f32 %v777
    %vm784 = vmor %vm782, %vm783
    %v785 = vsel %vm784, %v777, %v781
    %v786 = vand.u32 2147483647, %v776
    %vm787 = vcmp.eq.f32.partialorder %v786, 8.507059e+37
    %v788 = vand.u32 %v776, 2147483648
    %v789 = vor.u32 1.1754944e-38, %v788
    %v790 = vsel %vm787, %v789, %v785
    %v791 = vmul.f32 1.0, %v790
    %s792 = scalar_lea.vmem %s0, 160
    %v793 = vld [vmem:[%s792] sm:$0xff]
    %794 = vmatpush.msra.mxu0 0.0
    %795 = vmatpush.msra.mxu0 0.0
    %796 = vmatpush.msra.mxu0 0.0
    %797 = vmatpush.msra.mxu0 0.0
    %798 = vmatpush.msra.mxu0 0.0
    %799 = vmatpush.msra.mxu0 0.0
    %800 = vmatpush.msra.mxu0 0.0
    %801 = vmatpush.msra.mxu0 0.0
    %802 = vmatpush.msra.mxu0 0.0
    %803 = vmatpush.msra.mxu0 0.0
    %804 = vmatpush.msra.mxu0 0.0
    %805 = vmatpush.msra.mxu0 0.0
    %806 = vmatpush.msra.mxu0 %v156
    %807 = vmatpush.msra.mxu0 %v155
    %808 = vmatpush.msra.mxu0 %v154
    %809 = vmatpush.msra.mxu0 %v153
    %810 = vmatmul.f32.gmra.mxu0 %v708
    %v811 = vpop.f32.mrf.mxu0
    %v812 = vadd.f32 0.0, %v811
    %813 = vdwg.mxu0
    %v814 = vadd.f32 %v793, %v812
    %v815 = vtanh.pop %v814
    %s816 = scalar_lea.vmem %s0, 224
    %v817 = vld [vmem:[%s816] sm:$0xff]
    %818 = vmatpush.msra.mxu0 0.0
    %819 = vmatpush.msra.mxu0 0.0
    %820 = vmatpush.msra.mxu0 0.0
    %821 = vmatpush.msra.mxu0 0.0
    %822 = vmatpush.msra.mxu0 0.0
    %823 = vmatpush.msra.mxu0 0.0
    %824 = vmatpush.msra.mxu0 0.0
    %825 = vmatpush.msra.mxu0 0.0
    %826 = vmatpush.msra.mxu0 0.0
    %827 = vmatpush.msra.mxu0 0.0
    %828 = vmatpush.msra.mxu0 0.0
    %829 = vmatpush.msra.mxu0 0.0
    %830 = vmatpush.msra.mxu0 %v185
    %831 = vmatpush.msra.mxu0 %v184
    %832 = vmatpush.msra.mxu0 %v183
    %833 = vmatpush.msra.mxu0 %v182
    %834 = vmatmul.f32.gmra.mxu0 %v708
    %v835 = vpop.f32.mrf.mxu0
    %v836 = vadd.f32 0.0, %v835
    %837 = vdwg.mxu0
    %v838 = vadd.f32 %v817, %v836
    %v839 = vxor.u32 %v838, 2147483648
    %v840 = vmul.f32 %v839, 1.442695
    %v841 = vpow.pop %v840
    %v842 = vadd.f32 %v841, 1.0
    %v843 = vrcp.pop %v842
    %v844 = vmul.f32 %v842, %v843
    %v845 = vsub.f32 1.0, %v844
    %v846 = vmul.f32 %v843, %v845
    %v847 = vadd.f32 %v843, %v846
    %vm848 = vweird.f32 %v842
    %vm849 = vweird.f32 %v843
    %vm850 = vmor %vm848, %vm849
    %v851 = vsel %vm850, %v843, %v847
    %v852 = vand.u32 2147483647, %v842
    %vm853 = vcmp.eq.f32.partialorder %v852, 8.507059e+37
    %v854 = vand.u32 %v842, 2147483648
    %v855 = vor.u32 1.1754944e-38, %v854
    %v856 = vsel %vm853, %v855, %v851
    %v857 = vmul.f32 1.0, %v856
    %v858 = vmul.f32 %v791, %v702
    %v859 = vmul.f32 %v749, %v815
    %v860 = vadd.f32 %v858, %v859
    %v861 = vtanh.pop %v860
    %v862 = vmul.f32 %v857, %v861
    %s863 = scalar_lea.vmem %s0, 40
    %v864 = vld [vmem:[%s863] sm:$0xff]
    %v866 = vsel %vm59, %v862, 0
    %868 = vmatpush.msra.mxu0 0.0
    %869 = vmatpush.msra.mxu0 0.0
    %870 = vmatpush.msra.mxu0 0.0
    %871 = vmatpush.msra.mxu0 0.0
    %872 = vmatpush.msra.mxu0 0.0
    %873 = vmatpush.msra.mxu0 0.0
    %874 = vmatpush.msra.mxu0 0.0
    %875 = vmatpush.msra.mxu0 0.0
    %876 = vmatpush.msra.mxu0 0.0
    %877 = vmatpush.msra.mxu0 0.0
    %878 = vmatpush.msra.mxu0 0.0
    %879 = vmatpush.msra.mxu0 0.0
    %880 = vmatpush.msra.mxu0 %v58
    %881 = vmatpush.msra.mxu0 %v57
    %882 = vmatpush.msra.mxu0 %v56
    %883 = vmatpush.msra.mxu0 %v55
    %884 = vmatmul.f32.gmra.mxu0 %v866
    %v885 = vpop.f32.mrf.mxu0
    %v886 = vadd.f32 0.0, %v885
    %887 = vdwg.mxu0
    %v888 = vadd.f32 %v864, %v886
    %v889 = vxor.u32 %v888, 2147483648
    %v890 = vmul.f32 %v889, 1.442695
    %v891 = vpow.pop %v890
    %v892 = vadd.f32 %v891, 1.0
    %v893 = vrcp.pop %v892
    %v894 = vmul.f32 %v892, %v893
    %v895 = vsub.f32 1.0, %v894
    %v896 = vmul.f32 %v893, %v895
    %v897 = vadd.f32 %v893, %v896
    %vm898 = vweird.f32 %v892
    %vm899 = vweird.f32 %v893
    %vm900 = vmor %vm898, %vm899
    %v901 = vsel %vm900, %v893, %v897
    %v902 = vand.u32 2147483647, %v892
    %vm903 = vcmp.eq.f32.partialorder %v902, 8.507059e+37
    %v904 = vand.u32 %v892, 2147483648
    %v905 = vor.u32 1.1754944e-38, %v904
    %v906 = vsel %vm903, %v905, %v901
    %v907 = vmul.f32 1.0, %v906
    %s908 = scalar_lea.vmem %s0, 104
    %v909 = vld [vmem:[%s908] sm:$0xff]
    %910 = vmatpush.msra.mxu0 0.0
    %911 = vmatpush.msra.mxu0 0.0
    %912 = vmatpush.msra.mxu0 0.0
    %913 = vmatpush.msra.mxu0 0.0
    %914 = vmatpush.msra.mxu0 0.0
    %915 = vmatpush.msra.mxu0 0.0
    %916 = vmatpush.msra.mxu0 0.0
    %917 = vmatpush.msra.mxu0 0.0
    %918 = vmatpush.msra.mxu0 0.0
    %919 = vmatpush.msra.mxu0 0.0
    %920 = vmatpush.msra.mxu0 0.0
    %921 = vmatpush.msra.mxu0 0.0
    %922 = vmatpush.msra.mxu0 %v109
    %923 = vmatpush.msra.mxu0 %v108
    %924 = vmatpush.msra.mxu0 %v107
    %925 = vmatpush.msra.mxu0 %v106
    %926 = vmatmul.f32.gmra.mxu0 %v866
    %v927 = vpop.f32.mrf.mxu0
    %v928 = vadd.f32 0.0, %v927
    %929 = vdwg.mxu0
    %v930 = vadd.f32 %v909, %v928
    %v931 = vxor.u32 %v930, 2147483648
    %v932 = vmul.f32 %v931, 1.442695
    %v933 = vpow.pop %v932
    %v934 = vadd.f32 %v933, 1.0
    %v935 = vrcp.pop %v934
    %v936 = vmul.f32 %v934, %v935
    %v937 = vsub.f32 1.0, %v936
    %v938 = vmul.f32 %v935, %v937
    %v939 = vadd.f32 %v935, %v938
    %vm940 = vweird.f32 %v934
    %vm941 = vweird.f32 %v935
    %vm942 = vmor %vm940, %vm941
    %v943 = vsel %vm942, %v935, %v939
    %v944 = vand.u32 2147483647, %v934
    %vm945 = vcmp.eq.f32.partialorder %v944, 8.507059e+37
    %v946 = vand.u32 %v934, 2147483648
    %v947 = vor.u32 1.1754944e-38, %v946
    %v948 = vsel %vm945, %v947, %v943
    %v949 = vmul.f32 1.0, %v948
    %s950 = scalar_lea.vmem %s0, 168
    %v951 = vld [vmem:[%s950] sm:$0xff]
    %952 = vmatpush.msra.mxu0 0.0
    %953 = vmatpush.msra.mxu0 0.0
    %954 = vmatpush.msra.mxu0 0.0
    %955 = vmatpush.msra.mxu0 0.0
    %956 = vmatpush.msra.mxu0 0.0
    %957 = vmatpush.msra.mxu0 0.0
    %958 = vmatpush.msra.mxu0 0.0
    %959 = vmatpush.msra.mxu0 0.0
    %960 = vmatpush.msra.mxu0 0.0
    %961 = vmatpush.msra.mxu0 0.0
    %962 = vmatpush.msra.mxu0 0.0
    %963 = vmatpush.msra.mxu0 0.0
    %964 = vmatpush.msra.mxu0 %v156
    %965 = vmatpush.msra.mxu0 %v155
    %966 = vmatpush.msra.mxu0 %v154
    %967 = vmatpush.msra.mxu0 %v153
    %968 = vmatmul.f32.gmra.mxu0 %v866
    %v969 = vpop.f32.mrf.mxu0
    %v970 = vadd.f32 0.0, %v969
    %971 = vdwg.mxu0
    %v972 = vadd.f32 %v951, %v970
    %v973 = vtanh.pop %v972
    %s974 = scalar_lea.vmem %s0, 232
    %v975 = vld [vmem:[%s974] sm:$0xff]
    %976 = vmatpush.msra.mxu0 0.0
    %977 = vmatpush.msra.mxu0 0.0
    %978 = vmatpush.msra.mxu0 0.0
    %979 = vmatpush.msra.mxu0 0.0
    %980 = vmatpush.msra.mxu0 0.0
    %981 = vmatpush.msra.mxu0 0.0
    %982 = vmatpush.msra.mxu0 0.0
    %983 = vmatpush.msra.mxu0 0.0
    %984 = vmatpush.msra.mxu0 0.0
    %985 = vmatpush.msra.mxu0 0.0
    %986 = vmatpush.msra.mxu0 0.0
    %987 = vmatpush.msra.mxu0 0.0
    %988 = vmatpush.msra.mxu0 %v185
    %989 = vmatpush.msra.mxu0 %v184
    %990 = vmatpush.msra.mxu0 %v183
    %991 = vmatpush.msra.mxu0 %v182
    %992 = vmatmul.f32.gmra.mxu0 %v866
    %v993 = vpop.f32.mrf.mxu0
    %v994 = vadd.f32 0.0, %v993
    %995 = vdwg.mxu0
    %v996 = vadd.f32 %v975, %v994
    %v997 = vxor.u32 %v996, 2147483648
    %v998 = vmul.f32 %v997, 1.442695
    %v999 = vpow.pop %v998
    %v1000 = vadd.f32 %v999, 1.0
    %v1001 = vrcp.pop %v1000
    %v1002 = vmul.f32 %v1000, %v1001
    %v1003 = vsub.f32 1.0, %v1002
    %v1004 = vmul.f32 %v1001, %v1003
    %v1005 = vadd.f32 %v1001, %v1004
    %vm1006 = vweird.f32 %v1000
    %vm1007 = vweird.f32 %v1001
    %vm1008 = vmor %vm1006, %vm1007
    %v1009 = vsel %vm1008, %v1001, %v1005
    %v1010 = vand.u32 2147483647, %v1000
    %vm1011 = vcmp.eq.f32.partialorder %v1010, 8.507059e+37
    %v1012 = vand.u32 %v1000, 2147483648
    %v1013 = vor.u32 1.1754944e-38, %v1012
    %v1014 = vsel %vm1011, %v1013, %v1009
    %v1015 = vmul.f32 1.0, %v1014
    %v1016 = vmul.f32 %v949, %v860
    %v1017 = vmul.f32 %v907, %v973
    %v1018 = vadd.f32 %v1016, %v1017
    %v1019 = vtanh.pop %v1018
    %v1020 = vmul.f32 %v1015, %v1019
    %s1021 = scalar_lea.vmem %s0, 48
    %v1022 = vld [vmem:[%s1021] sm:$0xff]
    %v1024 = vsel %vm59, %v1020, 0
    %1026 = vmatpush.msra.mxu0 0.0
    %1027 = vmatpush.msra.mxu0 0.0
    %1028 = vmatpush.msra.mxu0 0.0
    %1029 = vmatpush.msra.mxu0 0.0
    %1030 = vmatpush.msra.mxu0 0.0
    %1031 = vmatpush.msra.mxu0 0.0
    %1032 = vmatpush.msra.mxu0 0.0
    %1033 = vmatpush.msra.mxu0 0.0
    %1034 = vmatpush.msra.mxu0 0.0
    %1035 = vmatpush.msra.mxu0 0.0
    %1036 = vmatpush.msra.mxu0 0.0
    %1037 = vmatpush.msra.mxu0 0.0
    %1038 = vmatpush.msra.mxu0 %v58
    %1039 = vmatpush.msra.mxu0 %v57
    %1040 = vmatpush.msra.mxu0 %v56
    %1041 = vmatpush.msra.mxu0 %v55
    %1042 = vmatmul.f32.gmra.mxu0 %v1024
    %v1043 = vpop.f32.mrf.mxu0
    %v1044 = vadd.f32 0.0, %v1043
    %1045 = vdwg.mxu0
    %v1046 = vadd.f32 %v1022, %v1044
    %v1047 = vxor.u32 %v1046, 2147483648
    %v1048 = vmul.f32 %v1047, 1.442695
    %v1049 = vpow.pop %v1048
    %v1050 = vadd.f32 %v1049, 1.0
    %v1051 = vrcp.pop %v1050
    %v1052 = vmul.f32 %v1050, %v1051
    %v1053 = vsub.f32 1.0, %v1052
    %v1054 = vmul.f32 %v1051, %v1053
    %v1055 = vadd.f32 %v1051, %v1054
    %vm1056 = vweird.f32 %v1050
    %vm1057 = vweird.f32 %v1051
    %vm1058 = vmor %vm1056, %vm1057
    %v1059 = vsel %vm1058, %v1051, %v1055
    %v1060 = vand.u32 2147483647, %v1050
    %vm1061 = vcmp.eq.f32.partialorder %v1060, 8.507059e+37
    %v1062 = vand.u32 %v1050, 2147483648
    %v1063 = vor.u32 1.1754944e-38, %v1062
    %v1064 = vsel %vm1061, %v1063, %v1059
    %v1065 = vmul.f32 1.0, %v1064
    %s1066 = scalar_lea.vmem %s0, 112
    %v1067 = vld [vmem:[%s1066] sm:$0xff]
    %1068 = vmatpush.msra.mxu0 0.0
    %1069 = vmatpush.msra.mxu0 0.0
    %1070 = vmatpush.msra.mxu0 0.0
    %1071 = vmatpush.msra.mxu0 0.0
    %1072 = vmatpush.msra.mxu0 0.0
    %1073 = vmatpush.msra.mxu0 0.0
    %1074 = vmatpush.msra.mxu0 0.0
    %1075 = vmatpush.msra.mxu0 0.0
    %1076 = vmatpush.msra.mxu0 0.0
    %1077 = vmatpush.msra.mxu0 0.0
    %1078 = vmatpush.msra.mxu0 0.0
    %1079 = vmatpush.msra.mxu0 0.0
    %1080 = vmatpush.msra.mxu0 %v109
    %1081 = vmatpush.msra.mxu0 %v108
    %1082 = vmatpush.msra.mxu0 %v107
    %1083 = vmatpush.msra.mxu0 %v106
    %1084 = vmatmul.f32.gmra.mxu0 %v1024
    %v1085 = vpop.f32.mrf.mxu0
    %v1086 = vadd.f32 0.0, %v1085
    %1087 = vdwg.mxu0
    %v1088 = vadd.f32 %v1067, %v1086
    %v1089 = vxor.u32 %v1088, 2147483648
    %v1090 = vmul.f32 %v1089, 1.442695
    %v1091 = vpow.pop %v1090
    %v1092 = vadd.f32 %v1091, 1.0
    %v1093 = vrcp.pop %v1092
    %v1094 = vmul.f32 %v1092, %v1093
    %v1095 = vsub.f32 1.0, %v1094
    %v1096 = vmul.f32 %v1093, %v1095
    %v1097 = vadd.f32 %v1093, %v1096
    %vm1098 = vweird.f32 %v1092
    %vm1099 = vweird.f32 %v1093
    %vm1100 = vmor %vm1098, %vm1099
    %v1101 = vsel %vm1100, %v1093, %v1097
    %v1102 = vand.u32 2147483647, %v1092
    %vm1103 = vcmp.eq.f32.partialorder %v1102, 8.507059e+37
    %v1104 = vand.u32 %v1092, 2147483648
    %v1105 = vor.u32 1.1754944e-38, %v1104
    %v1106 = vsel %vm1103, %v1105, %v1101
    %v1107 = vmul.f32 1.0, %v1106
    %s1108 = scalar_lea.vmem %s0, 176
    %v1109 = vld [vmem:[%s1108] sm:$0xff]
    %1110 = vmatpush.msra.mxu0 0.0
    %1111 = vmatpush.msra.mxu0 0.0
    %1112 = vmatpush.msra.mxu0 0.0
    %1113 = vmatpush.msra.mxu0 0.0
    %1114 = vmatpush.msra.mxu0 0.0
    %1115 = vmatpush.msra.mxu0 0.0
    %1116 = vmatpush.msra.mxu0 0.0
    %1117 = vmatpush.msra.mxu0 0.0
    %1118 = vmatpush.msra.mxu0 0.0
    %1119 = vmatpush.msra.mxu0 0.0
    %1120 = vmatpush.msra.mxu0 0.0
    %1121 = vmatpush.msra.mxu0 0.0
    %1122 = vmatpush.msra.mxu0 %v156
    %1123 = vmatpush.msra.mxu0 %v155
    %1124 = vmatpush.msra.mxu0 %v154
    %1125 = vmatpush.msra.mxu0 %v153
    %1126 = vmatmul.f32.gmra.mxu0 %v1024
    %v1127 = vpop.f32.mrf.mxu0
    %v1128 = vadd.f32 0.0, %v1127
    %1129 = vdwg.mxu0
    %v1130 = vadd.f32 %v1109, %v1128
    %v1131 = vtanh.pop %v1130
    %s1132 = scalar_lea.vmem %s0, 240
    %v1133 = vld [vmem:[%s1132] sm:$0xff]
    %1134 = vmatpush.msra.mxu0 0.0
    %1135 = vmatpush.msra.mxu0 0.0
    %1136 = vmatpush.msra.mxu0 0.0
    %1137 = vmatpush.msra.mxu0 0.0
    %1138 = vmatpush.msra.mxu0 0.0
    %1139 = vmatpush.msra.mxu0 0.0
    %1140 = vmatpush.msra.mxu0 0.0
    %1141 = vmatpush.msra.mxu0 0.0
    %1142 = vmatpush.msra.mxu0 0.0
    %1143 = vmatpush.msra.mxu0 0.0
    %1144 = vmatpush.msra.mxu0 0.0
    %1145 = vmatpush.msra.mxu0 0.0
    %1146 = vmatpush.msra.mxu0 %v185
    %1147 = vmatpush.msra.mxu0 %v184
    %1148 = vmatpush.msra.mxu0 %v183
    %1149 = vmatpush.msra.mxu0 %v182
    %1150 = vmatmul.f32.gmra.mxu0 %v1024
    %v1151 = vpop.f32.mrf.mxu0
    %v1152 = vadd.f32 0.0, %v1151
    %1153 = vdwg.mxu0
    %v1154 = vadd.f32 %v1133, %v1152
    %v1155 = vxor.u32 %v1154, 2147483648
    %v1156 = vmul.f32 %v1155, 1.442695
    %v1157 = vpow.pop %v1156
    %v1158 = vadd.f32 %v1157, 1.0
    %v1159 = vrcp.pop %v1158
    %v1160 = vmul.f32 %v1158, %v1159
    %v1161 = vsub.f32 1.0, %v1160
    %v1162 = vmul.f32 %v1159, %v1161
    %v1163 = vadd.f32 %v1159, %v1162
    %vm1164 = vweird.f32 %v1158
    %vm1165 = vweird.f32 %v1159
    %vm1166 = vmor %vm1164, %vm1165
    %v1167 = vsel %vm1166, %v1159, %v1163
    %v1168 = vand.u32 2147483647, %v1158
    %vm1169 = vcmp.eq.f32.partialorder %v1168, 8.507059e+37
    %v1170 = vand.u32 %v1158, 2147483648
    %v1171 = vor.u32 1.1754944e-38, %v1170
    %v1172 = vsel %vm1169, %v1171, %v1167
    %v1173 = vmul.f32 1.0, %v1172
    %v1174 = vmul.f32 %v1107, %v1018
    %v1175 = vmul.f32 %v1065, %v1131
    %v1176 = vadd.f32 %v1174, %v1175
    %v1177 = vtanh.pop %v1176
    %v1178 = vmul.f32 %v1173, %v1177
    %s1179 = scalar_lea.vmem %s0, 56
    %v1180 = vld [vmem:[%s1179] sm:$0xff]
    %v1182 = vsel %vm59, %v1178, 0
    %1184 = vmatpush.msra.mxu0 0.0
    %1185 = vmatpush.msra.mxu0 0.0
    %1186 = vmatpush.msra.mxu0 0.0
    %1187 = vmatpush.msra.mxu0 0.0
    %1188 = vmatpush.msra.mxu0 0.0
    %1189 = vmatpush.msra.mxu0 0.0
    %1190 = vmatpush.msra.mxu0 0.0
    %1191 = vmatpush.msra.mxu0 0.0
    %1192 = vmatpush.msra.mxu0 0.0
    %1193 = vmatpush.msra.mxu0 0.0
    %1194 = vmatpush.msra.mxu0 0.0
    %1195 = vmatpush.msra.mxu0 0.0
    %1196 = vmatpush.msra.mxu0 %v58
    %1197 = vmatpush.msra.mxu0 %v57
    %1198 = vmatpush.msra.mxu0 %v56
    %1199 = vmatpush.msra.mxu0 %v55
    %1200 = vmatmul.f32.gmra.mxu0 %v1182
    %v1201 = vpop.f32.mrf.mxu0
    %v1202 = vadd.f32 0.0, %v1201
    %1203 = vdwg.mxu0
    %v1204 = vadd.f32 %v1180, %v1202
    %v1205 = vxor.u32 %v1204, 2147483648
    %v1206 = vmul.f32 %v1205, 1.442695
    %v1207 = vpow.pop %v1206
    %v1208 = vadd.f32 %v1207, 1.0
    %v1209 = vrcp.pop %v1208
    %v1210 = vmul.f32 %v1208, %v1209
    %v1211 = vsub.f32 1.0, %v1210
    %v1212 = vmul.f32 %v1209, %v1211
    %v1213 = vadd.f32 %v1209, %v1212
    %vm1214 = vweird.f32 %v1208
    %vm1215 = vweird.f32 %v1209
    %vm1216 = vmor %vm1214, %vm1215
    %v1217 = vsel %vm1216, %v1209, %v1213
    %v1218 = vand.u32 2147483647, %v1208
    %vm1219 = vcmp.eq.f32.partialorder %v1218, 8.507059e+37
    %v1220 = vand.u32 %v1208, 2147483648
    %v1221 = vor.u32 1.1754944e-38, %v1220
    %v1222 = vsel %vm1219, %v1221, %v1217
    %v1223 = vmul.f32 1.0, %v1222
    %s1224 = scalar_lea.vmem %s0, 120
    %v1225 = vld [vmem:[%s1224] sm:$0xff]
    %1226 = vmatpush.msra.mxu0 0.0
    %1227 = vmatpush.msra.mxu0 0.0
    %1228 = vmatpush.msra.mxu0 0.0
    %1229 = vmatpush.msra.mxu0 0.0
    %1230 = vmatpush.msra.mxu0 0.0
    %1231 = vmatpush.msra.mxu0 0.0
    %1232 = vmatpush.msra.mxu0 0.0
    %1233 = vmatpush.msra.mxu0 0.0
    %1234 = vmatpush.msra.mxu0 0.0
    %1235 = vmatpush.msra.mxu0 0.0
    %1236 = vmatpush.msra.mxu0 0.0
    %1237 = vmatpush.msra.mxu0 0.0
    %1238 = vmatpush.msra.mxu0 %v109
    %1239 = vmatpush.msra.mxu0 %v108
    %1240 = vmatpush.msra.mxu0 %v107
    %1241 = vmatpush.msra.mxu0 %v106
    %1242 = vmatmul.f32.gmra.mxu0 %v1182
    %v1243 = vpop.f32.mrf.mxu0
    %v1244 = vadd.f32 0.0, %v1243
    %1245 = vdwg.mxu0
    %v1246 = vadd.f32 %v1225, %v1244
    %v1247 = vxor.u32 %v1246, 2147483648
    %v1248 = vmul.f32 %v1247, 1.442695
    %v1249 = vpow.pop %v1248
    %v1250 = vadd.f32 %v1249, 1.0
    %v1251 = vrcp.pop %v1250
    %v1252 = vmul.f32 %v1250, %v1251
    %v1253 = vsub.f32 1.0, %v1252
    %v1254 = vmul.f32 %v1251, %v1253
    %v1255 = vadd.f32 %v1251, %v1254
    %vm1256 = vweird.f32 %v1250
    %vm1257 = vweird.f32 %v1251
    %vm1258 = vmor %vm1256, %vm1257
    %v1259 = vsel %vm1258, %v1251, %v1255
    %v1260 = vand.u32 2147483647, %v1250
    %vm1261 = vcmp.eq.f32.partialorder %v1260, 8.507059e+37
    %v1262 = vand.u32 %v1250, 2147483648
    %v1263 = vor.u32 1.1754944e-38, %v1262
    %v1264 = vsel %vm1261, %v1263, %v1259
    %v1265 = vmul.f32 1.0, %v1264
    %s1266 = scalar_lea.vmem %s0, 184
    %v1267 = vld [vmem:[%s1266] sm:$0xff]
    %1268 = vmatpush.msra.mxu0 0.0
    %1269 = vmatpush.msra.mxu0 0.0
    %1270 = vmatpush.msra.mxu0 0.0
    %1271 = vmatpush.msra.mxu0 0.0
    %1272 = vmatpush.msra.mxu0 0.0
    %1273 = vmatpush.msra.mxu0 0.0
    %1274 = vmatpush.msra.mxu0 0.0
    %1275 = vmatpush.msra.mxu0 0.0
    %1276 = vmatpush.msra.mxu0 0.0
    %1277 = vmatpush.msra.mxu0 0.0
    %1278 = vmatpush.msra.mxu0 0.0
    %1279 = vmatpush.msra.mxu0 0.0
    %1280 = vmatpush.msra.mxu0 %v156
    %1281 = vmatpush.msra.mxu0 %v155
    %1282 = vmatpush.msra.mxu0 %v154
    %1283 = vmatpush.msra.mxu0 %v153
    %1284 = vmatmul.f32.gmra.mxu0 %v1182
    %v1285 = vpop.f32.mrf.mxu0
    %v1286 = vadd.f32 0.0, %v1285
    %1287 = vdwg.mxu0
    %v1288 = vadd.f32 %v1267, %v1286
    %v1289 = vtanh.pop %v1288
    %s1290 = scalar_lea.vmem %s0, 248
    %v1291 = vld [vmem:[%s1290] sm:$0xff]
    %1292 = vmatpush.msra.mxu0 0.0
    %1293 = vmatpush.msra.mxu0 0.0
    %1294 = vmatpush.msra.mxu0 0.0
    %1295 = vmatpush.msra.mxu0 0.0
    %1296 = vmatpush.msra.mxu0 0.0
    %1297 = vmatpush.msra.mxu0 0.0
    %1298 = vmatpush.msra.mxu0 0.0
    %1299 = vmatpush.msra.mxu0 0.0
    %1300 = vmatpush.msra.mxu0 0.0
    %1301 = vmatpush.msra.mxu0 0.0
    %1302 = vmatpush.msra.mxu0 0.0
    %1303 = vmatpush.msra.mxu0 0.0
    %1304 = vmatpush.msra.mxu0 %v185
    %1305 = vmatpush.msra.mxu0 %v184
    %1306 = vmatpush.msra.mxu0 %v183
    %1307 = vmatpush.msra.mxu0 %v182
    %1308 = vmatmul.f32.gmra.mxu0 %v1182
    %v1309 = vpop.f32.mrf.mxu0
    %v1310 = vadd.f32 0.0, %v1309
    %1311 = vdwg.mxu0
    %v1312 = vadd.f32 %v1291, %v1310
    %v1313 = vxor.u32 %v1312, 2147483648
    %v1314 = vmul.f32 %v1313, 1.442695
    %v1315 = vpow.pop %v1314
    %v1316 = vadd.f32 %v1315, 1.0
    %v1317 = vrcp.pop %v1316
    %v1318 = vmul.f32 %v1316, %v1317
    %v1319 = vsub.f32 1.0, %v1318
    %v1320 = vmul.f32 %v1317, %v1319
    %v1321 = vadd.f32 %v1317, %v1320
    %vm1322 = vweird.f32 %v1316
    %vm1323 = vweird.f32 %v1317
    %vm1324 = vmor %vm1322, %vm1323
    %v1325 = vsel %vm1324, %v1317, %v1321
    %v1326 = vand.u32 2147483647, %v1316
    %vm1327 = vcmp.eq.f32.partialorder %v1326, 8.507059e+37
    %v1328 = vand.u32 %v1316, 2147483648
    %v1329 = vor.u32 1.1754944e-38, %v1328
    %v1330 = vsel %vm1327, %v1329, %v1325
    %v1331 = vmul.f32 1.0, %v1330
    %v1332 = vmul.f32 %v1265, %v1176
    %v1333 = vmul.f32 %v1223, %v1289
    %v1334 = vadd.f32 %v1332, %v1333
    %v1335 = vtanh.pop %v1334
    %v1336 = vmul.f32 %v1331, %v1335
    %v1337 = vld [vmem:[#allocation2] sm:$0xff]
    %v1338 = vld [vmem:[#allocation2 + $0x8] sm:$0xff]
    %v1339 = vld [vmem:[#allocation2 + $0x10] sm:$0xff]
    %v1340 = vld [vmem:[#allocation2 + $0x18] sm:$0xff]
    %v1341 = vld [vmem:[#allocation2 + $0x20] sm:$0xff]
    %v1342 = vld [vmem:[#allocation2 + $0x28] sm:$0xff]
    %v1343 = vld [vmem:[#allocation2 + $0x30] sm:$0xff]
    %v1344 = vld [vmem:[#allocation2 + $0x38] sm:$0xff]
    %v1345 = vld [vmem:[#allocation5] sm:$0xff]
    %v1346 = vld [vmem:[#allocation5 + $0x8] sm:$0xff]
    %v1347 = vld [vmem:[#allocation5 + $0x10] sm:$0xff]
    %v1348 = vld [vmem:[#allocation5 + $0x18] sm:$0xff]
    %v1349 = vld [vmem:[#allocation5 + $0x20] sm:$0xff]
    %v1350 = vld [vmem:[#allocation5 + $0x28] sm:$0xff]
    %v1351 = vld [vmem:[#allocation5 + $0x30] sm:$0xff]
    %v1352 = vld [vmem:[#allocation5 + $0x38] sm:$0xff]
    %v1353 = vld [vmem:[#allocation5 + $0x40] sm:$0xff]
    %v1354 = vld [vmem:[#allocation5 + $0x48] sm:$0xff]
    %v1355 = vld [vmem:[#allocation5 + $0x50] sm:$0xff]
    %v1356 = vld [vmem:[#allocation5 + $0x58] sm:$0xff]
    %v1357 = vld [vmem:[#allocation5 + $0x60] sm:$0xff]
    %v1358 = vld [vmem:[#allocation5 + $0x68] sm:$0xff]
    %v1359 = vld [vmem:[#allocation5 + $0x70] sm:$0xff]
    %v1360 = vld [vmem:[#allocation5 + $0x78] sm:$0xff]
    %v1361 = vld [vmem:[#allocation5 + $0x80] sm:$0xff]
    %v1362 = vld [vmem:[#allocation5 + $0x88] sm:$0xff]
    %v1363 = vld [vmem:[#allocation5 + $0x90] sm:$0xff]
    %v1364 = vld [vmem:[#allocation5 + $0x98] sm:$0xff]
    %v1365 = vld [vmem:[#allocation5 + $0xa0] sm:$0xff]
    %v1366 = vld [vmem:[#allocation5 + $0xa8] sm:$0xff]
    %v1367 = vld [vmem:[#allocation5 + $0xb0] sm:$0xff]
    %v1368 = vld [vmem:[#allocation5 + $0xb8] sm:$0xff]
    %v1369 = vld [vmem:[#allocation5 + $0xc0] sm:$0xff]
    %v1370 = vld [vmem:[#allocation5 + $0xc8] sm:$0xff]
    %v1371 = vld [vmem:[#allocation5 + $0xd0] sm:$0xff]
    %v1372 = vld [vmem:[#allocation5 + $0xd8] sm:$0xff]
    %v1373 = vld [vmem:[#allocation5 + $0xe0] sm:$0xff]
    %v1374 = vld [vmem:[#allocation5 + $0xe8] sm:$0xff]
    %v1375 = vld [vmem:[#allocation5 + $0xf0] sm:$0xff]
    %v1376 = vld [vmem:[#allocation5 + $0xf8] sm:$0xff]
    %v1377 = vld [vmem:[#allocation5 + $0x100] sm:$0xff]
    %v1378 = vld [vmem:[#allocation5 + $0x108] sm:$0xff]
    %v1379 = vld [vmem:[#allocation5 + $0x110] sm:$0xff]
    %v1380 = vld [vmem:[#allocation5 + $0x118] sm:$0xff]
    %v1381 = vld [vmem:[#allocation5 + $0x120] sm:$0xff]
    %v1382 = vld [vmem:[#allocation5 + $0x128] sm:$0xff]
    %v1383 = vld [vmem:[#allocation5 + $0x130] sm:$0xff]
    %v1384 = vld [vmem:[#allocation5 + $0x138] sm:$0xff]
    %v1385 = vld [vmem:[#allocation5 + $0x140] sm:$0xff]
    %v1386 = vld [vmem:[#allocation5 + $0x148] sm:$0xff]
    %v1387 = vld [vmem:[#allocation5 + $0x150] sm:$0xff]
    %v1388 = vld [vmem:[#allocation5 + $0x158] sm:$0xff]
    %v1389 = vld [vmem:[#allocation5 + $0x160] sm:$0xff]
    %v1390 = vld [vmem:[#allocation5 + $0x168] sm:$0xff]
    %v1391 = vld [vmem:[#allocation5 + $0x170] sm:$0xff]
    %v1392 = vld [vmem:[#allocation5 + $0x178] sm:$0xff]
    %v1393 = vld [vmem:[#allocation5 + $0x180] sm:$0xff]
    %v1394 = vld [vmem:[#allocation5 + $0x188] sm:$0xff]
    %v1395 = vld [vmem:[#allocation5 + $0x190] sm:$0xff]
    %v1396 = vld [vmem:[#allocation5 + $0x198] sm:$0xff]
    %v1397 = vld [vmem:[#allocation5 + $0x1a0] sm:$0xff]
    %v1398 = vld [vmem:[#allocation5 + $0x1a8] sm:$0xff]
    %v1399 = vld [vmem:[#allocation5 + $0x1b0] sm:$0xff]
    %v1400 = vld [vmem:[#allocation5 + $0x1b8] sm:$0xff]
    %v1401 = vld [vmem:[#allocation5 + $0x1c0] sm:$0xff]
    %v1402 = vld [vmem:[#allocation5 + $0x1c8] sm:$0xff]
    %v1403 = vld [vmem:[#allocation5 + $0x1d0] sm:$0xff]
    %v1404 = vld [vmem:[#allocation5 + $0x1d8] sm:$0xff]
    %v1405 = vld [vmem:[#allocation5 + $0x1e0] sm:$0xff]
    %v1406 = vld [vmem:[#allocation5 + $0x1e8] sm:$0xff]
    %v1407 = vld [vmem:[#allocation5 + $0x1f0] sm:$0xff]
    %v1408 = vld [vmem:[#allocation5 + $0x1f8] sm:$0xff]
    %v1409 = vld [vmem:[#allocation5 + $0x200] sm:$0xff]
    %v1410 = vld [vmem:[#allocation5 + $0x208] sm:$0xff]
    %v1411 = vld [vmem:[#allocation5 + $0x210] sm:$0xff]
    %v1412 = vld [vmem:[#allocation5 + $0x218] sm:$0xff]
    %v1413 = vld [vmem:[#allocation5 + $0x220] sm:$0xff]
    %v1414 = vld [vmem:[#allocation5 + $0x228] sm:$0xff]
    %v1415 = vld [vmem:[#allocation5 + $0x230] sm:$0xff]
    %v1416 = vld [vmem:[#allocation5 + $0x238] sm:$0xff]
    %v1417 = vld [vmem:[#allocation5 + $0x240] sm:$0xff]
    %v1418 = vld [vmem:[#allocation5 + $0x248] sm:$0xff]
    %v1419 = vld [vmem:[#allocation5 + $0x250] sm:$0xff]
    %v1420 = vld [vmem:[#allocation5 + $0x258] sm:$0xff]
    %v1421 = vld [vmem:[#allocation5 + $0x260] sm:$0xff]
    %v1422 = vld [vmem:[#allocation5 + $0x268] sm:$0xff]
    %v1423 = vld [vmem:[#allocation5 + $0x270] sm:$0xff]
    %v1424 = vld [vmem:[#allocation5 + $0x278] sm:$0xff]
    %v1425 = vld [vmem:[#allocation5 + $0x280] sm:$0xff]
    %v1426 = vld [vmem:[#allocation5 + $0x288] sm:$0xff]
    %v1427 = vld [vmem:[#allocation5 + $0x290] sm:$0xff]
    %v1428 = vld [vmem:[#allocation5 + $0x298] sm:$0xff]
    %v1429 = vld [vmem:[#allocation5 + $0x2a0] sm:$0xff]
    %v1430 = vld [vmem:[#allocation5 + $0x2a8] sm:$0xff]
    %v1431 = vld [vmem:[#allocation5 + $0x2b0] sm:$0xff]
    %v1432 = vld [vmem:[#allocation5 + $0x2b8] sm:$0xff]
    %v1433 = vld [vmem:[#allocation5 + $0x2c0] sm:$0xff]
    %v1434 = vld [vmem:[#allocation5 + $0x2c8] sm:$0xff]
    %v1435 = vld [vmem:[#allocation5 + $0x2d0] sm:$0xff]
    %v1436 = vld [vmem:[#allocation5 + $0x2d8] sm:$0xff]
    %v1437 = vld [vmem:[#allocation5 + $0x2e0] sm:$0xff]
    %v1438 = vld [vmem:[#allocation5 + $0x2e8] sm:$0xff]
    %v1439 = vld [vmem:[#allocation5 + $0x2f0] sm:$0xff]
    %v1440 = vld [vmem:[#allocation5 + $0x2f8] sm:$0xff]
    %v1441 = vld [vmem:[#allocation5 + $0x300] sm:$0xff]
    %v1442 = vld [vmem:[#allocation5 + $0x308] sm:$0xff]
    %v1443 = vld [vmem:[#allocation5 + $0x310] sm:$0xff]
    %v1444 = vld [vmem:[#allocation5 + $0x318] sm:$0xff]
    %v1445 = vld [vmem:[#allocation5 + $0x320] sm:$0xff]
    %v1446 = vld [vmem:[#allocation5 + $0x328] sm:$0xff]
    %v1447 = vld [vmem:[#allocation5 + $0x330] sm:$0xff]
    %v1448 = vld [vmem:[#allocation5 + $0x338] sm:$0xff]
    %v1449 = vld [vmem:[#allocation5 + $0x340] sm:$0xff]
    %v1450 = vld [vmem:[#allocation5 + $0x348] sm:$0xff]
    %v1451 = vld [vmem:[#allocation5 + $0x350] sm:$0xff]
    %v1452 = vld [vmem:[#allocation5 + $0x358] sm:$0xff]
    %v1453 = vld [vmem:[#allocation5 + $0x360] sm:$0xff]
    %v1454 = vld [vmem:[#allocation5 + $0x368] sm:$0xff]
    %v1455 = vld [vmem:[#allocation5 + $0x370] sm:$0xff]
    %v1456 = vld [vmem:[#allocation5 + $0x378] sm:$0xff]
    %v1457 = vld [vmem:[#allocation5 + $0x380] sm:$0xff]
    %v1458 = vld [vmem:[#allocation5 + $0x388] sm:$0xff]
    %v1459 = vld [vmem:[#allocation5 + $0x390] sm:$0xff]
    %v1460 = vld [vmem:[#allocation5 + $0x398] sm:$0xff]
    %v1461 = vld [vmem:[#allocation5 + $0x3a0] sm:$0xff]
    %v1462 = vld [vmem:[#allocation5 + $0x3a8] sm:$0xff]
    %v1463 = vld [vmem:[#allocation5 + $0x3b0] sm:$0xff]
    %v1464 = vld [vmem:[#allocation5 + $0x3b8] sm:$0xff]
    %v1465 = vld [vmem:[#allocation5 + $0x3c0] sm:$0xff]
    %v1466 = vld [vmem:[#allocation5 + $0x3c8] sm:$0xff]
    %v1467 = vld [vmem:[#allocation5 + $0x3d0] sm:$0xff]
    %v1468 = vld [vmem:[#allocation5 + $0x3d8] sm:$0xff]
    %v1469 = vld [vmem:[#allocation5 + $0x3e0] sm:$0xff]
    %v1470 = vld [vmem:[%s5] sm:$0x1]
    %v1472 = vperm.slane %v1470, 0
    %vm1474 = vcmask 850944
    %v1476 = vsel %vm1474, %v1344, 0
    %1478 = vmatpush.msra.mxu0 %v1360
    %1479 = vmatpush.msra.mxu0 %v1359
    %1480 = vmatpush.msra.mxu0 %v1358
    %1481 = vmatpush.msra.mxu0 %v1357
    %1482 = vmatpush.msra.mxu0 %v1356
    %1483 = vmatpush.msra.mxu0 %v1355
    %1484 = vmatpush.msra.mxu0 %v1354
    %1485 = vmatpush.msra.mxu0 %v1353
    %1486 = vmatpush.msra.mxu0 %v1352
    %1487 = vmatpush.msra.mxu0 %v1351
    %1488 = vmatpush.msra.mxu0 %v1350
    %1489 = vmatpush.msra.mxu0 %v1349
    %1490 = vmatpush.msra.mxu0 %v1348
    %1491 = vmatpush.msra.mxu0 %v1347
    %1492 = vmatpush.msra.mxu0 %v1346
    %1493 = vmatpush.msra.mxu0 %v1345
    %1494 = vmatmul.f32.gmra.mxu0 %v1337
    %v1495 = vpop.f32.mrf.mxu0
    %v1496 = vadd.f32 %v1472, %v1495
    %1497 = vdwg.mxu0
    %1498 = vmatpush.msra.mxu0 %v1376
    %1499 = vmatpush.msra.mxu0 %v1375
    %1500 = vmatpush.msra.mxu0 %v1374
    %1501 = vmatpush.msra.mxu0 %v1373
    %1502 = vmatpush.msra.mxu0 %v1372
    %1503 = vmatpush.msra.mxu0 %v1371
    %1504 = vmatpush.msra.mxu0 %v1370
    %1505 = vmatpush.msra.mxu0 %v1369
    %1506 = vmatpush.msra.mxu0 %v1368
    %1507 = vmatpush.msra.mxu0 %v1367
    %1508 = vmatpush.msra.mxu0 %v1366
    %1509 = vmatpush.msra.mxu0 %v1365
    %1510 = vmatpush.msra.mxu0 %v1364
    %1511 = vmatpush.msra.mxu0 %v1363
    %1512 = vmatpush.msra.mxu0 %v1362
    %1513 = vmatpush.msra.mxu0 %v1361
    %1514 = vmatmul.f32.gmra.mxu0 %v1338
    %v1515 = vpop.f32.mrf.mxu0
    %v1516 = vadd.f32 %v1496, %v1515
    %1517 = vdwg.mxu0
    %1518 = vmatpush.msra.mxu0 %v1392
    %1519 = vmatpush.msra.mxu0 %v1391
    %1520 = vmatpush.msra.mxu0 %v1390
    %1521 = vmatpush.msra.mxu0 %v1389
    %1522 = vmatpush.msra.mxu0 %v1388
    %1523 = vmatpush.msra.mxu0 %v1387
    %1524 = vmatpush.msra.mxu0 %v1386
    %1525 = vmatpush.msra.mxu0 %v1385
    %1526 = vmatpush.msra.mxu0 %v1384
    %1527 = vmatpush.msra.mxu0 %v1383
    %1528 = vmatpush.msra.mxu0 %v1382
    %1529 = vmatpush.msra.mxu0 %v1381
    %1530 = vmatpush.msra.mxu0 %v1380
    %1531 = vmatpush.msra.mxu0 %v1379
    %1532 = vmatpush.msra.mxu0 %v1378
    %1533 = vmatpush.msra.mxu0 %v1377
    %1534 = vmatmul.f32.gmra.mxu0 %v1339
    %v1535 = vpop.f32.mrf.mxu0
    %v1536 = vadd.f32 %v1516, %v1535
    %1537 = vdwg.mxu0
    %1538 = vmatpush.msra.mxu0 %v1408
    %1539 = vmatpush.msra.mxu0 %v1407
    %1540 = vmatpush.msra.mxu0 %v1406
    %1541 = vmatpush.msra.mxu0 %v1405
    %1542 = vmatpush.msra.mxu0 %v1404
    %1543 = vmatpush.msra.mxu0 %v1403
    %1544 = vmatpush.msra.mxu0 %v1402
    %1545 = vmatpush.msra.mxu0 %v1401
    %1546 = vmatpush.msra.mxu0 %v1400
    %1547 = vmatpush.msra.mxu0 %v1399
    %1548 = vmatpush.msra.mxu0 %v1398
    %1549 = vmatpush.msra.mxu0 %v1397
    %1550 = vmatpush.msra.mxu0 %v1396
    %1551 = vmatpush.msra.mxu0 %v1395
    %1552 = vmatpush.msra.mxu0 %v1394
    %1553 = vmatpush.msra.mxu0 %v1393
    %1554 = vmatmul.f32.gmra.mxu0 %v1340
    %v1555 = vpop.f32.mrf.mxu0
    %v1556 = vadd.f32 %v1536, %v1555
    %1557 = vdwg.mxu0
    %1558 = vmatpush.msra.mxu0 %v1424
    %1559 = vmatpush.msra.mxu0 %v1423
    %1560 = vmatpush.msra.mxu0 %v1422
    %1561 = vmatpush.msra.mxu0 %v1421
    %1562 = vmatpush.msra.mxu0 %v1420
    %1563 = vmatpush.msra.mxu0 %v1419
    %1564 = vmatpush.msra.mxu0 %v1418
    %1565 = vmatpush.msra.mxu0 %v1417
    %1566 = vmatpush.msra.mxu0 %v1416
    %1567 = vmatpush.msra.mxu0 %v1415
    %1568 = vmatpush.msra.mxu0 %v1414
    %1569 = vmatpush.msra.mxu0 %v1413
    %1570 = vmatpush.msra.mxu0 %v1412
    %1571 = vmatpush.msra.mxu0 %v1411
    %1572 = vmatpush.msra.mxu0 %v1410
    %1573 = vmatpush.msra.mxu0 %v1409
    %1574 = vmatmul.f32.gmra.mxu0 %v1341
    %v1575 = vpop.f32.mrf.mxu0
    %v1576 = vadd.f32 %v1556, %v1575
    %1577 = vdwg.mxu0
    %1578 = vmatpush.msra.mxu0 %v1440
    %1579 = vmatpush.msra.mxu0 %v1439
    %1580 = vmatpush.msra.mxu0 %v1438
    %1581 = vmatpush.msra.mxu0 %v1437
    %1582 = vmatpush.msra.mxu0 %v1436
    %1583 = vmatpush.msra.mxu0 %v1435
    %1584 = vmatpush.msra.mxu0 %v1434
    %1585 = vmatpush.msra.mxu0 %v1433
    %1586 = vmatpush.msra.mxu0 %v1432
    %1587 = vmatpush.msra.mxu0 %v1431
    %1588 = vmatpush.msra.mxu0 %v1430
    %1589 = vmatpush.msra.mxu0 %v1429
    %1590 = vmatpush.msra.mxu0 %v1428
    %1591 = vmatpush.msra.mxu0 %v1427
    %1592 = vmatpush.msra.mxu0 %v1426
    %1593 = vmatpush.msra.mxu0 %v1425
    %1594 = vmatmul.f32.gmra.mxu0 %v1342
    %v1595 = vpop.f32.mrf.mxu0
    %v1596 = vadd.f32 %v1576, %v1595
    %1597 = vdwg.mxu0
    %1598 = vmatpush.msra.mxu0 %v1456
    %1599 = vmatpush.msra.mxu0 %v1455
    %1600 = vmatpush.msra.mxu0 %v1454
    %1601 = vmatpush.msra.mxu0 %v1453
    %1602 = vmatpush.msra.mxu0 %v1452
    %1603 = vmatpush.msra.mxu0 %v1451
    %1604 = vmatpush.msra.mxu0 %v1450
    %1605 = vmatpush.msra.mxu0 %v1449
    %1606 = vmatpush.msra.mxu0 %v1448
    %1607 = vmatpush.msra.mxu0 %v1447
    %1608 = vmatpush.msra.mxu0 %v1446
    %1609 = vmatpush.msra.mxu0 %v1445
    %1610 = vmatpush.msra.mxu0 %v1444
    %1611 = vmatpush.msra.mxu0 %v1443
    %1612 = vmatpush.msra.mxu0 %v1442
    %1613 = vmatpush.msra.mxu0 %v1441
    %1614 = vmatmul.f32.gmra.mxu0 %v1343
    %v1615 = vpop.f32.mrf.mxu0
    %v1616 = vadd.f32 %v1596, %v1615
    %1617 = vdwg.mxu0
    %1618 = vmatpush.msra.mxu0 0.0
    %1619 = vmatpush.msra.mxu0 0.0
    %1620 = vmatpush.msra.mxu0 0.0
    %1621 = vmatpush.msra.mxu0 %v1469
    %1622 = vmatpush.msra.mxu0 %v1468
    %1623 = vmatpush.msra.mxu0 %v1467
    %1624 = vmatpush.msra.mxu0 %v1466
    %1625 = vmatpush.msra.mxu0 %v1465
    %1626 = vmatpush.msra.mxu0 %v1464
    %1627 = vmatpush.msra.mxu0 %v1463
    %1628 = vmatpush.msra.mxu0 %v1462
    %1629 = vmatpush.msra.mxu0 %v1461
    %1630 = vmatpush.msra.mxu0 %v1460
    %1631 = vmatpush.msra.mxu0 %v1459
    %1632 = vmatpush.msra.mxu0 %v1458
    %1633 = vmatpush.msra.mxu0 %v1457
    %1634 = vmatmul.f32.gmra.mxu0 %v1476
    %v1635 = vpop.f32.mrf.mxu0
    %v1636 = vadd.f32 %v1616, %v1635
    %1637 = vdwg.mxu0
    %v1638 = vrot.slane %v388, 7
    %v1640 = vrot.slane %v546, 6
    %v1642 = vrot.slane %v704, 5
    %v1644 = vrot.slane %v862, 4
    %v1646 = vrot.slane %v1020, 3
    %v1648 = vrot.slane %v1178, 2
    %v1651 = vrot.slane %v1336, 1
    %vm1653 = vcmask 1040384
    %v1654 = vsel %vm1653, %v230, %v1638
    %vm1655 = vcmask 1041408
    %v1656 = vsel %vm1655, %v1654, %v1640
    %vm1657 = vcmask 1042432
    %v1658 = vsel %vm1657, %v1656, %v1642
    %vm1659 = vcmask 1043456
    %v1660 = vsel %vm1659, %v1658, %v1644
    %vm1661 = vcmask 1044480
    %v1662 = vsel %vm1661, %v1660, %v1646
    %vm1663 = vcmask 1045504
    %v1664 = vsel %vm1663, %v1662, %v1648
    %vm1665 = vcmask 1046528
    %v1666 = vsel %vm1665, %v1664, %v1651
    %v1667 = vld [vmem:[%s4] sm:$0xff]
    %v1668 = vld [vmem:[%s4 + $0x8] sm:$0xff]
    %v1669 = vld [vmem:[%s4 + $0x10] sm:$0xff]
    %v1670 = vld [vmem:[%s4 + $0x18] sm:$0xff]
    %v1672 = vsel %vm59, %v1666, 0
    %1674 = vmatpush.msra.mxu0 0.0
    %1675 = vmatpush.msra.mxu0 0.0
    %1676 = vmatpush.msra.mxu0 0.0
    %1677 = vmatpush.msra.mxu0 0.0
    %1678 = vmatpush.msra.mxu0 0.0
    %1679 = vmatpush.msra.mxu0 0.0
    %1680 = vmatpush.msra.mxu0 0.0
    %1681 = vmatpush.msra.mxu0 0.0
    %1682 = vmatpush.msra.mxu0 0.0
    %1683 = vmatpush.msra.mxu0 0.0
    %1684 = vmatpush.msra.mxu0 0.0
    %1685 = vmatpush.msra.mxu0 0.0
    %1686 = vmatpush.msra.mxu0 %v1670
    %1687 = vmatpush.msra.mxu0 %v1669
    %1688 = vmatpush.msra.mxu0 %v1668
    %1689 = vmatpush.msra.mxu0 %v1667
    %1690 = vmatmul.f32.gmra.mxu0 %v1672
    %v1691 = vpop.f32.mrf.mxu0
    %v1692 = vadd.f32 0.0, %v1691
    %1693 = vdwg.mxu0
    %v1694 = vadd.f32 %v1636, %v1692
    %v1695 = vrot.slane %v230, 1
    %v1697 = vrot.slane %v546, 7
    %v1699 = vrot.slane %v704, 6
    %v1701 = vrot.slane %v862, 5
    %v1703 = vrot.slane %v1020, 4
    %v1705 = vrot.slane %v1178, 3
    %v1707 = vrot.slane %v1336, 2
    %v1709 = vsel %vm1653, %v1695, %v388
    %v1710 = vsel %vm1655, %v1709, %v1697
    %v1711 = vsel %vm1657, %v1710, %v1699
    %v1712 = vsel %vm1659, %v1711, %v1701
    %v1713 = vsel %vm1661, %v1712, %v1703
    %v1714 = vsel %vm1663, %v1713, %v1705
    %v1715 = vsel %vm1665, %v1714, %v1707
    %s1716 = scalar_lea.vmem %s4, 32
    %v1717 = vld [vmem:[%s1716] sm:$0xff]
    %v1718 = vld [vmem:[%s1716 + $0x8] sm:$0xff]
    %v1719 = vld [vmem:[%s1716 + $0x10] sm:$0xff]
    %v1720 = vld [vmem:[%s1716 + $0x18] sm:$0xff]
    %v1722 = vsel %vm59, %v1715, 0
    %1724 = vmatpush.msra.mxu0 0.0
    %1725 = vmatpush.msra.mxu0 0.0
    %1726 = vmatpush.msra.mxu0 0.0
    %1727 = vmatpush.msra.mxu0 0.0
    %1728 = vmatpush.msra.mxu0 0.0
    %1729 = vmatpush.msra.mxu0 0.0
    %1730 = vmatpush.msra.mxu0 0.0
    %1731 = vmatpush.msra.mxu0 0.0
    %1732 = vmatpush.msra.mxu0 0.0
    %1733 = vmatpush.msra.mxu0 0.0
    %1734 = vmatpush.msra.mxu0 0.0
    %1735 = vmatpush.msra.mxu0 0.0
    %1736 = vmatpush.msra.mxu0 %v1720
    %1737 = vmatpush.msra.mxu0 %v1719
    %1738 = vmatpush.msra.mxu0 %v1718
    %1739 = vmatpush.msra.mxu0 %v1717
    %1740 = vmatmul.f32.gmra.mxu0 %v1722
    %v1741 = vpop.f32.mrf.mxu0
    %v1742 = vadd.f32 0.0, %v1741
    %1743 = vdwg.mxu0
    %v1744 = vadd.f32 %v1694, %v1742
    %v1745 = vrot.slane %v230, 2
    %v1747 = vrot.slane %v388, 1
    %v1749 = vrot.slane %v704, 7
    %v1751 = vrot.slane %v862, 6
    %v1753 = vrot.slane %v1020, 5
    %v1755 = vrot.slane %v1178, 4
    %v1757 = vrot.slane %v1336, 3
    %v1759 = vsel %vm1653, %v1745, %v1747
    %v1760 = vsel %vm1655, %v1759, %v546
    %v1761 = vsel %vm1657, %v1760, %v1749
    %v1762 = vsel %vm1659, %v1761, %v1751
    %v1763 = vsel %vm1661, %v1762, %v1753
    %v1764 = vsel %vm1663, %v1763, %v1755
    %v1765 = vsel %vm1665, %v1764, %v1757
    %s1766 = scalar_lea.vmem %s4, 64
    %v1767 = vld [vmem:[%s1766] sm:$0xff]
    %v1768 = vld [vmem:[%s1766 + $0x8] sm:$0xff]
    %v1769 = vld [vmem:[%s1766 + $0x10] sm:$0xff]
    %v1770 = vld [vmem:[%s1766 + $0x18] sm:$0xff]
    %v1772 = vsel %vm59, %v1765, 0
    %1774 = vmatpush.msra.mxu0 0.0
    %1775 = vmatpush.msra.mxu0 0.0
    %1776 = vmatpush.msra.mxu0 0.0
    %1777 = vmatpush.msra.mxu0 0.0
    %1778 = vmatpush.msra.mxu0 0.0
    %1779 = vmatpush.msra.mxu0 0.0
    %1780 = vmatpush.msra.mxu0 0.0
    %1781 = vmatpush.msra.mxu0 0.0
    %1782 = vmatpush.msra.mxu0 0.0
    %1783 = vmatpush.msra.mxu0 0.0
    %1784 = vmatpush.msra.mxu0 0.0
    %1785 = vmatpush.msra.mxu0 0.0
    %1786 = vmatpush.msra.mxu0 %v1770
    %1787 = vmatpush.msra.mxu0 %v1769
    %1788 = vmatpush.msra.mxu0 %v1768
    %1789 = vmatpush.msra.mxu0 %v1767
    %1790 = vmatmul.f32.gmra.mxu0 %v1772
    %v1791 = vpop.f32.mrf.mxu0
    %v1792 = vadd.f32 0.0, %v1791
    %1793 = vdwg.mxu0
    %v1794 = vadd.f32 %v1744, %v1792
    %v1795 = vrot.slane %v230, 3
    %v1797 = vrot.slane %v388, 2
    %v1799 = vrot.slane %v546, 1
    %v1801 = vrot.slane %v862, 7
    %v1803 = vrot.slane %v1020, 6
    %v1805 = vrot.slane %v1178, 5
    %v1807 = vrot.slane %v1336, 4
    %v1809 = vsel %vm1653, %v1795, %v1797
    %v1810 = vsel %vm1655, %v1809, %v1799
    %v1811 = vsel %vm1657, %v1810, %v704
    %v1812 = vsel %vm1659, %v1811, %v1801
    %v1813 = vsel %vm1661, %v1812, %v1803
    %v1814 = vsel %vm1663, %v1813, %v1805
    %v1815 = vsel %vm1665, %v1814, %v1807
    %s1816 = scalar_lea.vmem %s4, 96
    %v1817 = vld [vmem:[%s1816] sm:$0xff]
    %v1818 = vld [vmem:[%s1816 + $0x8] sm:$0xff]
    %v1819 = vld [vmem:[%s1816 + $0x10] sm:$0xff]
    %v1820 = vld [vmem:[%s1816 + $0x18] sm:$0xff]
    %v1822 = vsel %vm59, %v1815, 0
    %1824 = vmatpush.msra.mxu0 0.0
    %1825 = vmatpush.msra.mxu0 0.0
    %1826 = vmatpush.msra.mxu0 0.0
    %1827 = vmatpush.msra.mxu0 0.0
    %1828 = vmatpush.msra.mxu0 0.0
    %1829 = vmatpush.msra.mxu0 0.0
    %1830 = vmatpush.msra.mxu0 0.0
    %1831 = vmatpush.msra.mxu0 0.0
    %1832 = vmatpush.msra.mxu0 0.0
    %1833 = vmatpush.msra.mxu0 0.0
    %1834 = vmatpush.msra.mxu0 0.0
    %1835 = vmatpush.msra.mxu0 0.0
    %1836 = vmatpush.msra.mxu0 %v1820
    %1837 = vmatpush.msra.mxu0 %v1819
    %1838 = vmatpush.msra.mxu0 %v1818
    %1839 = vmatpush.msra.mxu0 %v1817
    %1840 = vmatmul.f32.gmra.mxu0 %v1822
    %v1841 = vpop.f32.mrf.mxu0
    %v1842 = vadd.f32 0.0, %v1841
    %1843 = vdwg.mxu0
    %v1844 = vadd.f32 %v1794, %v1842
    %v1845 = vrot.slane %v230, 4
    %v1847 = vrot.slane %v388, 3
    %v1849 = vrot.slane %v546, 2
    %v1851 = vrot.slane %v704, 1
    %v1853 = vrot.slane %v1020, 7
    %v1855 = vrot.slane %v1178, 6
    %v1857 = vrot.slane %v1336, 5
    %v1859 = vsel %vm1653, %v1845, %v1847
    %v1860 = vsel %vm1655, %v1859, %v1849
    %v1861 = vsel %vm1657, %v1860, %v1851
    %v1862 = vsel %vm1659, %v1861, %v862
    %v1863 = vsel %vm1661, %v1862, %v1853
    %v1864 = vsel %vm1663, %v1863, %v1855
    %v1865 = vsel %vm1665, %v1864, %v1857
    %s1866 = scalar_lea.vmem %s4, 128
    %v1867 = vld [vmem:[%s1866] sm:$0xff]
    %v1868 = vld [vmem:[%s1866 + $0x8] sm:$0xff]
    %v1869 = vld [vmem:[%s1866 + $0x10] sm:$0xff]
    %v1870 = vld [vmem:[%s1866 + $0x18] sm:$0xff]
    %v1872 = vsel %vm59, %v1865, 0
    %1874 = vmatpush.msra.mxu0 0.0
    %1875 = vmatpush.msra.mxu0 0.0
    %1876 = vmatpush.msra.mxu0 0.0
    %1877 = vmatpush.msra.mxu0 0.0
    %1878 = vmatpush.msra.mxu0 0.0
    %1879 = vmatpush.msra.mxu0 0.0
    %1880 = vmatpush.msra.mxu0 0.0
    %1881 = vmatpush.msra.mxu0 0.0
    %1882 = vmatpush.msra.mxu0 0.0
    %1883 = vmatpush.msra.mxu0 0.0
    %1884 = vmatpush.msra.mxu0 0.0
    %1885 = vmatpush.msra.mxu0 0.0
    %1886 = vmatpush.msra.mxu0 %v1870
    %1887 = vmatpush.msra.mxu0 %v1869
    %1888 = vmatpush.msra.mxu0 %v1868
    %1889 = vmatpush.msra.mxu0 %v1867
    %1890 = vmatmul.f32.gmra.mxu0 %v1872
    %v1891 = vpop.f32.mrf.mxu0
    %v1892 = vadd.f32 0.0, %v1891
    %1893 = vdwg.mxu0
    %v1894 = vadd.f32 %v1844, %v1892
    %v1895 = vrot.slane %v230, 5
    %v1897 = vrot.slane %v388, 4
    %v1899 = vrot.slane %v546, 3
    %v1901 = vrot.slane %v704, 2
    %v1903 = vrot.slane %v862, 1
    %v1905 = vrot.slane %v1178, 7
    %v1907 = vrot.slane %v1336, 6
    %v1909 = vsel %vm1653, %v1895, %v1897
    %v1910 = vsel %vm1655, %v1909, %v1899
    %v1911 = vsel %vm1657, %v1910, %v1901
    %v1912 = vsel %vm1659, %v1911, %v1903
    %v1913 = vsel %vm1661, %v1912, %v1020
    %v1914 = vsel %vm1663, %v1913, %v1905
    %v1915 = vsel %vm1665, %v1914, %v1907
    %s1916 = scalar_lea.vmem %s4, 160
    %v1917 = vld [vmem:[%s1916] sm:$0xff]
    %v1918 = vld [vmem:[%s1916 + $0x8] sm:$0xff]
    %v1919 = vld [vmem:[%s1916 + $0x10] sm:$0xff]
    %v1920 = vld [vmem:[%s1916 + $0x18] sm:$0xff]
    %v1922 = vsel %vm59, %v1915, 0
    %1924 = vmatpush.msra.mxu0 0.0
    %1925 = vmatpush.msra.mxu0 0.0
    %1926 = vmatpush.msra.mxu0 0.0
    %1927 = vmatpush.msra.mxu0 0.0
    %1928 = vmatpush.msra.mxu0 0.0
    %1929 = vmatpush.msra.mxu0 0.0
    %1930 = vmatpush.msra.mxu0 0.0
    %1931 = vmatpush.msra.mxu0 0.0
    %1932 = vmatpush.msra.mxu0 0.0
    %1933 = vmatpush.msra.mxu0 0.0
    %1934 = vmatpush.msra.mxu0 0.0
    %1935 = vmatpush.msra.mxu0 0.0
    %1936 = vmatpush.msra.mxu0 %v1920
    %1937 = vmatpush.msra.mxu0 %v1919
    %1938 = vmatpush.msra.mxu0 %v1918
    %1939 = vmatpush.msra.mxu0 %v1917
    %1940 = vmatmul.f32.gmra.mxu0 %v1922
    %v1941 = vpop.f32.mrf.mxu0
    %v1942 = vadd.f32 0.0, %v1941
    %1943 = vdwg.mxu0
    %v1944 = vadd.f32 %v1894, %v1942
    %v1945 = vrot.slane %v230, 6
    %v1947 = vrot.slane %v388, 5
    %v1949 = vrot.slane %v546, 4
    %v1951 = vrot.slane %v704, 3
    %v1953 = vrot.slane %v862, 2
    %v1955 = vrot.slane %v1020, 1
    %v1957 = vrot.slane %v1336, 7
    %v1959 = vsel %vm1653, %v1945, %v1947
    %v1960 = vsel %vm1655, %v1959, %v1949
    %v1961 = vsel %vm1657, %v1960, %v1951
    %v1962 = vsel %vm1659, %v1961, %v1953
    %v1963 = vsel %vm1661, %v1962, %v1955
    %v1964 = vsel %vm1663, %v1963, %v1178
    %v1965 = vsel %vm1665, %v1964, %v1957
    %s1966 = scalar_lea.vmem %s4, 192
    %v1967 = vld [vmem:[%s1966] sm:$0xff]
    %v1968 = vld [vmem:[%s1966 + $0x8] sm:$0xff]
    %v1969 = vld [vmem:[%s1966 + $0x10] sm:$0xff]
    %v1970 = vld [vmem:[%s1966 + $0x18] sm:$0xff]
    %v1972 = vsel %vm59, %v1965, 0
    %1974 = vmatpush.msra.mxu0 0.0
    %1975 = vmatpush.msra.mxu0 0.0
    %1976 = vmatpush.msra.mxu0 0.0
    %1977 = vmatpush.msra.mxu0 0.0
    %1978 = vmatpush.msra.mxu0 0.0
    %1979 = vmatpush.msra.mxu0 0.0
    %1980 = vmatpush.msra.mxu0 0.0
    %1981 = vmatpush.msra.mxu0 0.0
    %1982 = vmatpush.msra.mxu0 0.0
    %1983 = vmatpush.msra.mxu0 0.0
    %1984 = vmatpush.msra.mxu0 0.0
    %1985 = vmatpush.msra.mxu0 0.0
    %1986 = vmatpush.msra.mxu0 %v1970
    %1987 = vmatpush.msra.mxu0 %v1969
    %1988 = vmatpush.msra.mxu0 %v1968
    %1989 = vmatpush.msra.mxu0 %v1967
    %1990 = vmatmul.f32.gmra.mxu0 %v1972
    %v1991 = vpop.f32.mrf.mxu0
    %v1992 = vadd.f32 0.0, %v1991
    %1993 = vdwg.mxu0
    %v1994 = vadd.f32 %v1944, %v1992
    %v1995 = vrot.slane %v230, 7
    %v1997 = vrot.slane %v388, 6
    %v1999 = vrot.slane %v546, 5
    %v2001 = vrot.slane %v704, 4
    %v2003 = vrot.slane %v862, 3
    %v2005 = vrot.slane %v1020, 2
    %v2007 = vrot.slane %v1178, 1
    %v2009 = vsel %vm1653, %v1995, %v1997
    %v2010 = vsel %vm1655, %v2009, %v1999
    %v2011 = vsel %vm1657, %v2010, %v2001
    %v2012 = vsel %vm1659, %v2011, %v2003
    %v2013 = vsel %vm1661, %v2012, %v2005
    %v2014 = vsel %vm1663, %v2013, %v2007
    %v2015 = vsel %vm1665, %v2014, %v1336
    %s2016 = scalar_lea.vmem %s4, 224
    %v2017 = vld [vmem:[%s2016] sm:$0xff]
    %v2018 = vld [vmem:[%s2016 + $0x8] sm:$0xff]
    %v2019 = vld [vmem:[%s2016 + $0x10] sm:$0xff]
    %v2020 = vld [vmem:[%s2016 + $0x18] sm:$0xff]
    %v2022 = vsel %vm59, %v2015, 0
    %2024 = vmatpush.msra.mxu0 0.0
    %2025 = vmatpush.msra.mxu0 0.0
    %2026 = vmatpush.msra.mxu0 0.0
    %2027 = vmatpush.msra.mxu0 0.0
    %2028 = vmatpush.msra.mxu0 0.0
    %2029 = vmatpush.msra.mxu0 0.0
    %2030 = vmatpush.msra.mxu0 0.0
    %2031 = vmatpush.msra.mxu0 0.0
    %2032 = vmatpush.msra.mxu0 0.0
    %2033 = vmatpush.msra.mxu0 0.0
    %2034 = vmatpush.msra.mxu0 0.0
    %2035 = vmatpush.msra.mxu0 0.0
    %2036 = vmatpush.msra.mxu0 %v2020
    %2037 = vmatpush.msra.mxu0 %v2019
    %2038 = vmatpush.msra.mxu0 %v2018
    %2039 = vmatpush.msra.mxu0 %v2017
    %2040 = vmatmul.f32.gmra.mxu0 %v2022
    %v2041 = vpop.f32.mrf.mxu0
    %v2042 = vadd.f32 0.0, %v2041
    %2043 = vdwg.mxu0
    %v2044 = vadd.f32 %v1994, %v2042
    %2045 = vst [vmem:[#allocation7] sm:$0xff] %v2044
    // Predicated region
    $region34: #{rnn_decoder_forward.1} parent=1 // pred_check
      _
    $region35: #{rnn_decoder_forward.1} parent=1 // pred_check_branch
      %2047 = sbr.rel (0) target = $region37
    $region36: #{rnn_decoder_forward.1} parent=1 // pred_region
      %2049 = vsyncadd [#allocation4], 0
      %s2051 = sshll.u32 [#allocation7], 4
      %s2052 = int_to_ptr.vmem [resolvable:$true] %s2051
      %s2053 = sshll.u32 %s6, 4
      %s2054 = int_to_ptr.hbm [resolvable:$true] %s2053
      %2056 = dma.vmem_to_hbm [thread:$0]  %s2052, 128, %s2054, [#allocation4]
    $region37: #{rnn_decoder_forward.1} parent=1 // pred_fallthru
      _
    // Predicated region
    $region38: #{rnn_decoder_forward.1} parent=1 // pred_check
      _
    $region39: #{rnn_decoder_forward.1} parent=1 // pred_check_branch
      %2058 = sbr.rel (0) target = $region41
    $region40: #{rnn_decoder_forward.1} parent=1 // pred_region
      %2060 = dma.done [#allocation4], 128
    $region41: #{rnn_decoder_forward.1} parent=1 // pred_fallthru
      _
    %2061 = vsyncpa [#allocation3], 1
    %2062 = vsyncpa [#allocation6], 1
    %2063 = vsyncpa [#allocation4], 1

</llo_original>
